<compile_context>
chip_gen: v7x
topology: tpu7x:2x2x1
jax: 0.10.0
libtpu: 0.0.40
codegen_flags: <defaults>
</compile_context>

<pallas_src>
import functools

import numpy as np

import jax
import jax.numpy as jnp
from jax import lax
from jax.experimental import pallas as pl
from jax.experimental.pallas import tpu as pltpu

GROUPS = 8      # GroupNorm num_groups (batch_norm = nn.GroupNorm(8, C))
EPS = 1e-5      # GroupNorm default eps


# ----------------------------------- kernel -----------------------------------
def _branch2_kernel(x_ref, smat_ref,
                    dwm1_ref, pw1_ref, gd1_ref, bd1_ref, gp1_ref, bp1_ref,
                    dwm2_ref, pw2_ref, gd2_ref, bd2_ref, gp2_ref, bp2_ref,
                    dwm3_ref, pw3_ref, gd3_ref, bd3_ref, gp3_ref, bp3_ref,
                    out_ref, pad_ref, *, ks, pad, inv_n):
    H = x_ref.shape[1]
    WC = x_ref.shape[2]

    # Zero only the halo rows once per grid step; the interior rows are fully
    # overwritten by each dwconv (all stages have identical lane width WC).
    if pad > 0:
        pad_ref[0:pad, :] = jnp.zeros((pad, WC), jnp.float32)
        pad_ref[pad + H:pad + H + pad, :] = jnp.zeros((pad, WC), jnp.float32)

    smat = smat_ref[...]   # (WC, WC) group-sum + broadcast matrix (shared by all GNs)

    def dwconv(x, m_ref):
        # Depthwise ks x ks, stride 1, zero padding, on the lane-folded layout:
        # one banded (WC, WC) matmul per kernel row (W boundaries baked into m).
        pad_ref[pad:pad + H, :] = x
        acc = jnp.zeros((H, WC), jnp.float32)
        for kh in range(ks):
            acc = acc + jnp.dot(pad_ref[kh:kh + H, :], m_ref[kh],
                                preferred_element_type=jnp.float32)
        return acc

    def pwconv(x, w_ref):
        # 1x1 conv == single block-diagonal (WC, WC) matmul (full K=128 on MXU).
        return jnp.dot(x, w_ref[...], preferred_element_type=jnp.float32)

    def gnorm(x, g_ref, b_ref, relu):
        # GroupNorm(GROUPS, C): stats per (batch, group) over H*W*gs elements.
        # `smat` sums every lane belonging to the same group and broadcasts the
        # result back to all WC lanes, so no lane-sparse math is needed.
        sum_x = jnp.dot(jnp.sum(x, axis=0, keepdims=True), smat,
                        preferred_element_type=jnp.float32)      # (1, WC)
        sum_x2 = jnp.dot(jnp.sum(x * x, axis=0, keepdims=True), smat,
                         preferred_element_type=jnp.float32)     # (1, WC)
        mean = sum_x * inv_n
        var = sum_x2 * inv_n - mean * mean
        inv = lax.rsqrt(var + EPS)
        scale = inv * g_ref[...]                 # (1, WC), gamma pre-tiled per lane
        shift = b_ref[...] - mean * scale        # (1, WC)
        y = x * scale + shift
        return jnp.maximum(y, 0.0) if relu else y

    y = x_ref[0]                                 # (H, WC) lane-dense slab
    # DW -> GN -> PW -> GN -> ReLU  (x3, matching nn.Sequential of branch2)
    y = gnorm(dwconv(y, dwm1_ref), gd1_ref, bd1_ref, relu=False)
    y = gnorm(pwconv(y, pw1_ref), gp1_ref, bp1_ref, relu=True)
    y = gnorm(dwconv(y, dwm2_ref), gd2_ref, bd2_ref, relu=False)
    y = gnorm(pwconv(y, pw2_ref), gp2_ref, bp2_ref, relu=True)
    y = gnorm(dwconv(y, dwm3_ref), gd3_ref, bd3_ref, relu=False)
    y = gnorm(pwconv(y, pw3_ref), gp3_ref, bp3_ref, relu=True)
    out_ref[0] = y


def _const_index_map(ndim):
    return lambda b: (0,) * ndim


def branch2_pallas(x_lane, kp, ks, pad):
    B, H, WC = x_lane.shape
    args = [x_lane, kp["smat"],
            kp["dwm1"], kp["pw1"], kp["gd1"], kp["bd1"], kp["gp1"], kp["bp1"],
            kp["dwm2"], kp["pw2"], kp["gd2"], kp["bd2"], kp["gp2"], kp["bp2"],
            kp["dwm3"], kp["pw3"], kp["gd3"], kp["bd3"], kp["gp3"], kp["bp3"]]

    in_specs = [pl.BlockSpec((1, H, WC), lambda b: (b, 0, 0))]
    for a in args[1:]:
        in_specs.append(pl.BlockSpec(a.shape, _const_index_map(a.ndim)))

    kernel = functools.partial(_branch2_kernel, ks=ks, pad=pad, inv_n=kp["inv_n"])
    return pl.pallas_call(
        kernel,
        out_shape=jax.ShapeDtypeStruct((B, H, WC), jnp.float32),
        grid=(B,),
        in_specs=in_specs,
        out_specs=pl.BlockSpec((1, H, WC), lambda b: (b, 0, 0)),
        scratch_shapes=[pltpu.VMEM((H + 2 * pad, WC), jnp.float32)],
        compiler_params=pltpu.CompilerParams(
            dimension_semantics=("parallel",)),
    )(*args)


# ------------------------------- module forward --------------------------------
def channel_shuffle(x, groups):
    B, C, H, W = x.shape
    return (x.reshape(B, groups, C // groups, H, W)
             .transpose(0, 2, 1, 3, 4)
             .reshape(B, C, H, W))


def shuffle_xception_forward(x_nchw, kp, ks=3, pad=1):
    # stride == 1 path of Shuffle_Xception.forward
    x = channel_shuffle(x_nchw, 2)
    c = x.shape[1]
    x1 = x[:, : c // 2]
    x2 = x[:, c // 2:]
    B, C2, H, W = x2.shape
    # NCHW -> lane-folded (B, H, W*C)
    x2_lane = jnp.transpose(x2, (0, 2, 3, 1)).reshape(B, H, W * C2)
    y_lane = branch2_pallas(x2_lane, kp, ks, pad)
    cout = y_lane.shape[-1] // W
    y = jnp.transpose(y_lane.reshape(B, H, W, cout), (0, 3, 1, 2))
    return jnp.concatenate([x1, y], axis=1)


# ----------------------- pure-JAX reference (for checking) -----------------------
def _gn_ref(x, gamma, beta):
    B, C, H, W = x.shape
    xg = x.reshape(B, GROUPS, -1)
    mean = xg.mean(axis=-1, keepdims=True)
    var = xg.var(axis=-1, keepdims=True)
    xn = ((xg - mean) * lax.rsqrt(var + EPS)).reshape(B, C, H, W)
    return xn * gamma.reshape(1, C, 1, 1) + beta.reshape(1, C, 1, 1)


def _dw_ref(x, w, pad):
    return lax.conv_general_dilated(x, w, (1, 1), [(pad, pad), (pad, pad)],
                                    feature_group_count=x.shape[1],
                                    dimension_numbers=("NCHW", "OIHW", "NCHW"))


def _pw_ref(x, w):
    return lax.conv_general_dilated(x, w, (1, 1), [(0, 0), (0, 0)],
                                    dimension_numbers=("NCHW", "OIHW", "NCHW"))


def reference_forward(x, tp, ks=3, pad=1):
    x = channel_shuffle(x, 2)
    c = x.shape[1]
    x1, x2 = x[:, : c // 2], x[:, c // 2:]
    y = _gn_ref(_dw_ref(x2, tp["dw1"], pad), tp["g1"], tp["b1"])
    y = jax.nn.relu(_gn_ref(_pw_ref(y, tp["pw1"]), tp["g2"], tp["b2"]))
    y = _gn_ref(_dw_ref(y, tp["dw2"], pad), tp["g3"], tp["b3"])
    y = jax.nn.relu(_gn_ref(_pw_ref(y, tp["pw2"]), tp["g4"], tp["b4"]))
    y = _gn_ref(_dw_ref(y, tp["dw3"], pad), tp["g5"], tp["b5"])
    y = jax.nn.relu(_gn_ref(_pw_ref(y, tp["pw3"]), tp["g6"], tp["b6"]))
    return jnp.concatenate([x1, y], axis=1)


# ----------------------------- parameter construction -----------------------------
def make_params(key, inp, oup, mid_c, ks):
    outputs = oup - inp
    keys = jax.random.split(key, 18)

    def nrm(k, shape, scale=0.2):
        return scale * jax.random.normal(k, shape, jnp.float32)

    # PyTorch-format (OIHW) weights
    tp = {
        "dw1": nrm(keys[0], (inp, 1, ks, ks)),
        "pw1": nrm(keys[1], (mid_c, inp, 1, 1)),
        "dw2": nrm(keys[2], (mid_c, 1, ks, ks)),
        "pw2": nrm(keys[3], (mid_c, mid_c, 1, 1)),
        "dw3": nrm(keys[4], (mid_c, 1, ks, ks)),
        "pw3": nrm(keys[5], (outputs, mid_c, 1, 1)),
    }
    chans = [inp, mid_c, mid_c, mid_c, mid_c, outputs]
    for i, c in enumerate(chans, start=1):
        tp[f"g{i}"] = 1.0 + nrm(keys[5 + 2 * i - 1], (c,), 0.1)
        tp[f"b{i}"] = nrm(keys[5 + 2 * i], (c,), 0.1)
    return tp


def prepare_kernel_params(tp, H, W, ks, pad):
    """Precompute lane-folded / matmul-form weights for the Pallas kernel."""
    C = int(tp["dw1"].shape[0])
    # kernel assumes one lane width through the whole branch2 pipeline
    assert tp["dw2"].shape[0] == C and tp["dw3"].shape[0] == C
    assert tp["pw1"].shape[:2] == (C, C) and tp["pw2"].shape[:2] == (C, C)
    assert tp["pw3"].shape[:2] == (C, C)
    assert C % GROUPS == 0
    gs = C // GROUPS
    WC = W * C
    eye_w = np.eye(W, dtype=np.float32)

    def dw_banded(w_oihw):
        # (C,1,ks,ks) -> (ks, WC, WC) banded matrices; W-boundary zeros built in.
        w = jnp.transpose(w_oihw[:, 0], (1, 2, 0))          # (ks, ks, C)
        mats = []
        for kh in range(ks):
            m = jnp.zeros((WC, WC), jnp.float32)
            for kw in range(ks):
                e = np.eye(W, k=-(kw - pad)).astype(np.float32)
                m = m + jnp.kron(jnp.asarray(e), jnp.diag(w[kh, kw]))
            mats.append(m)
        return jnp.stack(mats)

    def pw_blockdiag(w_oihw):
        wsm = w_oihw[:, :, 0, 0].T                          # (Cin, Cout)
        return jnp.kron(jnp.asarray(eye_w), wsm)            # (W*Cin, W*Cout)

    def tile_lane(v):
        return jnp.tile(v, W).reshape(1, WC)                # lane order: w*C + c

    gmask = (np.arange(C)[:, None] // gs == np.arange(C)[None, :] // gs)
    smat = jnp.asarray(np.kron(np.ones((W, W), np.float32),
                               gmask.astype(np.float32)))   # (WC, WC)

    kp = {
        "smat": smat,
        "inv_n": 1.0 / float(H * W * gs),
        "dwm1": dw_banded(tp["dw1"]), "pw1": pw_blockdiag(tp["pw1"]),
        "dwm2": dw_banded(tp["dw2"]), "pw2": pw_blockdiag(tp["pw2"]),
        "dwm3": dw_banded(tp["dw3"]), "pw3": pw_blockdiag(tp["pw3"]),
        "gd1": tile_lane(tp["g1"]), "bd1": tile_lane(tp["b1"]),
        "gp1": tile_lane(tp["g2"]), "bp1": tile_lane(tp["b2"]),
        "gd2": tile_lane(tp["g3"]), "bd2": tile_lane(tp["b3"]),
        "gp2": tile_lane(tp["g4"]), "bp2": tile_lane(tp["b4"]),
        "gd3": tile_lane(tp["g5"]), "bd3": tile_lane(tp["b5"]),
        "gp3": tile_lane(tp["g6"]), "bp3": tile_lane(tp["b6"]),
    }
    return kp


if __name__ == "__main__":
    # Shuffle_Xception(inp=8, oup=16, mid_c=8, ksize=3, pad=1, stride=1)
    B, inp, oup, mid_c, ks, pad, stride = 2, 8, 16, 8, 3, 1, 1
    H = W = 16
    assert mid_c == oup // 2 and stride == 1

    key = jax.random.PRNGKey(0)
    kx, kparam = jax.random.split(key)
    tp = make_params(kparam, inp, oup, mid_c, ks)
    kp = prepare_kernel_params(tp, H, W, ks, pad)

    # stride==1 forward splits channels in half; branch2 consumes `inp` channels,
    # so the input carries 2*inp channels (NCHW, like PyTorch).
    x = jax.random.normal(kx, (B, 2 * inp, H, W), jnp.float32)

    fwd = jax.jit(lambda a: shuffle_xception_forward(a, kp, ks, pad))
    out = jax.block_until_ready(fwd(x))

    ref = reference_forward(x, tp, ks, pad)
    assert out.shape == (B, oup, H, W)
    err = float(jnp.max(jnp.abs(out - ref)))
    assert jnp.allclose(out, ref, atol=1e-3, rtol=1e-3), err

    print("KERNEL_OK")
</pallas_src>

<mosaic_0001>
module attributes {stable_mosaic.version = 11 : i64} {
  func.func @_branch2_kernel(%arg0: i32, %arg1: memref<1x16x128xf32, #tpu.memory_space<vmem>>, %arg2: memref<128x128xf32, #tpu.memory_space<vmem>>, %arg3: memref<3x128x128xf32, #tpu.memory_space<vmem>>, %arg4: memref<128x128xf32, #tpu.memory_space<vmem>>, %arg5: memref<1x128xf32, #tpu.memory_space<vmem>>, %arg6: memref<1x128xf32, #tpu.memory_space<vmem>>, %arg7: memref<1x128xf32, #tpu.memory_space<vmem>>, %arg8: memref<1x128xf32, #tpu.memory_space<vmem>>, %arg9: memref<3x128x128xf32, #tpu.memory_space<vmem>>, %arg10: memref<128x128xf32, #tpu.memory_space<vmem>>, %arg11: memref<1x128xf32, #tpu.memory_space<vmem>>, %arg12: memref<1x128xf32, #tpu.memory_space<vmem>>, %arg13: memref<1x128xf32, #tpu.memory_space<vmem>>, %arg14: memref<1x128xf32, #tpu.memory_space<vmem>>, %arg15: memref<3x128x128xf32, #tpu.memory_space<vmem>>, %arg16: memref<128x128xf32, #tpu.memory_space<vmem>>, %arg17: memref<1x128xf32, #tpu.memory_space<vmem>>, %arg18: memref<1x128xf32, #tpu.memory_space<vmem>>, %arg19: memref<1x128xf32, #tpu.memory_space<vmem>>, %arg20: memref<1x128xf32, #tpu.memory_space<vmem>>, %arg21: memref<1x16x128xf32, #tpu.memory_space<vmem>>, %arg22: memref<18x128xf32, #tpu.memory_space<vmem>>) attributes {dimension_semantics = [#tpu.dimension_semantics<parallel>], iteration_bounds = array<i64: 2>, scalar_prefetch = 0 : i64, scratch_operands = 1 : i64, tpu.core_type = #tpu.core_type<tc>, window_params = [{transform_indices = @transform_0, window_bounds = array<i64: 1, 16, 128>}, {pipeline_mode = #tpu.pipeline_mode<synchronous>, transform_indices = @transform_1, window_bounds = array<i64: 128, 128>}, {pipeline_mode = #tpu.pipeline_mode<synchronous>, transform_indices = @transform_2, window_bounds = array<i64: 3, 128, 128>}, {pipeline_mode = #tpu.pipeline_mode<synchronous>, transform_indices = @transform_3, window_bounds = array<i64: 128, 128>}, {pipeline_mode = #tpu.pipeline_mode<synchronous>, transform_indices = @transform_4, window_bounds = array<i64: 1, 128>}, {pipeline_mode = #tpu.pipeline_mode<synchronous>, transform_indices = @transform_5, window_bounds = array<i64: 1, 128>}, {pipeline_mode = #tpu.pipeline_mode<synchronous>, transform_indices = @transform_6, window_bounds = array<i64: 1, 128>}, {pipeline_mode = #tpu.pipeline_mode<synchronous>, transform_indices = @transform_7, window_bounds = array<i64: 1, 128>}, {pipeline_mode = #tpu.pipeline_mode<synchronous>, transform_indices = @transform_8, window_bounds = array<i64: 3, 128, 128>}, {pipeline_mode = #tpu.pipeline_mode<synchronous>, transform_indices = @transform_9, window_bounds = array<i64: 128, 128>}, {pipeline_mode = #tpu.pipeline_mode<synchronous>, transform_indices = @transform_10, window_bounds = array<i64: 1, 128>}, {pipeline_mode = #tpu.pipeline_mode<synchronous>, transform_indices = @transform_11, window_bounds = array<i64: 1, 128>}, {pipeline_mode = #tpu.pipeline_mode<synchronous>, transform_indices = @transform_12, window_bounds = array<i64: 1, 128>}, {pipeline_mode = #tpu.pipeline_mode<synchronous>, transform_indices = @transform_13, window_bounds = array<i64: 1, 128>}, {pipeline_mode = #tpu.pipeline_mode<synchronous>, transform_indices = @transform_14, window_bounds = array<i64: 3, 128, 128>}, {pipeline_mode = #tpu.pipeline_mode<synchronous>, transform_indices = @transform_15, window_bounds = array<i64: 128, 128>}, {pipeline_mode = #tpu.pipeline_mode<synchronous>, transform_indices = @transform_16, window_bounds = array<i64: 1, 128>}, {pipeline_mode = #tpu.pipeline_mode<synchronous>, transform_indices = @transform_17, window_bounds = array<i64: 1, 128>}, {pipeline_mode = #tpu.pipeline_mode<synchronous>, transform_indices = @transform_18, window_bounds = array<i64: 1, 128>}, {pipeline_mode = #tpu.pipeline_mode<synchronous>, transform_indices = @transform_19, window_bounds = array<i64: 1, 128>}, {transform_indices = @transform_20, window_bounds = array<i64: 1, 16, 128>}]} {
    %cst = arith.constant 0.000000e+00 : f32
    %0 = vector.broadcast %cst : f32 to vector<1x128xf32>
    %c0 = arith.constant 0 : index
    %c0_0 = arith.constant 0 : index
    %1 = vector.load %arg22[%c0, %c0_0] : memref<18x128xf32, #tpu.memory_space<vmem>>, vector<1x128xf32>
    tpu.vector_store %arg22[%c0, %c0_0], %0 {strides = array<i32>} : memref<18x128xf32, #tpu.memory_space<vmem>>, vector<1x128xf32>,
    %cst_1 = arith.constant 0.000000e+00 : f32
    %2 = vector.broadcast %cst_1 : f32 to vector<1x128xf32>
    %c17 = arith.constant 17 : index
    %c0_2 = arith.constant 0 : index
    %3 = vector.load %arg22[%c17, %c0_2] : memref<18x128xf32, #tpu.memory_space<vmem>>, vector<1x128xf32>
    tpu.vector_store %arg22[%c17, %c0_2], %2 {strides = array<i32>} : memref<18x128xf32, #tpu.memory_space<vmem>>, vector<1x128xf32>,
    %c0_3 = arith.constant 0 : index
    %c0_4 = arith.constant 0 : index
    %4 = vector.load %arg2[%c0_3, %c0_4] : memref<128x128xf32, #tpu.memory_space<vmem>>, vector<128x128xf32>
    %c0_5 = arith.constant 0 : index
    %c0_6 = arith.constant 0 : index
    %c0_7 = arith.constant 0 : index
    %5 = vector.load %arg1[%c0_5, %c0_6, %c0_7] : memref<1x16x128xf32, #tpu.memory_space<vmem>>, vector<1x16x128xf32>
    %6 = vector.shape_cast %5 : vector<1x16x128xf32> to vector<16x128xf32>
    %c1 = arith.constant 1 : index
    %c0_8 = arith.constant 0 : index
    %7 = vector.load %arg22[%c1, %c0_8] : memref<18x128xf32, #tpu.memory_space<vmem>>, vector<16x128xf32>
    tpu.vector_store %arg22[%c1, %c0_8], %6 {strides = array<i32>} : memref<18x128xf32, #tpu.memory_space<vmem>>, vector<16x128xf32>,
    %cst_9 = arith.constant 0.000000e+00 : f32
    %8 = vector.broadcast %cst_9 : f32 to vector<16x128xf32>
    %c0_10 = arith.constant 0 : index
    %c0_11 = arith.constant 0 : index
    %9 = vector.load %arg22[%c0_10, %c0_11] : memref<18x128xf32, #tpu.memory_space<vmem>>, vector<16x128xf32>
    %c0_12 = arith.constant 0 : index
    %c0_13 = arith.constant 0 : index
    %c0_14 = arith.constant 0 : index
    %10 = vector.load %arg3[%c0_12, %c0_13, %c0_14] : memref<3x128x128xf32, #tpu.memory_space<vmem>>, vector<1x128x128xf32>
    %11 = vector.shape_cast %10 : vector<1x128x128xf32> to vector<128x128xf32>
    %cst_15 = arith.constant dense<0.000000e+00> : vector<16x128xf32>
    %12 = tpu.matmul %9, %11, %cst_15 {dimension_numbers = #tpu.dot_dimension_numbers<[1], [0], [0], [1], [0, 0, 1, 1], [], []>} : vector<16x128xf32>, vector<128x128xf32>, vector<16x128xf32> -> vector<16x128xf32>
    %13 = arith.addf %8, %12 : vector<16x128xf32>
    %c1_16 = arith.constant 1 : index
    %c0_17 = arith.constant 0 : index
    %14 = vector.load %arg22[%c1_16, %c0_17] : memref<18x128xf32, #tpu.memory_space<vmem>>, vector<16x128xf32>
    %c1_18 = arith.constant 1 : index
    %c0_19 = arith.constant 0 : index
    %c0_20 = arith.constant 0 : index
    %15 = vector.load %arg3[%c1_18, %c0_19, %c0_20] : memref<3x128x128xf32, #tpu.memory_space<vmem>>, vector<1x128x128xf32>
    %16 = vector.shape_cast %15 : vector<1x128x128xf32> to vector<128x128xf32>
    %cst_21 = arith.constant dense<0.000000e+00> : vector<16x128xf32>
    %17 = tpu.matmul %14, %16, %cst_21 {dimension_numbers = #tpu.dot_dimension_numbers<[1], [0], [0], [1], [0, 0, 1, 1], [], []>} : vector<16x128xf32>, vector<128x128xf32>, vector<16x128xf32> -> vector<16x128xf32>
    %18 = arith.addf %13, %17 : vector<16x128xf32>
    %c2 = arith.constant 2 : index
    %c0_22 = arith.constant 0 : index
    %19 = vector.load %arg22[%c2, %c0_22] : memref<18x128xf32, #tpu.memory_space<vmem>>, vector<16x128xf32>
    %c2_23 = arith.constant 2 : index
    %c0_24 = arith.constant 0 : index
    %c0_25 = arith.constant 0 : index
    %20 = vector.load %arg3[%c2_23, %c0_24, %c0_25] : memref<3x128x128xf32, #tpu.memory_space<vmem>>, vector<1x128x128xf32>
    %21 = vector.shape_cast %20 : vector<1x128x128xf32> to vector<128x128xf32>
    %cst_26 = arith.constant dense<0.000000e+00> : vector<16x128xf32>
    %22 = tpu.matmul %19, %21, %cst_26 {dimension_numbers = #tpu.dot_dimension_numbers<[1], [0], [0], [1], [0, 0, 1, 1], [], []>} : vector<16x128xf32>, vector<128x128xf32>, vector<16x128xf32> -> vector<16x128xf32>
    %23 = arith.addf %18, %22 : vector<16x128xf32>
    %cst_27 = arith.constant dense<0.000000e+00> : vector<128xf32>
    %24 = vector.multi_reduction <add>, %23, %cst_27 [0] : vector<16x128xf32> to vector<128xf32>
    %25 = vector.shape_cast %24 : vector<128xf32> to vector<1x128xf32>
    %cst_28 = arith.constant dense<0.000000e+00> : vector<1x128xf32>
    %26 = tpu.matmul %25, %4, %cst_28 {dimension_numbers = #tpu.dot_dimension_numbers<[1], [0], [0], [1], [0, 0, 1, 1], [], []>} : vector<1x128xf32>, vector<128x128xf32>, vector<1x128xf32> -> vector<1x128xf32>
    %27 = arith.mulf %23, %23 : vector<16x128xf32>
    %cst_29 = arith.constant dense<0.000000e+00> : vector<128xf32>
    %28 = vector.multi_reduction <add>, %27, %cst_29 [0] : vector<16x128xf32> to vector<128xf32>
    %29 = vector.shape_cast %28 : vector<128xf32> to vector<1x128xf32>
    %cst_30 = arith.constant dense<0.000000e+00> : vector<1x128xf32>
    %30 = tpu.matmul %29, %4, %cst_30 {dimension_numbers = #tpu.dot_dimension_numbers<[1], [0], [0], [1], [0, 0, 1, 1], [], []>} : vector<1x128xf32>, vector<128x128xf32>, vector<1x128xf32> -> vector<1x128xf32>
    %cst_31 = arith.constant 3.906250e-03 : f32
    %31 = vector.broadcast %cst_31 : f32 to vector<1x128xf32>
    %32 = arith.mulf %26, %31 : vector<1x128xf32>
    %cst_32 = arith.constant 3.906250e-03 : f32
    %33 = vector.broadcast %cst_32 : f32 to vector<1x128xf32>
    %34 = arith.mulf %30, %33 : vector<1x128xf32>
    %35 = arith.mulf %32, %32 : vector<1x128xf32>
    %36 = arith.subf %34, %35 : vector<1x128xf32>
    %cst_33 = arith.constant 9.99999974E-6 : f32
    %37 = vector.broadcast %cst_33 : f32 to vector<1x128xf32>
    %38 = arith.addf %36, %37 : vector<1x128xf32>
    %39 = math.rsqrt %38 : vector<1x128xf32>
    %c0_34 = arith.constant 0 : index
    %c0_35 = arith.constant 0 : index
    %40 = vector.load %arg5[%c0_34, %c0_35] : memref<1x128xf32, #tpu.memory_space<vmem>>, vector<1x128xf32>
    %41 = arith.mulf %39, %40 : vector<1x128xf32>
    %c0_36 = arith.constant 0 : index
    %c0_37 = arith.constant 0 : index
    %42 = vector.load %arg6[%c0_36, %c0_37] : memref<1x128xf32, #tpu.memory_space<vmem>>, vector<1x128xf32>
    %43 = arith.mulf %32, %41 : vector<1x128xf32>
    %44 = arith.subf %42, %43 : vector<1x128xf32>
    %45 = vector.broadcast %41 : vector<1x128xf32> to vector<16x128xf32>
    %46 = arith.mulf %23, %45 : vector<16x128xf32>
    %47 = vector.broadcast %44 : vector<1x128xf32> to vector<16x128xf32>
    %48 = arith.addf %46, %47 : vector<16x128xf32>
    %c0_38 = arith.constant 0 : index
    %c0_39 = arith.constant 0 : index
    %49 = vector.load %arg4[%c0_38, %c0_39] : memref<128x128xf32, #tpu.memory_space<vmem>>, vector<128x128xf32>
    %cst_40 = arith.constant dense<0.000000e+00> : vector<16x128xf32>
    %50 = tpu.matmul %48, %49, %cst_40 {dimension_numbers = #tpu.dot_dimension_numbers<[1], [0], [0], [1], [0, 0, 1, 1], [], []>} : vector<16x128xf32>, vector<128x128xf32>, vector<16x128xf32> -> vector<16x128xf32>
    %cst_41 = arith.constant dense<0.000000e+00> : vector<128xf32>
    %51 = vector.multi_reduction <add>, %50, %cst_41 [0] : vector<16x128xf32> to vector<128xf32>
    %52 = vector.shape_cast %51 : vector<128xf32> to vector<1x128xf32>
    %cst_42 = arith.constant dense<0.000000e+00> : vector<1x128xf32>
    %53 = tpu.matmul %52, %4, %cst_42 {dimension_numbers = #tpu.dot_dimension_numbers<[1], [0], [0], [1], [0, 0, 1, 1], [], []>} : vector<1x128xf32>, vector<128x128xf32>, vector<1x128xf32> -> vector<1x128xf32>
    %54 = arith.mulf %50, %50 : vector<16x128xf32>
    %cst_43 = arith.constant dense<0.000000e+00> : vector<128xf32>
    %55 = vector.multi_reduction <add>, %54, %cst_43 [0] : vector<16x128xf32> to vector<128xf32>
    %56 = vector.shape_cast %55 : vector<128xf32> to vector<1x128xf32>
    %cst_44 = arith.constant dense<0.000000e+00> : vector<1x128xf32>
    %57 = tpu.matmul %56, %4, %cst_44 {dimension_numbers = #tpu.dot_dimension_numbers<[1], [0], [0], [1], [0, 0, 1, 1], [], []>} : vector<1x128xf32>, vector<128x128xf32>, vector<1x128xf32> -> vector<1x128xf32>
    %cst_45 = arith.constant 3.906250e-03 : f32
    %58 = vector.broadcast %cst_45 : f32 to vector<1x128xf32>
    %59 = arith.mulf %53, %58 : vector<1x128xf32>
    %cst_46 = arith.constant 3.906250e-03 : f32
    %60 = vector.broadcast %cst_46 : f32 to vector<1x128xf32>
    %61 = arith.mulf %57, %60 : vector<1x128xf32>
    %62 = arith.mulf %59, %59 : vector<1x128xf32>
    %63 = arith.subf %61, %62 : vector<1x128xf32>
    %cst_47 = arith.constant 9.99999974E-6 : f32
    %64 = vector.broadcast %cst_47 : f32 to vector<1x128xf32>
    %65 = arith.addf %63, %64 : vector<1x128xf32>
    %66 = math.rsqrt %65 : vector<1x128xf32>
    %c0_48 = arith.constant 0 : index
    %c0_49 = arith.constant 0 : index
    %67 = vector.load %arg7[%c0_48, %c0_49] : memref<1x128xf32, #tpu.memory_space<vmem>>, vector<1x128xf32>
    %68 = arith.mulf %66, %67 : vector<1x128xf32>
    %c0_50 = arith.constant 0 : index
    %c0_51 = arith.constant 0 : index
    %69 = vector.load %arg8[%c0_50, %c0_51] : memref<1x128xf32, #tpu.memory_space<vmem>>, vector<1x128xf32>
    %70 = arith.mulf %59, %68 : vector<1x128xf32>
    %71 = arith.subf %69, %70 : vector<1x128xf32>
    %72 = vector.broadcast %68 : vector<1x128xf32> to vector<16x128xf32>
    %73 = arith.mulf %50, %72 : vector<16x128xf32>
    %74 = vector.broadcast %71 : vector<1x128xf32> to vector<16x128xf32>
    %75 = arith.addf %73, %74 : vector<16x128xf32>
    %cst_52 = arith.constant 0.000000e+00 : f32
    %76 = vector.broadcast %cst_52 : f32 to vector<16x128xf32>
    %77 = arith.maximumf %75, %76 : vector<16x128xf32>
    %c1_53 = arith.constant 1 : index
    %c0_54 = arith.constant 0 : index
    %78 = vector.load %arg22[%c1_53, %c0_54] : memref<18x128xf32, #tpu.memory_space<vmem>>, vector<16x128xf32>
    tpu.vector_store %arg22[%c1_53, %c0_54], %77 {strides = array<i32>} : memref<18x128xf32, #tpu.memory_space<vmem>>, vector<16x128xf32>,
    %cst_55 = arith.constant 0.000000e+00 : f32
    %79 = vector.broadcast %cst_55 : f32 to vector<16x128xf32>
    %c0_56 = arith.constant 0 : index
    %c0_57 = arith.constant 0 : index
    %80 = vector.load %arg22[%c0_56, %c0_57] : memref<18x128xf32, #tpu.memory_space<vmem>>, vector<16x128xf32>
    %c0_58 = arith.constant 0 : index
    %c0_59 = arith.constant 0 : index
    %c0_60 = arith.constant 0 : index
    %81 = vector.load %arg9[%c0_58, %c0_59, %c0_60] : memref<3x128x128xf32, #tpu.memory_space<vmem>>, vector<1x128x128xf32>
    %82 = vector.shape_cast %81 : vector<1x128x128xf32> to vector<128x128xf32>
    %cst_61 = arith.constant dense<0.000000e+00> : vector<16x128xf32>
    %83 = tpu.matmul %80, %82, %cst_61 {dimension_numbers = #tpu.dot_dimension_numbers<[1], [0], [0], [1], [0, 0, 1, 1], [], []>} : vector<16x128xf32>, vector<128x128xf32>, vector<16x128xf32> -> vector<16x128xf32>
    %84 = arith.addf %79, %83 : vector<16x128xf32>
    %c1_62 = arith.constant 1 : index
    %c0_63 = arith.constant 0 : index
    %85 = vector.load %arg22[%c1_62, %c0_63] : memref<18x128xf32, #tpu.memory_space<vmem>>, vector<16x128xf32>
    %c1_64 = arith.constant 1 : index
    %c0_65 = arith.constant 0 : index
    %c0_66 = arith.constant 0 : index
    %86 = vector.load %arg9[%c1_64, %c0_65, %c0_66] : memref<3x128x128xf32, #tpu.memory_space<vmem>>, vector<1x128x128xf32>
    %87 = vector.shape_cast %86 : vector<1x128x128xf32> to vector<128x128xf32>
    %cst_67 = arith.constant dense<0.000000e+00> : vector<16x128xf32>
    %88 = tpu.matmul %85, %87, %cst_67 {dimension_numbers = #tpu.dot_dimension_numbers<[1], [0], [0], [1], [0, 0, 1, 1], [], []>} : vector<16x128xf32>, vector<128x128xf32>, vector<16x128xf32> -> vector<16x128xf32>
    %89 = arith.addf %84, %88 : vector<16x128xf32>
    %c2_68 = arith.constant 2 : index
    %c0_69 = arith.constant 0 : index
    %90 = vector.load %arg22[%c2_68, %c0_69] : memref<18x128xf32, #tpu.memory_space<vmem>>, vector<16x128xf32>
    %c2_70 = arith.constant 2 : index
    %c0_71 = arith.constant 0 : index
    %c0_72 = arith.constant 0 : index
    %91 = vector.load %arg9[%c2_70, %c0_71, %c0_72] : memref<3x128x128xf32, #tpu.memory_space<vmem>>, vector<1x128x128xf32>
    %92 = vector.shape_cast %91 : vector<1x128x128xf32> to vector<128x128xf32>
    %cst_73 = arith.constant dense<0.000000e+00> : vector<16x128xf32>
    %93 = tpu.matmul %90, %92, %cst_73 {dimension_numbers = #tpu.dot_dimension_numbers<[1], [0], [0], [1], [0, 0, 1, 1], [], []>} : vector<16x128xf32>, vector<128x128xf32>, vector<16x128xf32> -> vector<16x128xf32>
    %94 = arith.addf %89, %93 : vector<16x128xf32>
    %cst_74 = arith.constant dense<0.000000e+00> : vector<128xf32>
    %95 = vector.multi_reduction <add>, %94, %cst_74 [0] : vector<16x128xf32> to vector<128xf32>
    %96 = vector.shape_cast %95 : vector<128xf32> to vector<1x128xf32>
    %cst_75 = arith.constant dense<0.000000e+00> : vector<1x128xf32>
    %97 = tpu.matmul %96, %4, %cst_75 {dimension_numbers = #tpu.dot_dimension_numbers<[1], [0], [0], [1], [0, 0, 1, 1], [], []>} : vector<1x128xf32>, vector<128x128xf32>, vector<1x128xf32> -> vector<1x128xf32>
    %98 = arith.mulf %94, %94 : vector<16x128xf32>
    %cst_76 = arith.constant dense<0.000000e+00> : vector<128xf32>
    %99 = vector.multi_reduction <add>, %98, %cst_76 [0] : vector<16x128xf32> to vector<128xf32>
    %100 = vector.shape_cast %99 : vector<128xf32> to vector<1x128xf32>
    %cst_77 = arith.constant dense<0.000000e+00> : vector<1x128xf32>
    %101 = tpu.matmul %100, %4, %cst_77 {dimension_numbers = #tpu.dot_dimension_numbers<[1], [0], [0], [1], [0, 0, 1, 1], [], []>} : vector<1x128xf32>, vector<128x128xf32>, vector<1x128xf32> -> vector<1x128xf32>
    %cst_78 = arith.constant 3.906250e-03 : f32
    %102 = vector.broadcast %cst_78 : f32 to vector<1x128xf32>
    %103 = arith.mulf %97, %102 : vector<1x128xf32>
    %cst_79 = arith.constant 3.906250e-03 : f32
    %104 = vector.broadcast %cst_79 : f32 to vector<1x128xf32>
    %105 = arith.mulf %101, %104 : vector<1x128xf32>
    %106 = arith.mulf %103, %103 : vector<1x128xf32>
    %107 = arith.subf %105, %106 : vector<1x128xf32>
    %cst_80 = arith.constant 9.99999974E-6 : f32
    %108 = vector.broadcast %cst_80 : f32 to vector<1x128xf32>
    %109 = arith.addf %107, %108 : vector<1x128xf32>
    %110 = math.rsqrt %109 : vector<1x128xf32>
    %c0_81 = arith.constant 0 : index
    %c0_82 = arith.constant 0 : index
    %111 = vector.load %arg11[%c0_81, %c0_82] : memref<1x128xf32, #tpu.memory_space<vmem>>, vector<1x128xf32>
    %112 = arith.mulf %110, %111 : vector<1x128xf32>
    %c0_83 = arith.constant 0 : index
    %c0_84 = arith.constant 0 : index
    %113 = vector.load %arg12[%c0_83, %c0_84] : memref<1x128xf32, #tpu.memory_space<vmem>>, vector<1x128xf32>
    %114 = arith.mulf %103, %112 : vector<1x128xf32>
    %115 = arith.subf %113, %114 : vector<1x128xf32>
    %116 = vector.broadcast %112 : vector<1x128xf32> to vector<16x128xf32>
    %117 = arith.mulf %94, %116 : vector<16x128xf32>
    %118 = vector.broadcast %115 : vector<1x128xf32> to vector<16x128xf32>
    %119 = arith.addf %117, %118 : vector<16x128xf32>
    %c0_85 = arith.constant 0 : index
    %c0_86 = arith.constant 0 : index
    %120 = vector.load %arg10[%c0_85, %c0_86] : memref<128x128xf32, #tpu.memory_space<vmem>>, vector<128x128xf32>
    %cst_87 = arith.constant dense<0.000000e+00> : vector<16x128xf32>
    %121 = tpu.matmul %119, %120, %cst_87 {dimension_numbers = #tpu.dot_dimension_numbers<[1], [0], [0], [1], [0, 0, 1, 1], [], []>} : vector<16x128xf32>, vector<128x128xf32>, vector<16x128xf32> -> vector<16x128xf32>
    %cst_88 = arith.constant dense<0.000000e+00> : vector<128xf32>
    %122 = vector.multi_reduction <add>, %121, %cst_88 [0] : vector<16x128xf32> to vector<128xf32>
    %123 = vector.shape_cast %122 : vector<128xf32> to vector<1x128xf32>
    %cst_89 = arith.constant dense<0.000000e+00> : vector<1x128xf32>
    %124 = tpu.matmul %123, %4, %cst_89 {dimension_numbers = #tpu.dot_dimension_numbers<[1], [0], [0], [1], [0, 0, 1, 1], [], []>} : vector<1x128xf32>, vector<128x128xf32>, vector<1x128xf32> -> vector<1x128xf32>
    %125 = arith.mulf %121, %121 : vector<16x128xf32>
    %cst_90 = arith.constant dense<0.000000e+00> : vector<128xf32>
    %126 = vector.multi_reduction <add>, %125, %cst_90 [0] : vector<16x128xf32> to vector<128xf32>
    %127 = vector.shape_cast %126 : vector<128xf32> to vector<1x128xf32>
    %cst_91 = arith.constant dense<0.000000e+00> : vector<1x128xf32>
    %128 = tpu.matmul %127, %4, %cst_91 {dimension_numbers = #tpu.dot_dimension_numbers<[1], [0], [0], [1], [0, 0, 1, 1], [], []>} : vector<1x128xf32>, vector<128x128xf32>, vector<1x128xf32> -> vector<1x128xf32>
    %cst_92 = arith.constant 3.906250e-03 : f32
    %129 = vector.broadcast %cst_92 : f32 to vector<1x128xf32>
    %130 = arith.mulf %124, %129 : vector<1x128xf32>
    %cst_93 = arith.constant 3.906250e-03 : f32
    %131 = vector.broadcast %cst_93 : f32 to vector<1x128xf32>
    %132 = arith.mulf %128, %131 : vector<1x128xf32>
    %133 = arith.mulf %130, %130 : vector<1x128xf32>
    %134 = arith.subf %132, %133 : vector<1x128xf32>
    %cst_94 = arith.constant 9.99999974E-6 : f32
    %135 = vector.broadcast %cst_94 : f32 to vector<1x128xf32>
    %136 = arith.addf %134, %135 : vector<1x128xf32>
    %137 = math.rsqrt %136 : vector<1x128xf32>
    %c0_95 = arith.constant 0 : index
    %c0_96 = arith.constant 0 : index
    %138 = vector.load %arg13[%c0_95, %c0_96] : memref<1x128xf32, #tpu.memory_space<vmem>>, vector<1x128xf32>
    %139 = arith.mulf %137, %138 : vector<1x128xf32>
    %c0_97 = arith.constant 0 : index
    %c0_98 = arith.constant 0 : index
    %140 = vector.load %arg14[%c0_97, %c0_98] : memref<1x128xf32, #tpu.memory_space<vmem>>, vector<1x128xf32>
    %141 = arith.mulf %130, %139 : vector<1x128xf32>
    %142 = arith.subf %140, %141 : vector<1x128xf32>
    %143 = vector.broadcast %139 : vector<1x128xf32> to vector<16x128xf32>
    %144 = arith.mulf %121, %143 : vector<16x128xf32>
    %145 = vector.broadcast %142 : vector<1x128xf32> to vector<16x128xf32>
    %146 = arith.addf %144, %145 : vector<16x128xf32>
    %cst_99 = arith.constant 0.000000e+00 : f32
    %147 = vector.broadcast %cst_99 : f32 to vector<16x128xf32>
    %148 = arith.maximumf %146, %147 : vector<16x128xf32>
    %c1_100 = arith.constant 1 : index
    %c0_101 = arith.constant 0 : index
    %149 = vector.load %arg22[%c1_100, %c0_101] : memref<18x128xf32, #tpu.memory_space<vmem>>, vector<16x128xf32>
    tpu.vector_store %arg22[%c1_100, %c0_101], %148 {strides = array<i32>} : memref<18x128xf32, #tpu.memory_space<vmem>>, vector<16x128xf32>,
    %cst_102 = arith.constant 0.000000e+00 : f32
    %150 = vector.broadcast %cst_102 : f32 to vector<16x128xf32>
    %c0_103 = arith.constant 0 : index
    %c0_104 = arith.constant 0 : index
    %151 = vector.load %arg22[%c0_103, %c0_104] : memref<18x128xf32, #tpu.memory_space<vmem>>, vector<16x128xf32>
    %c0_105 = arith.constant 0 : index
    %c0_106 = arith.constant 0 : index
    %c0_107 = arith.constant 0 : index
    %152 = vector.load %arg15[%c0_105, %c0_106, %c0_107] : memref<3x128x128xf32, #tpu.memory_space<vmem>>, vector<1x128x128xf32>
    %153 = vector.shape_cast %152 : vector<1x128x128xf32> to vector<128x128xf32>
    %cst_108 = arith.constant dense<0.000000e+00> : vector<16x128xf32>
    %154 = tpu.matmul %151, %153, %cst_108 {dimension_numbers = #tpu.dot_dimension_numbers<[1], [0], [0], [1], [0, 0, 1, 1], [], []>} : vector<16x128xf32>, vector<128x128xf32>, vector<16x128xf32> -> vector<16x128xf32>
    %155 = arith.addf %150, %154 : vector<16x128xf32>
    %c1_109 = arith.constant 1 : index
    %c0_110 = arith.constant 0 : index
    %156 = vector.load %arg22[%c1_109, %c0_110] : memref<18x128xf32, #tpu.memory_space<vmem>>, vector<16x128xf32>
    %c1_111 = arith.constant 1 : index
    %c0_112 = arith.constant 0 : index
    %c0_113 = arith.constant 0 : index
    %157 = vector.load %arg15[%c1_111, %c0_112, %c0_113] : memref<3x128x128xf32, #tpu.memory_space<vmem>>, vector<1x128x128xf32>
    %158 = vector.shape_cast %157 : vector<1x128x128xf32> to vector<128x128xf32>
    %cst_114 = arith.constant dense<0.000000e+00> : vector<16x128xf32>
    %159 = tpu.matmul %156, %158, %cst_114 {dimension_numbers = #tpu.dot_dimension_numbers<[1], [0], [0], [1], [0, 0, 1, 1], [], []>} : vector<16x128xf32>, vector<128x128xf32>, vector<16x128xf32> -> vector<16x128xf32>
    %160 = arith.addf %155, %159 : vector<16x128xf32>
    %c2_115 = arith.constant 2 : index
    %c0_116 = arith.constant 0 : index
    %161 = vector.load %arg22[%c2_115, %c0_116] : memref<18x128xf32, #tpu.memory_space<vmem>>, vector<16x128xf32>
    %c2_117 = arith.constant 2 : index
    %c0_118 = arith.constant 0 : index
    %c0_119 = arith.constant 0 : index
    %162 = vector.load %arg15[%c2_117, %c0_118, %c0_119] : memref<3x128x128xf32, #tpu.memory_space<vmem>>, vector<1x128x128xf32>
    %163 = vector.shape_cast %162 : vector<1x128x128xf32> to vector<128x128xf32>
    %cst_120 = arith.constant dense<0.000000e+00> : vector<16x128xf32>
    %164 = tpu.matmul %161, %163, %cst_120 {dimension_numbers = #tpu.dot_dimension_numbers<[1], [0], [0], [1], [0, 0, 1, 1], [], []>} : vector<16x128xf32>, vector<128x128xf32>, vector<16x128xf32> -> vector<16x128xf32>
    %165 = arith.addf %160, %164 : vector<16x128xf32>
    %cst_121 = arith.constant dense<0.000000e+00> : vector<128xf32>
    %166 = vector.multi_reduction <add>, %165, %cst_121 [0] : vector<16x128xf32> to vector<128xf32>
    %167 = vector.shape_cast %166 : vector<128xf32> to vector<1x128xf32>
    %cst_122 = arith.constant dense<0.000000e+00> : vector<1x128xf32>
    %168 = tpu.matmul %167, %4, %cst_122 {dimension_numbers = #tpu.dot_dimension_numbers<[1], [0], [0], [1], [0, 0, 1, 1], [], []>} : vector<1x128xf32>, vector<128x128xf32>, vector<1x128xf32> -> vector<1x128xf32>
    %169 = arith.mulf %165, %165 : vector<16x128xf32>
    %cst_123 = arith.constant dense<0.000000e+00> : vector<128xf32>
    %170 = vector.multi_reduction <add>, %169, %cst_123 [0] : vector<16x128xf32> to vector<128xf32>
    %171 = vector.shape_cast %170 : vector<128xf32> to vector<1x128xf32>
    %cst_124 = arith.constant dense<0.000000e+00> : vector<1x128xf32>
    %172 = tpu.matmul %171, %4, %cst_124 {dimension_numbers = #tpu.dot_dimension_numbers<[1], [0], [0], [1], [0, 0, 1, 1], [], []>} : vector<1x128xf32>, vector<128x128xf32>, vector<1x128xf32> -> vector<1x128xf32>
    %cst_125 = arith.constant 3.906250e-03 : f32
    %173 = vector.broadcast %cst_125 : f32 to vector<1x128xf32>
    %174 = arith.mulf %168, %173 : vector<1x128xf32>
    %cst_126 = arith.constant 3.906250e-03 : f32
    %175 = vector.broadcast %cst_126 : f32 to vector<1x128xf32>
    %176 = arith.mulf %172, %175 : vector<1x128xf32>
    %177 = arith.mulf %174, %174 : vector<1x128xf32>
    %178 = arith.subf %176, %177 : vector<1x128xf32>
    %cst_127 = arith.constant 9.99999974E-6 : f32
    %179 = vector.broadcast %cst_127 : f32 to vector<1x128xf32>
    %180 = arith.addf %178, %179 : vector<1x128xf32>
    %181 = math.rsqrt %180 : vector<1x128xf32>
    %c0_128 = arith.constant 0 : index
    %c0_129 = arith.constant 0 : index
    %182 = vector.load %arg17[%c0_128, %c0_129] : memref<1x128xf32, #tpu.memory_space<vmem>>, vector<1x128xf32>
    %183 = arith.mulf %181, %182 : vector<1x128xf32>
    %c0_130 = arith.constant 0 : index
    %c0_131 = arith.constant 0 : index
    %184 = vector.load %arg18[%c0_130, %c0_131] : memref<1x128xf32, #tpu.memory_space<vmem>>, vector<1x128xf32>
    %185 = arith.mulf %174, %183 : vector<1x128xf32>
    %186 = arith.subf %184, %185 : vector<1x128xf32>
    %187 = vector.broadcast %183 : vector<1x128xf32> to vector<16x128xf32>
    %188 = arith.mulf %165, %187 : vector<16x128xf32>
    %189 = vector.broadcast %186 : vector<1x128xf32> to vector<16x128xf32>
    %190 = arith.addf %188, %189 : vector<16x128xf32>
    %c0_132 = arith.constant 0 : index
    %c0_133 = arith.constant 0 : index
    %191 = vector.load %arg16[%c0_132, %c0_133] : memref<128x128xf32, #tpu.memory_space<vmem>>, vector<128x128xf32>
    %cst_134 = arith.constant dense<0.000000e+00> : vector<16x128xf32>
    %192 = tpu.matmul %190, %191, %cst_134 {dimension_numbers = #tpu.dot_dimension_numbers<[1], [0], [0], [1], [0, 0, 1, 1], [], []>} : vector<16x128xf32>, vector<128x128xf32>, vector<16x128xf32> -> vector<16x128xf32>
    %cst_135 = arith.constant dense<0.000000e+00> : vector<128xf32>
    %193 = vector.multi_reduction <add>, %192, %cst_135 [0] : vector<16x128xf32> to vector<128xf32>
    %194 = vector.shape_cast %193 : vector<128xf32> to vector<1x128xf32>
    %cst_136 = arith.constant dense<0.000000e+00> : vector<1x128xf32>
    %195 = tpu.matmul %194, %4, %cst_136 {dimension_numbers = #tpu.dot_dimension_numbers<[1], [0], [0], [1], [0, 0, 1, 1], [], []>} : vector<1x128xf32>, vector<128x128xf32>, vector<1x128xf32> -> vector<1x128xf32>
    %196 = arith.mulf %192, %192 : vector<16x128xf32>
    %cst_137 = arith.constant dense<0.000000e+00> : vector<128xf32>
    %197 = vector.multi_reduction <add>, %196, %cst_137 [0] : vector<16x128xf32> to vector<128xf32>
    %198 = vector.shape_cast %197 : vector<128xf32> to vector<1x128xf32>
    %cst_138 = arith.constant dense<0.000000e+00> : vector<1x128xf32>
    %199 = tpu.matmul %198, %4, %cst_138 {dimension_numbers = #tpu.dot_dimension_numbers<[1], [0], [0], [1], [0, 0, 1, 1], [], []>} : vector<1x128xf32>, vector<128x128xf32>, vector<1x128xf32> -> vector<1x128xf32>
    %cst_139 = arith.constant 3.906250e-03 : f32
    %200 = vector.broadcast %cst_139 : f32 to vector<1x128xf32>
    %201 = arith.mulf %195, %200 : vector<1x128xf32>
    %cst_140 = arith.constant 3.906250e-03 : f32
    %202 = vector.broadcast %cst_140 : f32 to vector<1x128xf32>
    %203 = arith.mulf %199, %202 : vector<1x128xf32>
    %204 = arith.mulf %201, %201 : vector<1x128xf32>
    %205 = arith.subf %203, %204 : vector<1x128xf32>
    %cst_141 = arith.constant 9.99999974E-6 : f32
    %206 = vector.broadcast %cst_141 : f32 to vector<1x128xf32>
    %207 = arith.addf %205, %206 : vector<1x128xf32>
    %208 = math.rsqrt %207 : vector<1x128xf32>
    %c0_142 = arith.constant 0 : index
    %c0_143 = arith.constant 0 : index
    %209 = vector.load %arg19[%c0_142, %c0_143] : memref<1x128xf32, #tpu.memory_space<vmem>>, vector<1x128xf32>
    %210 = arith.mulf %208, %209 : vector<1x128xf32>
    %c0_144 = arith.constant 0 : index
    %c0_145 = arith.constant 0 : index
    %211 = vector.load %arg20[%c0_144, %c0_145] : memref<1x128xf32, #tpu.memory_space<vmem>>, vector<1x128xf32>
    %212 = arith.mulf %201, %210 : vector<1x128xf32>
    %213 = arith.subf %211, %212 : vector<1x128xf32>
    %214 = vector.broadcast %210 : vector<1x128xf32> to vector<16x128xf32>
    %215 = arith.mulf %192, %214 : vector<16x128xf32>
    %216 = vector.broadcast %213 : vector<1x128xf32> to vector<16x128xf32>
    %217 = arith.addf %215, %216 : vector<16x128xf32>
    %cst_146 = arith.constant 0.000000e+00 : f32
    %218 = vector.broadcast %cst_146 : f32 to vector<16x128xf32>
    %219 = arith.maximumf %217, %218 : vector<16x128xf32>
    %c0_147 = arith.constant 0 : index
    %c0_148 = arith.constant 0 : index
    %c0_149 = arith.constant 0 : index
    %220 = vector.load %arg21[%c0_147, %c0_148, %c0_149] : memref<1x16x128xf32, #tpu.memory_space<vmem>>, vector<1x16x128xf32>
    %221 = vector.shape_cast %220 : vector<1x16x128xf32> to vector<16x128xf32>
    %222 = vector.shape_cast %219 : vector<16x128xf32> to vector<1x16x128xf32>
    tpu.vector_store %arg21[%c0_147, %c0_148, %c0_149], %222 {strides = array<i32>} : memref<1x16x128xf32, #tpu.memory_space<vmem>>, vector<1x16x128xf32>,
    return
  }
  func.func @transform_0(%arg0: i32) -> (i32, i32, i32) {
    %c0_i32 = arith.constant 0 : i32
    %c0_i32_0 = arith.constant 0 : i32
    %c0_i32_1 = arith.constant 0 : i32
    return %arg0, %c0_i32, %c0_i32_0 : i32, i32, i32
  }
  func.func @transform_1(%arg0: i32) -> (i32, i32) {
    %c0_i32 = arith.constant 0 : i32
    %c0_i32_0 = arith.constant 0 : i32
    %c0_i32_1 = arith.constant 0 : i32
    return %c0_i32, %c0_i32_0 : i32, i32
  }
  func.func @transform_2(%arg0: i32) -> (i32, i32, i32) {
    %c0_i32 = arith.constant 0 : i32
    %c0_i32_0 = arith.constant 0 : i32
    %c0_i32_1 = arith.constant 0 : i32
    %c0_i32_2 = arith.constant 0 : i32
    return %c0_i32, %c0_i32_0, %c0_i32_1 : i32, i32, i32
  }
  func.func @transform_3(%arg0: i32) -> (i32, i32) {
    %c0_i32 = arith.constant 0 : i32
    %c0_i32_0 = arith.constant 0 : i32
    %c0_i32_1 = arith.constant 0 : i32
    return %c0_i32, %c0_i32_0 : i32, i32
  }
  func.func @transform_4(%arg0: i32) -> (i32, i32) {
    %c0_i32 = arith.constant 0 : i32
    %c0_i32_0 = arith.constant 0 : i32
    %c0_i32_1 = arith.constant 0 : i32
    return %c0_i32, %c0_i32_0 : i32, i32
  }
  func.func @transform_5(%arg0: i32) -> (i32, i32) {
    %c0_i32 = arith.constant 0 : i32
    %c0_i32_0 = arith.constant 0 : i32
    %c0_i32_1 = arith.constant 0 : i32
    return %c0_i32, %c0_i32_0 : i32, i32
  }
  func.func @transform_6(%arg0: i32) -> (i32, i32) {
    %c0_i32 = arith.constant 0 : i32
    %c0_i32_0 = arith.constant 0 : i32
    %c0_i32_1 = arith.constant 0 : i32
    return %c0_i32, %c0_i32_0 : i32, i32
  }
  func.func @transform_7(%arg0: i32) -> (i32, i32) {
    %c0_i32 = arith.constant 0 : i32
    %c0_i32_0 = arith.constant 0 : i32
    %c0_i32_1 = arith.constant 0 : i32
    return %c0_i32, %c0_i32_0 : i32, i32
  }
  func.func @transform_8(%arg0: i32) -> (i32, i32, i32) {
    %c0_i32 = arith.constant 0 : i32
    %c0_i32_0 = arith.constant 0 : i32
    %c0_i32_1 = arith.constant 0 : i32
    %c0_i32_2 = arith.constant 0 : i32
    return %c0_i32, %c0_i32_0, %c0_i32_1 : i32, i32, i32
  }
  func.func @transform_9(%arg0: i32) -> (i32, i32) {
    %c0_i32 = arith.constant 0 : i32
    %c0_i32_0 = arith.constant 0 : i32
    %c0_i32_1 = arith.constant 0 : i32
    return %c0_i32, %c0_i32_0 : i32, i32
  }
  func.func @transform_10(%arg0: i32) -> (i32, i32) {
    %c0_i32 = arith.constant 0 : i32
    %c0_i32_0 = arith.constant 0 : i32
    %c0_i32_1 = arith.constant 0 : i32
    return %c0_i32, %c0_i32_0 : i32, i32
  }
  func.func @transform_11(%arg0: i32) -> (i32, i32) {
    %c0_i32 = arith.constant 0 : i32
    %c0_i32_0 = arith.constant 0 : i32
    %c0_i32_1 = arith.constant 0 : i32
    return %c0_i32, %c0_i32_0 : i32, i32
  }
  func.func @transform_12(%arg0: i32) -> (i32, i32) {
    %c0_i32 = arith.constant 0 : i32
    %c0_i32_0 = arith.constant 0 : i32
    %c0_i32_1 = arith.constant 0 : i32
    return %c0_i32, %c0_i32_0 : i32, i32
  }
  func.func @transform_13(%arg0: i32) -> (i32, i32) {
    %c0_i32 = arith.constant 0 : i32
    %c0_i32_0 = arith.constant 0 : i32
    %c0_i32_1 = arith.constant 0 : i32
    return %c0_i32, %c0_i32_0 : i32, i32
  }
  func.func @transform_14(%arg0: i32) -> (i32, i32, i32) {
    %c0_i32 = arith.constant 0 : i32
    %c0_i32_0 = arith.constant 0 : i32
    %c0_i32_1 = arith.constant 0 : i32
    %c0_i32_2 = arith.constant 0 : i32
    return %c0_i32, %c0_i32_0, %c0_i32_1 : i32, i32, i32
  }
  func.func @transform_15(%arg0: i32) -> (i32, i32) {
    %c0_i32 = arith.constant 0 : i32
    %c0_i32_0 = arith.constant 0 : i32
    %c0_i32_1 = arith.constant 0 : i32
    return %c0_i32, %c0_i32_0 : i32, i32
  }
  func.func @transform_16(%arg0: i32) -> (i32, i32) {
    %c0_i32 = arith.constant 0 : i32
    %c0_i32_0 = arith.constant 0 : i32
    %c0_i32_1 = arith.constant 0 : i32
    return %c0_i32, %c0_i32_0 : i32, i32
  }
  func.func @transform_17(%arg0: i32) -> (i32, i32) {
    %c0_i32 = arith.constant 0 : i32
    %c0_i32_0 = arith.constant 0 : i32
    %c0_i32_1 = arith.constant 0 : i32
    return %c0_i32, %c0_i32_0 : i32, i32
  }
  func.func @transform_18(%arg0: i32) -> (i32, i32) {
    %c0_i32 = arith.constant 0 : i32
    %c0_i32_0 = arith.constant 0 : i32
    %c0_i32_1 = arith.constant 0 : i32
    return %c0_i32, %c0_i32_0 : i32, i32
  }
  func.func @transform_19(%arg0: i32) -> (i32, i32) {
    %c0_i32 = arith.constant 0 : i32
    %c0_i32_0 = arith.constant 0 : i32
    %c0_i32_1 = arith.constant 0 : i32
    return %c0_i32, %c0_i32_0 : i32, i32
  }
  func.func @transform_20(%arg0: i32) -> (i32, i32, i32) {
    %c0_i32 = arith.constant 0 : i32
    %c0_i32_0 = arith.constant 0 : i32
    %c0_i32_1 = arith.constant 0 : i32
    return %arg0, %c0_i32, %c0_i32_0 : i32, i32, i32
  }
}

</mosaic_0001>

<llo_original>
// kernel: _lambda_.1
$region0: #{_lambda_.1}
  #allocation0 [shape = 'u32[]', space=smem, size = 0x4, offset = 0x4, fixed_abs, tag = 'smem constant byte address 0x4 - core index']
  #allocation1 [shape = 'u32[144,128]{1,0:T(1,128)}', space=vmem, size = 0x12000, scoped, tag = 'internal scratch']
  #allocation2 [shape = 'f32[18,128]{1,0:T(8,128)}', space=vmem, size = 0x3000, scoped, tag = 'scratch operand']
  %s0 = inlined_call_operand.vmem [shape: f32[2,16,128], index: 0, kind: input, shape index: {}]
  %s1 = inlined_call_operand.vmem [shape: f32[128,128], index: 1, kind: input, shape index: {}]
  %s2 = inlined_call_operand.vmem [shape: f32[3,128,128], index: 2, kind: input, shape index: {}]
  %s3 = inlined_call_operand.vmem [shape: f32[128,128], index: 3, kind: input, shape index: {}]
  %s4 = inlined_call_operand.vmem [shape: f32[1,128], index: 4, kind: input, shape index: {}]
  %s5 = inlined_call_operand.vmem [shape: f32[1,128], index: 5, kind: input, shape index: {}]
  %s6 = inlined_call_operand.vmem [shape: f32[1,128], index: 6, kind: input, shape index: {}]
  %s7 = inlined_call_operand.vmem [shape: f32[1,128], index: 7, kind: input, shape index: {}]
  %s8 = inlined_call_operand.vmem [shape: f32[3,128,128], index: 8, kind: input, shape index: {}]
  %s9 = inlined_call_operand.vmem [shape: f32[128,128], index: 9, kind: input, shape index: {}]
  %s10 = inlined_call_operand.vmem [shape: f32[1,128], index: 10, kind: input, shape index: {}]
  %s11 = inlined_call_operand.vmem [shape: f32[1,128], index: 11, kind: input, shape index: {}]
  %s12 = inlined_call_operand.vmem [shape: f32[1,128], index: 12, kind: input, shape index: {}]
  %s13 = inlined_call_operand.vmem [shape: f32[1,128], index: 13, kind: input, shape index: {}]
  %s14 = inlined_call_operand.vmem [shape: f32[3,128,128], index: 14, kind: input, shape index: {}]
  %s15 = inlined_call_operand.vmem [shape: f32[128,128], index: 15, kind: input, shape index: {}]
  %s16 = inlined_call_operand.vmem [shape: f32[1,128], index: 16, kind: input, shape index: {}]
  %s17 = inlined_call_operand.vmem [shape: f32[1,128], index: 17, kind: input, shape index: {}]
  %s18 = inlined_call_operand.vmem [shape: f32[1,128], index: 18, kind: input, shape index: {}]
  %s19 = inlined_call_operand.vmem [shape: f32[1,128], index: 19, kind: input, shape index: {}]
  %s20 = inlined_call_operand.vmem [shape: f32[2,16,128], index: 20, kind: output, shape index: {}]
  %s21 = sld [smem:[#allocation0]]
  $region113: #{_lambda_.1} parent=0
    _
  %s23 = ssub.s32 1, %s21
  %s24 = scalar_select 0, %s23, %s21
  loop: start=0, step=1, limit=4
  $region2: #{_lambda_.1} parent=0 // loop_pre_header
    _
  $region3: #{_lambda_.1} parent=0 // loop_header
    %s26 = sphi 0, %s30
    %p27 = scmp.ge.s32.totalorder %s26, 4
    %s36 = sphi 0, %s38
    %s39 = sphi 0, %s36
    %s40 = sphi 0, %s39
    %s56 = sphi 0, %s40
    %s60 = sphi 0, %s60
    %s62 = sphi 0, %s60
    %s63 = sphi 0, %s62
    %s77 = sphi 0, %s63
    %s81 = sphi 0, %s81
    %s83 = sphi 0, %s81
    %s84 = sphi 0, %s83
    %s98 = sphi 0, %s84
    %s102 = sphi 0, %s102
    %s104 = sphi 0, %s102
    %s105 = sphi 0, %s104
    %s119 = sphi 0, %s105
    %s123 = sphi 0, %s123
    %s125 = sphi 0, %s123
    %s126 = sphi 0, %s125
    %s140 = sphi 0, %s126
    %s144 = sphi 0, %s144
    %s146 = sphi 0, %s144
    %s147 = sphi 0, %s146
    %s161 = sphi 0, %s147
    %s165 = sphi 0, %s165
    %s167 = sphi 0, %s165
    %s168 = sphi 0, %s167
    %s182 = sphi 0, %s168
    %s186 = sphi 0, %s186
    %s188 = sphi 0, %s186
    %s189 = sphi 0, %s188
    %s203 = sphi 0, %s189
    %s207 = sphi 0, %s207
    %s209 = sphi 0, %s207
    %s210 = sphi 0, %s209
    %s224 = sphi 0, %s210
    %s228 = sphi 0, %s228
    %s230 = sphi 0, %s228
    %s231 = sphi 0, %s230
    %s245 = sphi 0, %s231
    %s249 = sphi 0, %s249
    %s251 = sphi 0, %s249
    %s252 = sphi 0, %s251
    %s266 = sphi 0, %s252
    %s270 = sphi 0, %s270
    %s272 = sphi 0, %s270
    %s273 = sphi 0, %s272
    %s287 = sphi 0, %s273
    %s291 = sphi 0, %s291
    %s293 = sphi 0, %s291
    %s294 = sphi 0, %s293
    %s308 = sphi 0, %s294
    %s312 = sphi 0, %s312
    %s314 = sphi 0, %s312
    %s315 = sphi 0, %s314
    %s329 = sphi 0, %s315
    %s333 = sphi 0, %s333
    %s335 = sphi 0, %s333
    %s336 = sphi 0, %s335
    %s350 = sphi 0, %s336
    %s354 = sphi 0, %s354
    %s356 = sphi 0, %s354
    %s357 = sphi 0, %s356
    %s371 = sphi 0, %s357
    %s375 = sphi 0, %s375
    %s377 = sphi 0, %s375
    %s378 = sphi 0, %s377
    %s392 = sphi 0, %s378
    %s396 = sphi 0, %s396
    %s398 = sphi 0, %s396
    %s399 = sphi 0, %s398
    %s413 = sphi 0, %s399
    %s417 = sphi 0, %s417
    %s419 = sphi 0, %s417
    %s420 = sphi 0, %s419
    %s434 = sphi 0, %s420
    %s438 = sphi 0, %s438
    %s440 = sphi 0, %s438
    %s441 = sphi 0, %s440
    %s455 = sphi 0, %s441
    %s461 = sphi 0, %s463
    %s464 = sphi 0, %s461
    %s465 = sphi 0, %s464
    %s481 = sphi 0, %s465
  $region4: #{_lambda_.1} parent=0 // loop_header_branch
    %29 = sbr.rel (%p27) target = $region8
  $region5: #{_lambda_.1} parent=0 // loop_body
    %s31 = ssub.s32 %s26, 1
    %s32 = ssub.s32 %s26, 2
    %s33 = sadd.s32 %s26, 1
    %s34 = ssub.s32 %s26, %s33
    %p35 = scmp.eq.s32.totalorder %s34, 0
    %s37 = sadd.s32 %s36, 1
    %s38 = scalar_select %p35, %s36, %s37
    %p41 = pneg %p35
    %p42 = scmp.eq.s32.totalorder %s26, 1
    %p43 = por %p41, %p42
    %p44 = scmp.ne.s32.totalorder %s36, %s39
    %p45 = scmp.eq.s32.totalorder %s26, 0
    %p46 = por %p44, %p45
    %p47 = scmp.ne.s32.totalorder %s36, %s39
    %p48 = scmp.eq.s32.totalorder %s31, 1
    %p49 = por %p47, %p48
    %p50 = scmp.ne.s32.totalorder %s39, %s40
    %p51 = scmp.eq.s32.totalorder %s31, 0
    %p52 = por %p50, %p51
    %p53 = scmp.ne.s32.totalorder %s39, %s40
    %p54 = scmp.eq.s32.totalorder %s32, 1
    %p55 = por %p53, %p54
    %p57 = scmp.ne.s32.totalorder %s40, %s56
    %p58 = scmp.eq.s32.totalorder %s32, 0
    %p59 = por %p57, %p58
    %s61 = sadd.s32 %s60, 1
    %p64 = scmp.eq.s32.totalorder %s26, 1
    %p65 = scmp.ne.s32.totalorder %s60, %s62
    %p66 = scmp.eq.s32.totalorder %s26, 0
    %p67 = por %p65, %p66
    %p68 = scmp.ne.s32.totalorder %s60, %s62
    %p69 = scmp.eq.s32.totalorder %s31, 1
    %p70 = por %p68, %p69
    %p71 = scmp.ne.s32.totalorder %s62, %s63
    %p72 = scmp.eq.s32.totalorder %s31, 0
    %p73 = por %p71, %p72
    %p74 = scmp.ne.s32.totalorder %s62, %s63
    %p75 = scmp.eq.s32.totalorder %s32, 1
    %p76 = por %p74, %p75
    %p78 = scmp.ne.s32.totalorder %s63, %s77
    %p79 = scmp.eq.s32.totalorder %s32, 0
    %p80 = por %p78, %p79
    %s82 = sadd.s32 %s81, 1
    %p85 = scmp.eq.s32.totalorder %s26, 1
    %p86 = scmp.ne.s32.totalorder %s81, %s83
    %p87 = scmp.eq.s32.totalorder %s26, 0
    %p88 = por %p86, %p87
    %p89 = scmp.ne.s32.totalorder %s81, %s83
    %p90 = scmp.eq.s32.totalorder %s31, 1
    %p91 = por %p89, %p90
    %p92 = scmp.ne.s32.totalorder %s83, %s84
    %p93 = scmp.eq.s32.totalorder %s31, 0
    %p94 = por %p92, %p93
    %p95 = scmp.ne.s32.totalorder %s83, %s84
    %p96 = scmp.eq.s32.totalorder %s32, 1
    %p97 = por %p95, %p96
    %p99 = scmp.ne.s32.totalorder %s84, %s98
    %p100 = scmp.eq.s32.totalorder %s32, 0
    %p101 = por %p99, %p100
    %s103 = sadd.s32 %s102, 1
    %p106 = scmp.eq.s32.totalorder %s26, 1
    %p107 = scmp.ne.s32.totalorder %s102, %s104
    %p108 = scmp.eq.s32.totalorder %s26, 0
    %p109 = por %p107, %p108
    %p110 = scmp.ne.s32.totalorder %s102, %s104
    %p111 = scmp.eq.s32.totalorder %s31, 1
    %p112 = por %p110, %p111
    %p113 = scmp.ne.s32.totalorder %s104, %s105
    %p114 = scmp.eq.s32.totalorder %s31, 0
    %p115 = por %p113, %p114
    %p116 = scmp.ne.s32.totalorder %s104, %s105
    %p117 = scmp.eq.s32.totalorder %s32, 1
    %p118 = por %p116, %p117
    %p120 = scmp.ne.s32.totalorder %s105, %s119
    %p121 = scmp.eq.s32.totalorder %s32, 0
    %p122 = por %p120, %p121
    %s124 = sadd.s32 %s123, 1
    %p127 = scmp.eq.s32.totalorder %s26, 1
    %p128 = scmp.ne.s32.totalorder %s123, %s125
    %p129 = scmp.eq.s32.totalorder %s26, 0
    %p130 = por %p128, %p129
    %p131 = scmp.ne.s32.totalorder %s123, %s125
    %p132 = scmp.eq.s32.totalorder %s31, 1
    %p133 = por %p131, %p132
    %p134 = scmp.ne.s32.totalorder %s125, %s126
    %p135 = scmp.eq.s32.totalorder %s31, 0
    %p136 = por %p134, %p135
    %p137 = scmp.ne.s32.totalorder %s125, %s126
    %p138 = scmp.eq.s32.totalorder %s32, 1
    %p139 = por %p137, %p138
    %p141 = scmp.ne.s32.totalorder %s126, %s140
    %p142 = scmp.eq.s32.totalorder %s32, 0
    %p143 = por %p141, %p142
    %s145 = sadd.s32 %s144, 1
    %p148 = scmp.eq.s32.totalorder %s26, 1
    %p149 = scmp.ne.s32.totalorder %s144, %s146
    %p150 = scmp.eq.s32.totalorder %s26, 0
    %p151 = por %p149, %p150
    %p152 = scmp.ne.s32.totalorder %s144, %s146
    %p153 = scmp.eq.s32.totalorder %s31, 1
    %p154 = por %p152, %p153
    %p155 = scmp.ne.s32.totalorder %s146, %s147
    %p156 = scmp.eq.s32.totalorder %s31, 0
    %p157 = por %p155, %p156
    %p158 = scmp.ne.s32.totalorder %s146, %s147
    %p159 = scmp.eq.s32.totalorder %s32, 1
    %p160 = por %p158, %p159
    %p162 = scmp.ne.s32.totalorder %s147, %s161
    %p163 = scmp.eq.s32.totalorder %s32, 0
    %p164 = por %p162, %p163
    %s166 = sadd.s32 %s165, 1
    %p169 = scmp.eq.s32.totalorder %s26, 1
    %p170 = scmp.ne.s32.totalorder %s165, %s167
    %p171 = scmp.eq.s32.totalorder %s26, 0
    %p172 = por %p170, %p171
    %p173 = scmp.ne.s32.totalorder %s165, %s167
    %p174 = scmp.eq.s32.totalorder %s31, 1
    %p175 = por %p173, %p174
    %p176 = scmp.ne.s32.totalorder %s167, %s168
    %p177 = scmp.eq.s32.totalorder %s31, 0
    %p178 = por %p176, %p177
    %p179 = scmp.ne.s32.totalorder %s167, %s168
    %p180 = scmp.eq.s32.totalorder %s32, 1
    %p181 = por %p179, %p180
    %p183 = scmp.ne.s32.totalorder %s168, %s182
    %p184 = scmp.eq.s32.totalorder %s32, 0
    %p185 = por %p183, %p184
    %s187 = sadd.s32 %s186, 1
    %p190 = scmp.eq.s32.totalorder %s26, 1
    %p191 = scmp.ne.s32.totalorder %s186, %s188
    %p192 = scmp.eq.s32.totalorder %s26, 0
    %p193 = por %p191, %p192
    %p194 = scmp.ne.s32.totalorder %s186, %s188
    %p195 = scmp.eq.s32.totalorder %s31, 1
    %p196 = por %p194, %p195
    %p197 = scmp.ne.s32.totalorder %s188, %s189
    %p198 = scmp.eq.s32.totalorder %s31, 0
    %p199 = por %p197, %p198
    %p200 = scmp.ne.s32.totalorder %s188, %s189
    %p201 = scmp.eq.s32.totalorder %s32, 1
    %p202 = por %p200, %p201
    %p204 = scmp.ne.s32.totalorder %s189, %s203
    %p205 = scmp.eq.s32.totalorder %s32, 0
    %p206 = por %p204, %p205
    %s208 = sadd.s32 %s207, 1
    %p211 = scmp.eq.s32.totalorder %s26, 1
    %p212 = scmp.ne.s32.totalorder %s207, %s209
    %p213 = scmp.eq.s32.totalorder %s26, 0
    %p214 = por %p212, %p213
    %p215 = scmp.ne.s32.totalorder %s207, %s209
    %p216 = scmp.eq.s32.totalorder %s31, 1
    %p217 = por %p215, %p216
    %p218 = scmp.ne.s32.totalorder %s209, %s210
    %p219 = scmp.eq.s32.totalorder %s31, 0
    %p220 = por %p218, %p219
    %p221 = scmp.ne.s32.totalorder %s209, %s210
    %p222 = scmp.eq.s32.totalorder %s32, 1
    %p223 = por %p221, %p222
    %p225 = scmp.ne.s32.totalorder %s210, %s224
    %p226 = scmp.eq.s32.totalorder %s32, 0
    %p227 = por %p225, %p226
    %s229 = sadd.s32 %s228, 1
    %p232 = scmp.eq.s32.totalorder %s26, 1
    %p233 = scmp.ne.s32.totalorder %s228, %s230
    %p234 = scmp.eq.s32.totalorder %s26, 0
    %p235 = por %p233, %p234
    %p236 = scmp.ne.s32.totalorder %s228, %s230
    %p237 = scmp.eq.s32.totalorder %s31, 1
    %p238 = por %p236, %p237
    %p239 = scmp.ne.s32.totalorder %s230, %s231
    %p240 = scmp.eq.s32.totalorder %s31, 0
    %p241 = por %p239, %p240
    %p242 = scmp.ne.s32.totalorder %s230, %s231
    %p243 = scmp.eq.s32.totalorder %s32, 1
    %p244 = por %p242, %p243
    %p246 = scmp.ne.s32.totalorder %s231, %s245
    %p247 = scmp.eq.s32.totalorder %s32, 0
    %p248 = por %p246, %p247
    %s250 = sadd.s32 %s249, 1
    %p253 = scmp.eq.s32.totalorder %s26, 1
    %p254 = scmp.ne.s32.totalorder %s249, %s251
    %p255 = scmp.eq.s32.totalorder %s26, 0
    %p256 = por %p254, %p255
    %p257 = scmp.ne.s32.totalorder %s249, %s251
    %p258 = scmp.eq.s32.totalorder %s31, 1
    %p259 = por %p257, %p258
    %p260 = scmp.ne.s32.totalorder %s251, %s252
    %p261 = scmp.eq.s32.totalorder %s31, 0
    %p262 = por %p260, %p261
    %p263 = scmp.ne.s32.totalorder %s251, %s252
    %p264 = scmp.eq.s32.totalorder %s32, 1
    %p265 = por %p263, %p264
    %p267 = scmp.ne.s32.totalorder %s252, %s266
    %p268 = scmp.eq.s32.totalorder %s32, 0
    %p269 = por %p267, %p268
    %s271 = sadd.s32 %s270, 1
    %p274 = scmp.eq.s32.totalorder %s26, 1
    %p275 = scmp.ne.s32.totalorder %s270, %s272
    %p276 = scmp.eq.s32.totalorder %s26, 0
    %p277 = por %p275, %p276
    %p278 = scmp.ne.s32.totalorder %s270, %s272
    %p279 = scmp.eq.s32.totalorder %s31, 1
    %p280 = por %p278, %p279
    %p281 = scmp.ne.s32.totalorder %s272, %s273
    %p282 = scmp.eq.s32.totalorder %s31, 0
    %p283 = por %p281, %p282
    %p284 = scmp.ne.s32.totalorder %s272, %s273
    %p285 = scmp.eq.s32.totalorder %s32, 1
    %p286 = por %p284, %p285
    %p288 = scmp.ne.s32.totalorder %s273, %s287
    %p289 = scmp.eq.s32.totalorder %s32, 0
    %p290 = por %p288, %p289
    %s292 = sadd.s32 %s291, 1
    %p295 = scmp.eq.s32.totalorder %s26, 1
    %p296 = scmp.ne.s32.totalorder %s291, %s293
    %p297 = scmp.eq.s32.totalorder %s26, 0
    %p298 = por %p296, %p297
    %p299 = scmp.ne.s32.totalorder %s291, %s293
    %p300 = scmp.eq.s32.totalorder %s31, 1
    %p301 = por %p299, %p300
    %p302 = scmp.ne.s32.totalorder %s293, %s294
    %p303 = scmp.eq.s32.totalorder %s31, 0
    %p304 = por %p302, %p303
    %p305 = scmp.ne.s32.totalorder %s293, %s294
    %p306 = scmp.eq.s32.totalorder %s32, 1
    %p307 = por %p305, %p306
    %p309 = scmp.ne.s32.totalorder %s294, %s308
    %p310 = scmp.eq.s32.totalorder %s32, 0
    %p311 = por %p309, %p310
    %s313 = sadd.s32 %s312, 1
    %p316 = scmp.eq.s32.totalorder %s26, 1
    %p317 = scmp.ne.s32.totalorder %s312, %s314
    %p318 = scmp.eq.s32.totalorder %s26, 0
    %p319 = por %p317, %p318
    %p320 = scmp.ne.s32.totalorder %s312, %s314
    %p321 = scmp.eq.s32.totalorder %s31, 1
    %p322 = por %p320, %p321
    %p323 = scmp.ne.s32.totalorder %s314, %s315
    %p324 = scmp.eq.s32.totalorder %s31, 0
    %p325 = por %p323, %p324
    %p326 = scmp.ne.s32.totalorder %s314, %s315
    %p327 = scmp.eq.s32.totalorder %s32, 1
    %p328 = por %p326, %p327
    %p330 = scmp.ne.s32.totalorder %s315, %s329
    %p331 = scmp.eq.s32.totalorder %s32, 0
    %p332 = por %p330, %p331
    %s334 = sadd.s32 %s333, 1
    %p337 = scmp.eq.s32.totalorder %s26, 1
    %p338 = scmp.ne.s32.totalorder %s333, %s335
    %p339 = scmp.eq.s32.totalorder %s26, 0
    %p340 = por %p338, %p339
    %p341 = scmp.ne.s32.totalorder %s333, %s335
    %p342 = scmp.eq.s32.totalorder %s31, 1
    %p343 = por %p341, %p342
    %p344 = scmp.ne.s32.totalorder %s335, %s336
    %p345 = scmp.eq.s32.totalorder %s31, 0
    %p346 = por %p344, %p345
    %p347 = scmp.ne.s32.totalorder %s335, %s336
    %p348 = scmp.eq.s32.totalorder %s32, 1
    %p349 = por %p347, %p348
    %p351 = scmp.ne.s32.totalorder %s336, %s350
    %p352 = scmp.eq.s32.totalorder %s32, 0
    %p353 = por %p351, %p352
    %s355 = sadd.s32 %s354, 1
    %p358 = scmp.eq.s32.totalorder %s26, 1
    %p359 = scmp.ne.s32.totalorder %s354, %s356
    %p360 = scmp.eq.s32.totalorder %s26, 0
    %p361 = por %p359, %p360
    %p362 = scmp.ne.s32.totalorder %s354, %s356
    %p363 = scmp.eq.s32.totalorder %s31, 1
    %p364 = por %p362, %p363
    %p365 = scmp.ne.s32.totalorder %s356, %s357
    %p366 = scmp.eq.s32.totalorder %s31, 0
    %p367 = por %p365, %p366
    %p368 = scmp.ne.s32.totalorder %s356, %s357
    %p369 = scmp.eq.s32.totalorder %s32, 1
    %p370 = por %p368, %p369
    %p372 = scmp.ne.s32.totalorder %s357, %s371
    %p373 = scmp.eq.s32.totalorder %s32, 0
    %p374 = por %p372, %p373
    %s376 = sadd.s32 %s375, 1
    %p379 = scmp.eq.s32.totalorder %s26, 1
    %p380 = scmp.ne.s32.totalorder %s375, %s377
    %p381 = scmp.eq.s32.totalorder %s26, 0
    %p382 = por %p380, %p381
    %p383 = scmp.ne.s32.totalorder %s375, %s377
    %p384 = scmp.eq.s32.totalorder %s31, 1
    %p385 = por %p383, %p384
    %p386 = scmp.ne.s32.totalorder %s377, %s378
    %p387 = scmp.eq.s32.totalorder %s31, 0
    %p388 = por %p386, %p387
    %p389 = scmp.ne.s32.totalorder %s377, %s378
    %p390 = scmp.eq.s32.totalorder %s32, 1
    %p391 = por %p389, %p390
    %p393 = scmp.ne.s32.totalorder %s378, %s392
    %p394 = scmp.eq.s32.totalorder %s32, 0
    %p395 = por %p393, %p394
    %s397 = sadd.s32 %s396, 1
    %p400 = scmp.eq.s32.totalorder %s26, 1
    %p401 = scmp.ne.s32.totalorder %s396, %s398
    %p402 = scmp.eq.s32.totalorder %s26, 0
    %p403 = por %p401, %p402
    %p404 = scmp.ne.s32.totalorder %s396, %s398
    %p405 = scmp.eq.s32.totalorder %s31, 1
    %p406 = por %p404, %p405
    %p407 = scmp.ne.s32.totalorder %s398, %s399
    %p408 = scmp.eq.s32.totalorder %s31, 0
    %p409 = por %p407, %p408
    %p410 = scmp.ne.s32.totalorder %s398, %s399
    %p411 = scmp.eq.s32.totalorder %s32, 1
    %p412 = por %p410, %p411
    %p414 = scmp.ne.s32.totalorder %s399, %s413
    %p415 = scmp.eq.s32.totalorder %s32, 0
    %p416 = por %p414, %p415
    %s418 = sadd.s32 %s417, 1
    %p421 = scmp.eq.s32.totalorder %s26, 1
    %p422 = scmp.ne.s32.totalorder %s417, %s419
    %p423 = scmp.eq.s32.totalorder %s26, 0
    %p424 = por %p422, %p423
    %p425 = scmp.ne.s32.totalorder %s417, %s419
    %p426 = scmp.eq.s32.totalorder %s31, 1
    %p427 = por %p425, %p426
    %p428 = scmp.ne.s32.totalorder %s419, %s420
    %p429 = scmp.eq.s32.totalorder %s31, 0
    %p430 = por %p428, %p429
    %p431 = scmp.ne.s32.totalorder %s419, %s420
    %p432 = scmp.eq.s32.totalorder %s32, 1
    %p433 = por %p431, %p432
    %p435 = scmp.ne.s32.totalorder %s420, %s434
    %p436 = scmp.eq.s32.totalorder %s32, 0
    %p437 = por %p435, %p436
    %s439 = sadd.s32 %s438, 1
    %p442 = scmp.eq.s32.totalorder %s26, 1
    %p443 = scmp.ne.s32.totalorder %s438, %s440
    %p444 = scmp.eq.s32.totalorder %s26, 0
    %p445 = por %p443, %p444
    %p446 = scmp.ne.s32.totalorder %s438, %s440
    %p447 = scmp.eq.s32.totalorder %s31, 1
    %p448 = por %p446, %p447
    %p449 = scmp.ne.s32.totalorder %s440, %s441
    %p450 = scmp.eq.s32.totalorder %s31, 0
    %p451 = por %p449, %p450
    %p452 = scmp.ne.s32.totalorder %s440, %s441
    %p453 = scmp.eq.s32.totalorder %s32, 1
    %p454 = por %p452, %p453
    %p456 = scmp.ne.s32.totalorder %s441, %s455
    %p457 = scmp.eq.s32.totalorder %s32, 0
    %p458 = por %p456, %p457
    %s459 = ssub.s32 %s26, %s33
    %p460 = scmp.eq.s32.totalorder %s459, 0
    %s462 = sadd.s32 %s461, 1
    %s463 = scalar_select %p460, %s461, %s462
    %p466 = pneg %p460
    %p467 = scmp.eq.s32.totalorder %s26, 1
    %p468 = por %p466, %p467
    %p469 = scmp.ne.s32.totalorder %s461, %s464
    %p470 = scmp.eq.s32.totalorder %s26, 0
    %p471 = por %p469, %p470
    %p472 = scmp.ne.s32.totalorder %s461, %s464
    %p473 = scmp.eq.s32.totalorder %s31, 1
    %p474 = por %p472, %p473
    %p475 = scmp.ne.s32.totalorder %s464, %s465
    %p476 = scmp.eq.s32.totalorder %s31, 0
    %p477 = por %p475, %p476
    %p478 = scmp.ne.s32.totalorder %s464, %s465
    %p479 = scmp.eq.s32.totalorder %s32, 1
    %p480 = por %p478, %p479
    %p482 = scmp.ne.s32.totalorder %s465, %s481
    %p483 = scmp.eq.s32.totalorder %s32, 0
    %p484 = por %p482, %p483
    %p485 = scmp.le.s32.totalorder 1, %s26
    %p486 = scmp.lt.s32.totalorder %s26, 3
    %p487 = pnand %p485, %p486
    %p488 = pneg %p487
    // Predicated region
    $region9: #{_lambda_.1} parent=5 // pred_check
      _
    $region10: #{_lambda_.1} parent=5 // pred_check_branch
      %490 = sbr.rel (%p487) target = $region12
    $region11: #{_lambda_.1} parent=5 // pred_region
      %s491 = ssub.s32 %s26, 1
      // Predicated region
      $region13: #{_lambda_.1} parent=11 // pred_check
        %p492 = pneg %p73
      $region14: #{_lambda_.1} parent=11 // pred_check_branch
        %494 = sbr.rel (%p492) target = $region16
      $region15: #{_lambda_.1} parent=11 // pred_region
        _
      $region16: #{_lambda_.1} parent=11 // pred_fallthru
        _
      // Predicated region
      $region17: #{_lambda_.1} parent=11 // pred_check
        %p495 = pneg %p94
      $region18: #{_lambda_.1} parent=11 // pred_check_branch
        %497 = sbr.rel (%p495) target = $region20
      $region19: #{_lambda_.1} parent=11 // pred_region
        _
      $region20: #{_lambda_.1} parent=11 // pred_fallthru
        _
      // Predicated region
      $region21: #{_lambda_.1} parent=11 // pred_check
        %p498 = pneg %p115
      $region22: #{_lambda_.1} parent=11 // pred_check_branch
        %500 = sbr.rel (%p498) target = $region24
      $region23: #{_lambda_.1} parent=11 // pred_region
        _
      $region24: #{_lambda_.1} parent=11 // pred_fallthru
        _
      // Predicated region
      $region25: #{_lambda_.1} parent=11 // pred_check
        %p501 = pneg %p136
      $region26: #{_lambda_.1} parent=11 // pred_check_branch
        %503 = sbr.rel (%p501) target = $region28
      $region27: #{_lambda_.1} parent=11 // pred_region
        _
      $region28: #{_lambda_.1} parent=11 // pred_fallthru
        _
      // Predicated region
      $region29: #{_lambda_.1} parent=11 // pred_check
        %p504 = pneg %p157
      $region30: #{_lambda_.1} parent=11 // pred_check_branch
        %506 = sbr.rel (%p504) target = $region32
      $region31: #{_lambda_.1} parent=11 // pred_region
        _
      $region32: #{_lambda_.1} parent=11 // pred_fallthru
        _
      // Predicated region
      $region33: #{_lambda_.1} parent=11 // pred_check
        %p507 = pneg %p178
      $region34: #{_lambda_.1} parent=11 // pred_check_branch
        %509 = sbr.rel (%p507) target = $region36
      $region35: #{_lambda_.1} parent=11 // pred_region
        _
      $region36: #{_lambda_.1} parent=11 // pred_fallthru
        _
      // Predicated region
      $region37: #{_lambda_.1} parent=11 // pred_check
        %p510 = pneg %p199
      $region38: #{_lambda_.1} parent=11 // pred_check_branch
        %512 = sbr.rel (%p510) target = $region40
      $region39: #{_lambda_.1} parent=11 // pred_region
        _
      $region40: #{_lambda_.1} parent=11 // pred_fallthru
        _
      // Predicated region
      $region41: #{_lambda_.1} parent=11 // pred_check
        %p513 = pneg %p220
      $region42: #{_lambda_.1} parent=11 // pred_check_branch
        %515 = sbr.rel (%p513) target = $region44
      $region43: #{_lambda_.1} parent=11 // pred_region
        _
      $region44: #{_lambda_.1} parent=11 // pred_fallthru
        _
      // Predicated region
      $region45: #{_lambda_.1} parent=11 // pred_check
        %p516 = pneg %p241
      $region46: #{_lambda_.1} parent=11 // pred_check_branch
        %518 = sbr.rel (%p516) target = $region48
      $region47: #{_lambda_.1} parent=11 // pred_region
        _
      $region48: #{_lambda_.1} parent=11 // pred_fallthru
        _
      // Predicated region
      $region49: #{_lambda_.1} parent=11 // pred_check
        %p519 = pneg %p262
      $region50: #{_lambda_.1} parent=11 // pred_check_branch
        %521 = sbr.rel (%p519) target = $region52
      $region51: #{_lambda_.1} parent=11 // pred_region
        _
      $region52: #{_lambda_.1} parent=11 // pred_fallthru
        _
      // Predicated region
      $region53: #{_lambda_.1} parent=11 // pred_check
        %p522 = pneg %p283
      $region54: #{_lambda_.1} parent=11 // pred_check_branch
        %524 = sbr.rel (%p522) target = $region56
      $region55: #{_lambda_.1} parent=11 // pred_region
        _
      $region56: #{_lambda_.1} parent=11 // pred_fallthru
        _
      // Predicated region
      $region57: #{_lambda_.1} parent=11 // pred_check
        %p525 = pneg %p304
      $region58: #{_lambda_.1} parent=11 // pred_check_branch
        %527 = sbr.rel (%p525) target = $region60
      $region59: #{_lambda_.1} parent=11 // pred_region
        _
      $region60: #{_lambda_.1} parent=11 // pred_fallthru
        _
      // Predicated region
      $region61: #{_lambda_.1} parent=11 // pred_check
        %p528 = pneg %p325
      $region62: #{_lambda_.1} parent=11 // pred_check_branch
        %530 = sbr.rel (%p528) target = $region64
      $region63: #{_lambda_.1} parent=11 // pred_region
        _
      $region64: #{_lambda_.1} parent=11 // pred_fallthru
        _
      // Predicated region
      $region65: #{_lambda_.1} parent=11 // pred_check
        %p531 = pneg %p346
      $region66: #{_lambda_.1} parent=11 // pred_check_branch
        %533 = sbr.rel (%p531) target = $region68
      $region67: #{_lambda_.1} parent=11 // pred_region
        _
      $region68: #{_lambda_.1} parent=11 // pred_fallthru
        _
      // Predicated region
      $region69: #{_lambda_.1} parent=11 // pred_check
        %p534 = pneg %p367
      $region70: #{_lambda_.1} parent=11 // pred_check_branch
        %536 = sbr.rel (%p534) target = $region72
      $region71: #{_lambda_.1} parent=11 // pred_region
        _
      $region72: #{_lambda_.1} parent=11 // pred_fallthru
        _
      // Predicated region
      $region73: #{_lambda_.1} parent=11 // pred_check
        %p537 = pneg %p388
      $region74: #{_lambda_.1} parent=11 // pred_check_branch
        %539 = sbr.rel (%p537) target = $region76
      $region75: #{_lambda_.1} parent=11 // pred_region
        _
      $region76: #{_lambda_.1} parent=11 // pred_fallthru
        _
      // Predicated region
      $region77: #{_lambda_.1} parent=11 // pred_check
        %p540 = pneg %p409
      $region78: #{_lambda_.1} parent=11 // pred_check_branch
        %542 = sbr.rel (%p540) target = $region80
      $region79: #{_lambda_.1} parent=11 // pred_region
        _
      $region80: #{_lambda_.1} parent=11 // pred_fallthru
        _
      // Predicated region
      $region81: #{_lambda_.1} parent=11 // pred_check
        %p543 = pneg %p430
      $region82: #{_lambda_.1} parent=11 // pred_check_branch
        %545 = sbr.rel (%p543) target = $region84
      $region83: #{_lambda_.1} parent=11 // pred_region
        _
      $region84: #{_lambda_.1} parent=11 // pred_fallthru
        _
      // Predicated region
      $region85: #{_lambda_.1} parent=11 // pred_check
        %p546 = pneg %p451
      $region86: #{_lambda_.1} parent=11 // pred_check_branch
        %548 = sbr.rel (%p546) target = $region88
      $region87: #{_lambda_.1} parent=11 // pred_region
        _
      $region88: #{_lambda_.1} parent=11 // pred_fallthru
        _
    $region12: #{_lambda_.1} parent=5 // pred_fallthru
      _
    %p549 = scmp.lt.s32.totalorder %s26, 2
    // Predicated region
    $region89: #{_lambda_.1} parent=5 // pred_check
      %p550 = pneg %p549
    $region90: #{_lambda_.1} parent=5 // pred_check_branch
      %552 = sbr.rel (%p550) target = $region92
    $region91: #{_lambda_.1} parent=5 // pred_region
      // Predicated region
      $region93: #{_lambda_.1} parent=91 // pred_check
        %p553 = pneg %p46
      $region94: #{_lambda_.1} parent=91 // pred_check_branch
        %555 = sbr.rel (%p553) target = $region96
      $region95: #{_lambda_.1} parent=91 // pred_region
        %p556 = scmp.lt.s32.totalorder %s26, 1
        %s557 = scalar_select %p556, %s26, 1
        %s558 = smul.addr %s557, 2
        %s559 = smul.addr %s558, 8
        %s560 = scalar_lea.vmem %s0, %s559
      $region96: #{_lambda_.1} parent=91 // pred_fallthru
        _
    $region92: #{_lambda_.1} parent=5 // pred_fallthru
      _
    %p561 = scmp.le.s32.totalorder 1, %s26
    %p562 = scmp.lt.s32.totalorder %s26, 3
    %p563 = pnand %p561, %p562
    %p564 = pneg %p563
    // Predicated region
    $region97: #{_lambda_.1} parent=5 // pred_check
      _
    $region98: #{_lambda_.1} parent=5 // pred_check_branch
      %566 = sbr.rel (%p563) target = $region100
    $region99: #{_lambda_.1} parent=5 // pred_region
      %s567 = ssub.s32 %s26, 1
      %p568 = scmp.lt.s32.totalorder %s31, 1
      %s569 = scalar_select %p568, %s31, 1
      %s570 = smul.addr %s569, 2
      %s571 = smul.addr %s570, 8
      %s572 = scalar_lea.vmem %s0, %s571
      %p573 = pneg %p52
      %p574 = pneg %p49
      %p575 = pneg %p73
      %p576 = pneg %p70
      %p577 = pneg %p94
      %p578 = pneg %p91
      %p579 = pneg %p115
      %p580 = pneg %p112
      %p581 = pneg %p136
      %p582 = pneg %p133
      %p583 = pneg %p157
      %p584 = pneg %p154
      %p585 = pneg %p178
      %p586 = pneg %p175
      %p587 = pneg %p199
      %p588 = pneg %p196
      %p589 = pneg %p220
      %p590 = pneg %p217
      %p591 = pneg %p241
      %p592 = pneg %p238
      %p593 = pneg %p262
      %p594 = pneg %p259
      %p595 = pneg %p283
      %p596 = pneg %p280
      %p597 = pneg %p304
      %p598 = pneg %p301
      %p599 = pneg %p325
      %p600 = pneg %p322
      %p601 = pneg %p346
      %p602 = pneg %p343
      %p603 = pneg %p367
      %p604 = pneg %p364
      %p605 = pneg %p388
      %p606 = pneg %p385
      %p607 = pneg %p409
      %p608 = pneg %p406
      %p609 = pneg %p430
      %p610 = pneg %p427
      %p611 = pneg %p451
      %p612 = pneg %p448
      %p613 = pneg %p477
      %p614 = pneg %p474
      %p615 = scmp.lt.s32.totalorder %s31, 1
      %s616 = scalar_select %p615, %s31, 1
      %s617 = smul.addr %s616, 2
      %s618 = smul.addr %s617, 8
      %s619 = scalar_lea.vmem %s20, %s618
      %p620 = scmp.lt.s32.totalorder %s31, 1
      %s621 = scalar_select %p620, %s31, 1
      %s622 = smul.addr %s621, 2
      %s623 = smul.addr %s622, 8
      %s624 = scalar_lea.vmem %s0, %s623
      %p625 = scmp.lt.s32.totalorder %s31, 1
      %s626 = scalar_select %p625, %s31, 1
      %s627 = smul.addr %s626, 2
      %s628 = smul.addr %s627, 8
      %s629 = scalar_lea.vmem %s20, %s628
      %630 = vst [vmem:[#allocation2] sm:$0x1] 0.0
      %631 = vst [vmem:[#allocation2 + $0x11] sm:$0x1] 0.0
      %v632 = vld [vmem:[%s1] sm:$0xff]
      %v633 = vld [vmem:[%s1 + $0x8] sm:$0xff]
      %v634 = vld [vmem:[%s1 + $0x10] sm:$0xff]
      %v635 = vld [vmem:[%s1 + $0x18] sm:$0xff]
      %v636 = vld [vmem:[%s1 + $0x20] sm:$0xff]
      %v637 = vld [vmem:[%s1 + $0x28] sm:$0xff]
      %v638 = vld [vmem:[%s1 + $0x30] sm:$0xff]
      %v639 = vld [vmem:[%s1 + $0x38] sm:$0xff]
      %v640 = vld [vmem:[%s1 + $0x40] sm:$0xff]
      %v641 = vld [vmem:[%s1 + $0x48] sm:$0xff]
      %v642 = vld [vmem:[%s1 + $0x50] sm:$0xff]
      %v643 = vld [vmem:[%s1 + $0x58] sm:$0xff]
      %v644 = vld [vmem:[%s1 + $0x60] sm:$0xff]
      %v645 = vld [vmem:[%s1 + $0x68] sm:$0xff]
      %v646 = vld [vmem:[%s1 + $0x70] sm:$0xff]
      %v647 = vld [vmem:[%s1 + $0x78] sm:$0xff]
      %v648 = vld [vmem:[%s624] sm:$0xff]
      %v649 = vld [vmem:[%s624 + $0x8] sm:$0xff]
      %650 = vst [vmem:[#allocation2 + $0x1] sm:$0xff] %v648
      %651 = vst [vmem:[#allocation2 + $0x9] sm:$0xff] %v649
      %v652 = vld [vmem:[#allocation2] sm:$0xff]
      %v653 = vld [vmem:[#allocation2 + $0x8] sm:$0xff]
      %v654 = vld [vmem:[%s2] sm:$0xff]
      %v655 = vld [vmem:[%s2 + $0x8] sm:$0xff]
      %v656 = vld [vmem:[%s2 + $0x10] sm:$0xff]
      %v657 = vld [vmem:[%s2 + $0x18] sm:$0xff]
      %v658 = vld [vmem:[%s2 + $0x20] sm:$0xff]
      %v659 = vld [vmem:[%s2 + $0x28] sm:$0xff]
      %v660 = vld [vmem:[%s2 + $0x30] sm:$0xff]
      %v661 = vld [vmem:[%s2 + $0x38] sm:$0xff]
      %v662 = vld [vmem:[%s2 + $0x40] sm:$0xff]
      %v663 = vld [vmem:[%s2 + $0x48] sm:$0xff]
      %v664 = vld [vmem:[%s2 + $0x50] sm:$0xff]
      %v665 = vld [vmem:[%s2 + $0x58] sm:$0xff]
      %v666 = vld [vmem:[%s2 + $0x60] sm:$0xff]
      %v667 = vld [vmem:[%s2 + $0x68] sm:$0xff]
      %v668 = vld [vmem:[%s2 + $0x70] sm:$0xff]
      %v669 = vld [vmem:[%s2 + $0x78] sm:$0xff]
      %v670 = vld [vmem:[#allocation2 + $0x1] sm:$0xff]
      %v671 = vld [vmem:[#allocation2 + $0x9] sm:$0xff]
      %s672 = scalar_lea.vmem %s2, 128
      %v673 = vld [vmem:[%s672] sm:$0xff]
      %v674 = vld [vmem:[%s672 + $0x8] sm:$0xff]
      %v675 = vld [vmem:[%s672 + $0x10] sm:$0xff]
      %v676 = vld [vmem:[%s672 + $0x18] sm:$0xff]
      %v677 = vld [vmem:[%s672 + $0x20] sm:$0xff]
      %v678 = vld [vmem:[%s672 + $0x28] sm:$0xff]
      %v679 = vld [vmem:[%s672 + $0x30] sm:$0xff]
      %v680 = vld [vmem:[%s672 + $0x38] sm:$0xff]
      %v681 = vld [vmem:[%s672 + $0x40] sm:$0xff]
      %v682 = vld [vmem:[%s672 + $0x48] sm:$0xff]
      %v683 = vld [vmem:[%s672 + $0x50] sm:$0xff]
      %v684 = vld [vmem:[%s672 + $0x58] sm:$0xff]
      %v685 = vld [vmem:[%s672 + $0x60] sm:$0xff]
      %v686 = vld [vmem:[%s672 + $0x68] sm:$0xff]
      %v687 = vld [vmem:[%s672 + $0x70] sm:$0xff]
      %v688 = vld [vmem:[%s672 + $0x78] sm:$0xff]
      %689 = vmatprep.subr.mxu0 0.0
      %690 = vmatpush1.msra.mxu0 %v673
      %691 = vmatprep.subr.mxu0 0.0
      %692 = vmatpush1.msra.mxu0 %v674
      %693 = vmatprep.subr.mxu0 0.0
      %694 = vmatpush1.msra.mxu0 %v675
      %695 = vmatprep.subr.mxu0 0.0
      %696 = vmatpush1.msra.mxu0 %v676
      %697 = vmatprep.subr.mxu0 0.0
      %698 = vmatpush1.msra.mxu0 %v677
      %699 = vmatprep.subr.mxu0 0.0
      %700 = vmatpush1.msra.mxu0 %v678
      %701 = vmatprep.subr.mxu0 0.0
      %702 = vmatpush1.msra.mxu0 %v679
      %703 = vmatprep.subr.mxu0 0.0
      %704 = vmatpush1.msra.mxu0 %v680
      %705 = vmatprep.subr.mxu0 0.0
      %706 = vmatpush1.msra.mxu0 %v681
      %707 = vmatprep.subr.mxu0 0.0
      %708 = vmatpush1.msra.mxu0 %v682
      %709 = vmatprep.subr.mxu0 0.0
      %710 = vmatpush1.msra.mxu0 %v683
      %711 = vmatprep.subr.mxu0 0.0
      %712 = vmatpush1.msra.mxu0 %v684
      %713 = vmatprep.subr.mxu0 0.0
      %714 = vmatpush1.msra.mxu0 %v685
      %715 = vmatprep.subr.mxu0 0.0
      %716 = vmatpush1.msra.mxu0 %v686
      %717 = vmatprep.subr.mxu0 0.0
      %718 = vmatpush1.msra.mxu0 %v687
      %719 = vmatprep.subr.mxu0 0.0
      %720 = vmatpush1.msra.mxu0 %v688
      %721 = vmatprep.subr.mxu0 0.0
      %722 = vmatpush1.msra.mxu0 0.0
      %723 = vmatprep.subr.mxu0 0.0
      %724 = vmatpush1.msra.mxu0 0.0
      %725 = vmatprep.subr.mxu0 0.0
      %726 = vmatpush1.msra.mxu0 0.0
      %727 = vmatprep.subr.mxu0 0.0
      %728 = vmatpush1.msra.mxu0 0.0
      %729 = vmatprep.subr.mxu0 0.0
      %730 = vmatpush1.msra.mxu0 0.0
      %731 = vmatprep.subr.mxu0 0.0
      %732 = vmatpush1.msra.mxu0 0.0
      %733 = vmatprep.subr.mxu0 0.0
      %734 = vmatpush1.msra.mxu0 0.0
      %735 = vmatprep.subr.mxu0 0.0
      %736 = vmatpush1.msra.mxu0 0.0
      %737 = vmatprep.subr.mxu0 0.0
      %738 = vmatpush1.msra.mxu0 0.0
      %739 = vmatprep.subr.mxu0 0.0
      %740 = vmatpush1.msra.mxu0 0.0
      %741 = vmatprep.subr.mxu0 0.0
      %742 = vmatpush1.msra.mxu0 0.0
      %743 = vmatprep.subr.mxu0 0.0
      %744 = vmatpush1.msra.mxu0 0.0
      %745 = vmatprep.subr.mxu0 0.0
      %746 = vmatpush1.msra.mxu0 0.0
      %747 = vmatprep.subr.mxu0 0.0
      %748 = vmatpush1.msra.mxu0 0.0
      %749 = vmatprep.subr.mxu0 0.0
      %750 = vmatpush1.msra.mxu0 0.0
      %751 = vmatprep.subr.mxu0 0.0
      %752 = vmatpush1.msra.mxu0 0.0
      %753 = vmatprep.mubr.f32.mxu0 0.0
      %754 = vmatmul.mubr.f32.gmra.mrb[0].mxu0 %v670
      %v755 = vpop.f32.mrb[0].mxu0
      %v756 = vadd.f32 0.0, %v755
      %v757 = vpop.f32.mrb[0].mxu0
      %758 = vmatprep.mubr.f32.mxu0 0.0
      %759 = vmatmul.mubr.f32.gmra.mrb[0].mxu0 %v671
      %v760 = vpop.f32.mrb[0].mxu0
      %v761 = vadd.f32 0.0, %v760
      %v762 = vpop.f32.mrb[0].mxu0
      %763 = vdwg.mxu0
      %764 = vmatprep.subr.mxu0 0.0
      %765 = vmatpush1.msra.mxu0 %v654
      %766 = vmatprep.subr.mxu0 0.0
      %767 = vmatpush1.msra.mxu0 %v655
      %768 = vmatprep.subr.mxu0 0.0
      %769 = vmatpush1.msra.mxu0 %v656
      %770 = vmatprep.subr.mxu0 0.0
      %771 = vmatpush1.msra.mxu0 %v657
      %772 = vmatprep.subr.mxu0 0.0
      %773 = vmatpush1.msra.mxu0 %v658
      %774 = vmatprep.subr.mxu0 0.0
      %775 = vmatpush1.msra.mxu0 %v659
      %776 = vmatprep.subr.mxu0 0.0
      %777 = vmatpush1.msra.mxu0 %v660
      %778 = vmatprep.subr.mxu0 0.0
      %779 = vmatpush1.msra.mxu0 %v661
      %780 = vmatprep.subr.mxu0 0.0
      %781 = vmatpush1.msra.mxu0 %v662
      %782 = vmatprep.subr.mxu0 0.0
      %783 = vmatpush1.msra.mxu0 %v663
      %784 = vmatprep.subr.mxu0 0.0
      %785 = vmatpush1.msra.mxu0 %v664
      %786 = vmatprep.subr.mxu0 0.0
      %787 = vmatpush1.msra.mxu0 %v665
      %788 = vmatprep.subr.mxu0 0.0
      %789 = vmatpush1.msra.mxu0 %v666
      %790 = vmatprep.subr.mxu0 0.0
      %791 = vmatpush1.msra.mxu0 %v667
      %792 = vmatprep.subr.mxu0 0.0
      %793 = vmatpush1.msra.mxu0 %v668
      %794 = vmatprep.subr.mxu0 0.0
      %795 = vmatpush1.msra.mxu0 %v669
      %796 = vmatprep.subr.mxu0 0.0
      %797 = vmatpush1.msra.mxu0 0.0
      %798 = vmatprep.subr.mxu0 0.0
      %799 = vmatpush1.msra.mxu0 0.0
      %800 = vmatprep.subr.mxu0 0.0
      %801 = vmatpush1.msra.mxu0 0.0
      %802 = vmatprep.subr.mxu0 0.0
      %803 = vmatpush1.msra.mxu0 0.0
      %804 = vmatprep.subr.mxu0 0.0
      %805 = vmatpush1.msra.mxu0 0.0
      %806 = vmatprep.subr.mxu0 0.0
      %807 = vmatpush1.msra.mxu0 0.0
      %808 = vmatprep.subr.mxu0 0.0
      %809 = vmatpush1.msra.mxu0 0.0
      %810 = vmatprep.subr.mxu0 0.0
      %811 = vmatpush1.msra.mxu0 0.0
      %812 = vmatprep.subr.mxu0 0.0
      %813 = vmatpush1.msra.mxu0 0.0
      %814 = vmatprep.subr.mxu0 0.0
      %815 = vmatpush1.msra.mxu0 0.0
      %816 = vmatprep.subr.mxu0 0.0
      %817 = vmatpush1.msra.mxu0 0.0
      %818 = vmatprep.subr.mxu0 0.0
      %819 = vmatpush1.msra.mxu0 0.0
      %820 = vmatprep.subr.mxu0 0.0
      %821 = vmatpush1.msra.mxu0 0.0
      %822 = vmatprep.subr.mxu0 0.0
      %823 = vmatpush1.msra.mxu0 0.0
      %824 = vmatprep.subr.mxu0 0.0
      %825 = vmatpush1.msra.mxu0 0.0
      %826 = vmatprep.subr.mxu0 0.0
      %827 = vmatpush1.msra.mxu0 0.0
      %828 = vmatprep.mubr.f32.mxu0 0.0
      %829 = vmatmul.mubr.f32.gmra.mrb[0].mxu0 %v652
      %v830 = vpop.f32.mrb[0].mxu0
      %v831 = vadd.f32 %v756, %v830
      %v832 = vpop.f32.mrb[0].mxu0
      %833 = vmatprep.mubr.f32.mxu0 0.0
      %834 = vmatmul.mubr.f32.gmra.mrb[0].mxu0 %v653
      %v835 = vpop.f32.mrb[0].mxu0
      %v836 = vadd.f32 %v761, %v835
      %v837 = vpop.f32.mrb[0].mxu0
      %838 = vdwg.mxu0
      %v839 = vld [vmem:[#allocation2 + $0x2] sm:$0xff]
      %v840 = vld [vmem:[#allocation2 + $0xa] sm:$0xff]
      %s841 = scalar_lea.vmem %s2, 256
      %v842 = vld [vmem:[%s841] sm:$0xff]
      %v843 = vld [vmem:[%s841 + $0x8] sm:$0xff]
      %v844 = vld [vmem:[%s841 + $0x10] sm:$0xff]
      %v845 = vld [vmem:[%s841 + $0x18] sm:$0xff]
      %v846 = vld [vmem:[%s841 + $0x20] sm:$0xff]
      %v847 = vld [vmem:[%s841 + $0x28] sm:$0xff]
      %v848 = vld [vmem:[%s841 + $0x30] sm:$0xff]
      %v849 = vld [vmem:[%s841 + $0x38] sm:$0xff]
      %v850 = vld [vmem:[%s841 + $0x40] sm:$0xff]
      %v851 = vld [vmem:[%s841 + $0x48] sm:$0xff]
      %v852 = vld [vmem:[%s841 + $0x50] sm:$0xff]
      %v853 = vld [vmem:[%s841 + $0x58] sm:$0xff]
      %v854 = vld [vmem:[%s841 + $0x60] sm:$0xff]
      %v855 = vld [vmem:[%s841 + $0x68] sm:$0xff]
      %v856 = vld [vmem:[%s841 + $0x70] sm:$0xff]
      %v857 = vld [vmem:[%s841 + $0x78] sm:$0xff]
      %858 = vmatprep.subr.mxu0 0.0
      %859 = vmatpush1.msra.mxu0 %v842
      %860 = vmatprep.subr.mxu0 0.0
      %861 = vmatpush1.msra.mxu0 %v843
      %862 = vmatprep.subr.mxu0 0.0
      %863 = vmatpush1.msra.mxu0 %v844
      %864 = vmatprep.subr.mxu0 0.0
      %865 = vmatpush1.msra.mxu0 %v845
      %866 = vmatprep.subr.mxu0 0.0
      %867 = vmatpush1.msra.mxu0 %v846
      %868 = vmatprep.subr.mxu0 0.0
      %869 = vmatpush1.msra.mxu0 %v847
      %870 = vmatprep.subr.mxu0 0.0
      %871 = vmatpush1.msra.mxu0 %v848
      %872 = vmatprep.subr.mxu0 0.0
      %873 = vmatpush1.msra.mxu0 %v849
      %874 = vmatprep.subr.mxu0 0.0
      %875 = vmatpush1.msra.mxu0 %v850
      %876 = vmatprep.subr.mxu0 0.0
      %877 = vmatpush1.msra.mxu0 %v851
      %878 = vmatprep.subr.mxu0 0.0
      %879 = vmatpush1.msra.mxu0 %v852
      %880 = vmatprep.subr.mxu0 0.0
      %881 = vmatpush1.msra.mxu0 %v853
      %882 = vmatprep.subr.mxu0 0.0
      %883 = vmatpush1.msra.mxu0 %v854
      %884 = vmatprep.subr.mxu0 0.0
      %885 = vmatpush1.msra.mxu0 %v855
      %886 = vmatprep.subr.mxu0 0.0
      %887 = vmatpush1.msra.mxu0 %v856
      %888 = vmatprep.subr.mxu0 0.0
      %889 = vmatpush1.msra.mxu0 %v857
      %890 = vmatprep.subr.mxu0 0.0
      %891 = vmatpush1.msra.mxu0 0.0
      %892 = vmatprep.subr.mxu0 0.0
      %893 = vmatpush1.msra.mxu0 0.0
      %894 = vmatprep.subr.mxu0 0.0
      %895 = vmatpush1.msra.mxu0 0.0
      %896 = vmatprep.subr.mxu0 0.0
      %897 = vmatpush1.msra.mxu0 0.0
      %898 = vmatprep.subr.mxu0 0.0
      %899 = vmatpush1.msra.mxu0 0.0
      %900 = vmatprep.subr.mxu0 0.0
      %901 = vmatpush1.msra.mxu0 0.0
      %902 = vmatprep.subr.mxu0 0.0
      %903 = vmatpush1.msra.mxu0 0.0
      %904 = vmatprep.subr.mxu0 0.0
      %905 = vmatpush1.msra.mxu0 0.0
      %906 = vmatprep.subr.mxu0 0.0
      %907 = vmatpush1.msra.mxu0 0.0
      %908 = vmatprep.subr.mxu0 0.0
      %909 = vmatpush1.msra.mxu0 0.0
      %910 = vmatprep.subr.mxu0 0.0
      %911 = vmatpush1.msra.mxu0 0.0
      %912 = vmatprep.subr.mxu0 0.0
      %913 = vmatpush1.msra.mxu0 0.0
      %914 = vmatprep.subr.mxu0 0.0
      %915 = vmatpush1.msra.mxu0 0.0
      %916 = vmatprep.subr.mxu0 0.0
      %917 = vmatpush1.msra.mxu0 0.0
      %918 = vmatprep.subr.mxu0 0.0
      %919 = vmatpush1.msra.mxu0 0.0
      %920 = vmatprep.subr.mxu0 0.0
      %921 = vmatpush1.msra.mxu0 0.0
      %922 = vmatprep.mubr.f32.mxu0 0.0
      %923 = vmatmul.mubr.f32.gmra.mrb[0].mxu0 %v839
      %v924 = vpop.f32.mrb[0].mxu0
      %v925 = vadd.f32 0.0, %v924
      %v926 = vpop.f32.mrb[0].mxu0
      %927 = vmatprep.mubr.f32.mxu0 0.0
      %928 = vmatmul.mubr.f32.gmra.mrb[0].mxu0 %v840
      %v929 = vpop.f32.mrb[0].mxu0
      %v930 = vadd.f32 0.0, %v929
      %v931 = vpop.f32.mrb[0].mxu0
      %932 = vdwg.mxu0
      %v933 = vadd.f32 %v831, %v925
      %v934 = vadd.f32 %v836, %v930
      %v935 = vadd.f32 %v933, %v934
      %v936 = vrot.slane %v935, 4
      %v937 = vadd.f32 %v935, %v936
      %v938 = vrot.slane %v937, 2
      %v939 = vadd.f32 %v937, %v938
      %v940 = vrot.slane %v939, 1
      %v941 = vadd.f32 %v939, %v940
      %942 = vmatprep.subr.mxu0 0.0
      %943 = vmatpush1.msra.mxu0 %v632
      %944 = vmatprep.subr.mxu0 0.0
      %945 = vmatpush1.msra.mxu0 %v633
      %946 = vmatprep.subr.mxu0 0.0
      %947 = vmatpush1.msra.mxu0 %v634
      %948 = vmatprep.subr.mxu0 0.0
      %949 = vmatpush1.msra.mxu0 %v635
      %950 = vmatprep.subr.mxu0 0.0
      %951 = vmatpush1.msra.mxu0 %v636
      %952 = vmatprep.subr.mxu0 0.0
      %953 = vmatpush1.msra.mxu0 %v637
      %954 = vmatprep.subr.mxu0 0.0
      %955 = vmatpush1.msra.mxu0 %v638
      %956 = vmatprep.subr.mxu0 0.0
      %957 = vmatpush1.msra.mxu0 %v639
      %958 = vmatprep.subr.mxu0 0.0
      %959 = vmatpush1.msra.mxu0 %v640
      %960 = vmatprep.subr.mxu0 0.0
      %961 = vmatpush1.msra.mxu0 %v641
      %962 = vmatprep.subr.mxu0 0.0
      %963 = vmatpush1.msra.mxu0 %v642
      %964 = vmatprep.subr.mxu0 0.0
      %965 = vmatpush1.msra.mxu0 %v643
      %966 = vmatprep.subr.mxu0 0.0
      %967 = vmatpush1.msra.mxu0 %v644
      %968 = vmatprep.subr.mxu0 0.0
      %969 = vmatpush1.msra.mxu0 %v645
      %970 = vmatprep.subr.mxu0 0.0
      %971 = vmatpush1.msra.mxu0 %v646
      %972 = vmatprep.subr.mxu0 0.0
      %973 = vmatpush1.msra.mxu0 %v647
      %974 = vmatprep.subr.mxu0 0.0
      %975 = vmatpush1.msra.mxu0 0.0
      %976 = vmatprep.subr.mxu0 0.0
      %977 = vmatpush1.msra.mxu0 0.0
      %978 = vmatprep.subr.mxu0 0.0
      %979 = vmatpush1.msra.mxu0 0.0
      %980 = vmatprep.subr.mxu0 0.0
      %981 = vmatpush1.msra.mxu0 0.0
      %982 = vmatprep.subr.mxu0 0.0
      %983 = vmatpush1.msra.mxu0 0.0
      %984 = vmatprep.subr.mxu0 0.0
      %985 = vmatpush1.msra.mxu0 0.0
      %986 = vmatprep.subr.mxu0 0.0
      %987 = vmatpush1.msra.mxu0 0.0
      %988 = vmatprep.subr.mxu0 0.0
      %989 = vmatpush1.msra.mxu0 0.0
      %990 = vmatprep.subr.mxu0 0.0
      %991 = vmatpush1.msra.mxu0 0.0
      %992 = vmatprep.subr.mxu0 0.0
      %993 = vmatpush1.msra.mxu0 0.0
      %994 = vmatprep.subr.mxu0 0.0
      %995 = vmatpush1.msra.mxu0 0.0
      %996 = vmatprep.subr.mxu0 0.0
      %997 = vmatpush1.msra.mxu0 0.0
      %998 = vmatprep.subr.mxu0 0.0
      %999 = vmatpush1.msra.mxu0 0.0
      %1000 = vmatprep.subr.mxu0 0.0
      %1001 = vmatpush1.msra.mxu0 0.0
      %1002 = vmatprep.subr.mxu0 0.0
      %1003 = vmatpush1.msra.mxu0 0.0
      %1004 = vmatprep.subr.mxu0 0.0
      %1005 = vmatpush1.msra.mxu0 0.0
      %1006 = vmatprep.mubr.f32.mxu0 0.0
      %1007 = vmatmul.mubr.f32.gmra.mrb[0].mxu0 %v941
      %v1008 = vpop.f32.mrb[0].mxu0
      %v1009 = vadd.f32 0.0, %v1008
      %v1010 = vpop.f32.mrb[0].mxu0
      %1011 = vdwg.mxu0
      %v1012 = vmul.f32 %v933, %v933
      %v1013 = vmul.f32 %v934, %v934
      %v1014 = vadd.f32 %v1012, %v1013
      %v1015 = vrot.slane %v1014, 4
      %v1016 = vadd.f32 %v1014, %v1015
      %v1017 = vrot.slane %v1016, 2
      %v1018 = vadd.f32 %v1016, %v1017
      %v1019 = vrot.slane %v1018, 1
      %v1020 = vadd.f32 %v1018, %v1019
      %1021 = vmatprep.subr.mxu0 0.0
      %1022 = vmatpush1.msra.mxu0 %v632
      %1023 = vmatprep.subr.mxu0 0.0
      %1024 = vmatpush1.msra.mxu0 %v633
      %1025 = vmatprep.subr.mxu0 0.0
      %1026 = vmatpush1.msra.mxu0 %v634
      %1027 = vmatprep.subr.mxu0 0.0
      %1028 = vmatpush1.msra.mxu0 %v635
      %1029 = vmatprep.subr.mxu0 0.0
      %1030 = vmatpush1.msra.mxu0 %v636
      %1031 = vmatprep.subr.mxu0 0.0
      %1032 = vmatpush1.msra.mxu0 %v637
      %1033 = vmatprep.subr.mxu0 0.0
      %1034 = vmatpush1.msra.mxu0 %v638
      %1035 = vmatprep.subr.mxu0 0.0
      %1036 = vmatpush1.msra.mxu0 %v639
      %1037 = vmatprep.subr.mxu0 0.0
      %1038 = vmatpush1.msra.mxu0 %v640
      %1039 = vmatprep.subr.mxu0 0.0
      %1040 = vmatpush1.msra.mxu0 %v641
      %1041 = vmatprep.subr.mxu0 0.0
      %1042 = vmatpush1.msra.mxu0 %v642
      %1043 = vmatprep.subr.mxu0 0.0
      %1044 = vmatpush1.msra.mxu0 %v643
      %1045 = vmatprep.subr.mxu0 0.0
      %1046 = vmatpush1.msra.mxu0 %v644
      %1047 = vmatprep.subr.mxu0 0.0
      %1048 = vmatpush1.msra.mxu0 %v645
      %1049 = vmatprep.subr.mxu0 0.0
      %1050 = vmatpush1.msra.mxu0 %v646
      %1051 = vmatprep.subr.mxu0 0.0
      %1052 = vmatpush1.msra.mxu0 %v647
      %1053 = vmatprep.subr.mxu0 0.0
      %1054 = vmatpush1.msra.mxu0 0.0
      %1055 = vmatprep.subr.mxu0 0.0
      %1056 = vmatpush1.msra.mxu0 0.0
      %1057 = vmatprep.subr.mxu0 0.0
      %1058 = vmatpush1.msra.mxu0 0.0
      %1059 = vmatprep.subr.mxu0 0.0
      %1060 = vmatpush1.msra.mxu0 0.0
      %1061 = vmatprep.subr.mxu0 0.0
      %1062 = vmatpush1.msra.mxu0 0.0
      %1063 = vmatprep.subr.mxu0 0.0
      %1064 = vmatpush1.msra.mxu0 0.0
      %1065 = vmatprep.subr.mxu0 0.0
      %1066 = vmatpush1.msra.mxu0 0.0
      %1067 = vmatprep.subr.mxu0 0.0
      %1068 = vmatpush1.msra.mxu0 0.0
      %1069 = vmatprep.subr.mxu0 0.0
      %1070 = vmatpush1.msra.mxu0 0.0
      %1071 = vmatprep.subr.mxu0 0.0
      %1072 = vmatpush1.msra.mxu0 0.0
      %1073 = vmatprep.subr.mxu0 0.0
      %1074 = vmatpush1.msra.mxu0 0.0
      %1075 = vmatprep.subr.mxu0 0.0
      %1076 = vmatpush1.msra.mxu0 0.0
      %1077 = vmatprep.subr.mxu0 0.0
      %1078 = vmatpush1.msra.mxu0 0.0
      %1079 = vmatprep.subr.mxu0 0.0
      %1080 = vmatpush1.msra.mxu0 0.0
      %1081 = vmatprep.subr.mxu0 0.0
      %1082 = vmatpush1.msra.mxu0 0.0
      %1083 = vmatprep.subr.mxu0 0.0
      %1084 = vmatpush1.msra.mxu0 0.0
      %1085 = vmatprep.mubr.f32.mxu0 0.0
      %1086 = vmatmul.mubr.f32.gmra.mrb[0].mxu0 %v1020
      %v1087 = vpop.f32.mrb[0].mxu0
      %v1088 = vadd.f32 0.0, %v1087
      %v1089 = vpop.f32.mrb[0].mxu0
      %1090 = vdwg.mxu0
      %v1091 = vmul.f32 %v1009, 0.00390625
      %v1092 = vmul.f32 %v1088, 0.00390625
      %v1093 = vmul.f32 %v1091, %v1091
      %v1094 = vsub.f32 %v1092, %v1093
      %v1095 = vadd.f32 %v1094, 1e-05
      %v1096 = vrsqrt.pop %v1095
      %v1097 = vld [vmem:[%s4] sm:$0x1]
      %v1098 = vmul.f32 %v1096, %v1097
      %v1099 = vld [vmem:[%s5] sm:$0x1]
      %v1100 = vmul.f32 %v1091, %v1098
      %v1101 = vsub.f32 %v1099, %v1100
      %v1102 = vlaneseq
      %v1103 = vshrl.u32 %v1102, 7
      %v1104 = vsub.s32 0, %v1103
      %v1105 = vrot.slane %v1098, %v1104
      %v1106 = vmul.f32 %v933, %v1105
      %v1107 = vmul.f32 %v934, %v1105
      %v1109 = vlaneseq
      %v1110 = vshrl.u32 %v1109, 7
      %v1111 = vsub.s32 0, %v1110
      %v1112 = vrot.slane %v1101, %v1111
      %v1114 = vadd.f32 %v1106, %v1112
      %v1115 = vadd.f32 %v1107, %v1112
      %v1116 = vld [vmem:[%s3] sm:$0xff]
      %v1117 = vld [vmem:[%s3 + $0x8] sm:$0xff]
      %v1118 = vld [vmem:[%s3 + $0x10] sm:$0xff]
      %v1119 = vld [vmem:[%s3 + $0x18] sm:$0xff]
      %v1120 = vld [vmem:[%s3 + $0x20] sm:$0xff]
      %v1121 = vld [vmem:[%s3 + $0x28] sm:$0xff]
      %v1122 = vld [vmem:[%s3 + $0x30] sm:$0xff]
      %v1123 = vld [vmem:[%s3 + $0x38] sm:$0xff]
      %v1124 = vld [vmem:[%s3 + $0x40] sm:$0xff]
      %v1125 = vld [vmem:[%s3 + $0x48] sm:$0xff]
      %v1126 = vld [vmem:[%s3 + $0x50] sm:$0xff]
      %v1127 = vld [vmem:[%s3 + $0x58] sm:$0xff]
      %v1128 = vld [vmem:[%s3 + $0x60] sm:$0xff]
      %v1129 = vld [vmem:[%s3 + $0x68] sm:$0xff]
      %v1130 = vld [vmem:[%s3 + $0x70] sm:$0xff]
      %v1131 = vld [vmem:[%s3 + $0x78] sm:$0xff]
      %1132 = vmatprep.subr.mxu0 0.0
      %1133 = vmatpush1.msra.mxu0 %v1116
      %1134 = vmatprep.subr.mxu0 0.0
      %1135 = vmatpush1.msra.mxu0 %v1117
      %1136 = vmatprep.subr.mxu0 0.0
      %1137 = vmatpush1.msra.mxu0 %v1118
      %1138 = vmatprep.subr.mxu0 0.0
      %1139 = vmatpush1.msra.mxu0 %v1119
      %1140 = vmatprep.subr.mxu0 0.0
      %1141 = vmatpush1.msra.mxu0 %v1120
      %1142 = vmatprep.subr.mxu0 0.0
      %1143 = vmatpush1.msra.mxu0 %v1121
      %1144 = vmatprep.subr.mxu0 0.0
      %1145 = vmatpush1.msra.mxu0 %v1122
      %1146 = vmatprep.subr.mxu0 0.0
      %1147 = vmatpush1.msra.mxu0 %v1123
      %1148 = vmatprep.subr.mxu0 0.0
      %1149 = vmatpush1.msra.mxu0 %v1124
      %1150 = vmatprep.subr.mxu0 0.0
      %1151 = vmatpush1.msra.mxu0 %v1125
      %1152 = vmatprep.subr.mxu0 0.0
      %1153 = vmatpush1.msra.mxu0 %v1126
      %1154 = vmatprep.subr.mxu0 0.0
      %1155 = vmatpush1.msra.mxu0 %v1127
      %1156 = vmatprep.subr.mxu0 0.0
      %1157 = vmatpush1.msra.mxu0 %v1128
      %1158 = vmatprep.subr.mxu0 0.0
      %1159 = vmatpush1.msra.mxu0 %v1129
      %1160 = vmatprep.subr.mxu0 0.0
      %1161 = vmatpush1.msra.mxu0 %v1130
      %1162 = vmatprep.subr.mxu0 0.0
      %1163 = vmatpush1.msra.mxu0 %v1131
      %1164 = vmatprep.subr.mxu0 0.0
      %1165 = vmatpush1.msra.mxu0 0.0
      %1166 = vmatprep.subr.mxu0 0.0
      %1167 = vmatpush1.msra.mxu0 0.0
      %1168 = vmatprep.subr.mxu0 0.0
      %1169 = vmatpush1.msra.mxu0 0.0
      %1170 = vmatprep.subr.mxu0 0.0
      %1171 = vmatpush1.msra.mxu0 0.0
      %1172 = vmatprep.subr.mxu0 0.0
      %1173 = vmatpush1.msra.mxu0 0.0
      %1174 = vmatprep.subr.mxu0 0.0
      %1175 = vmatpush1.msra.mxu0 0.0
      %1176 = vmatprep.subr.mxu0 0.0
      %1177 = vmatpush1.msra.mxu0 0.0
      %1178 = vmatprep.subr.mxu0 0.0
      %1179 = vmatpush1.msra.mxu0 0.0
      %1180 = vmatprep.subr.mxu0 0.0
      %1181 = vmatpush1.msra.mxu0 0.0
      %1182 = vmatprep.subr.mxu0 0.0
      %1183 = vmatpush1.msra.mxu0 0.0
      %1184 = vmatprep.subr.mxu0 0.0
      %1185 = vmatpush1.msra.mxu0 0.0
      %1186 = vmatprep.subr.mxu0 0.0
      %1187 = vmatpush1.msra.mxu0 0.0
      %1188 = vmatprep.subr.mxu0 0.0
      %1189 = vmatpush1.msra.mxu0 0.0
      %1190 = vmatprep.subr.mxu0 0.0
      %1191 = vmatpush1.msra.mxu0 0.0
      %1192 = vmatprep.subr.mxu0 0.0
      %1193 = vmatpush1.msra.mxu0 0.0
      %1194 = vmatprep.subr.mxu0 0.0
      %1195 = vmatpush1.msra.mxu0 0.0
      %1196 = vmatprep.mubr.f32.mxu0 0.0
      %1197 = vmatmul.mubr.f32.gmra.mrb[0].mxu0 %v1114
      %v1198 = vpop.f32.mrb[0].mxu0
      %v1199 = vadd.f32 0.0, %v1198
      %v1200 = vpop.f32.mrb[0].mxu0
      %1201 = vmatprep.mubr.f32.mxu0 0.0
      %1202 = vmatmul.mubr.f32.gmra.mrb[0].mxu0 %v1115
      %v1203 = vpop.f32.mrb[0].mxu0
      %v1204 = vadd.f32 0.0, %v1203
      %v1205 = vpop.f32.mrb[0].mxu0
      %1206 = vdwg.mxu0
      %v1207 = vadd.f32 %v1199, %v1204
      %v1208 = vrot.slane %v1207, 4
      %v1209 = vadd.f32 %v1207, %v1208
      %v1210 = vrot.slane %v1209, 2
      %v1211 = vadd.f32 %v1209, %v1210
      %v1212 = vrot.slane %v1211, 1
      %v1213 = vadd.f32 %v1211, %v1212
      %1214 = vmatprep.subr.mxu0 0.0
      %1215 = vmatpush1.msra.mxu0 %v632
      %1216 = vmatprep.subr.mxu0 0.0
      %1217 = vmatpush1.msra.mxu0 %v633
      %1218 = vmatprep.subr.mxu0 0.0
      %1219 = vmatpush1.msra.mxu0 %v634
      %1220 = vmatprep.subr.mxu0 0.0
      %1221 = vmatpush1.msra.mxu0 %v635
      %1222 = vmatprep.subr.mxu0 0.0
      %1223 = vmatpush1.msra.mxu0 %v636
      %1224 = vmatprep.subr.mxu0 0.0
      %1225 = vmatpush1.msra.mxu0 %v637
      %1226 = vmatprep.subr.mxu0 0.0
      %1227 = vmatpush1.msra.mxu0 %v638
      %1228 = vmatprep.subr.mxu0 0.0
      %1229 = vmatpush1.msra.mxu0 %v639
      %1230 = vmatprep.subr.mxu0 0.0
      %1231 = vmatpush1.msra.mxu0 %v640
      %1232 = vmatprep.subr.mxu0 0.0
      %1233 = vmatpush1.msra.mxu0 %v641
      %1234 = vmatprep.subr.mxu0 0.0
      %1235 = vmatpush1.msra.mxu0 %v642
      %1236 = vmatprep.subr.mxu0 0.0
      %1237 = vmatpush1.msra.mxu0 %v643
      %1238 = vmatprep.subr.mxu0 0.0
      %1239 = vmatpush1.msra.mxu0 %v644
      %1240 = vmatprep.subr.mxu0 0.0
      %1241 = vmatpush1.msra.mxu0 %v645
      %1242 = vmatprep.subr.mxu0 0.0
      %1243 = vmatpush1.msra.mxu0 %v646
      %1244 = vmatprep.subr.mxu0 0.0
      %1245 = vmatpush1.msra.mxu0 %v647
      %1246 = vmatprep.subr.mxu0 0.0
      %1247 = vmatpush1.msra.mxu0 0.0
      %1248 = vmatprep.subr.mxu0 0.0
      %1249 = vmatpush1.msra.mxu0 0.0
      %1250 = vmatprep.subr.mxu0 0.0
      %1251 = vmatpush1.msra.mxu0 0.0
      %1252 = vmatprep.subr.mxu0 0.0
      %1253 = vmatpush1.msra.mxu0 0.0
      %1254 = vmatprep.subr.mxu0 0.0
      %1255 = vmatpush1.msra.mxu0 0.0
      %1256 = vmatprep.subr.mxu0 0.0
      %1257 = vmatpush1.msra.mxu0 0.0
      %1258 = vmatprep.subr.mxu0 0.0
      %1259 = vmatpush1.msra.mxu0 0.0
      %1260 = vmatprep.subr.mxu0 0.0
      %1261 = vmatpush1.msra.mxu0 0.0
      %1262 = vmatprep.subr.mxu0 0.0
      %1263 = vmatpush1.msra.mxu0 0.0
      %1264 = vmatprep.subr.mxu0 0.0
      %1265 = vmatpush1.msra.mxu0 0.0
      %1266 = vmatprep.subr.mxu0 0.0
      %1267 = vmatpush1.msra.mxu0 0.0
      %1268 = vmatprep.subr.mxu0 0.0
      %1269 = vmatpush1.msra.mxu0 0.0
      %1270 = vmatprep.subr.mxu0 0.0
      %1271 = vmatpush1.msra.mxu0 0.0
      %1272 = vmatprep.subr.mxu0 0.0
      %1273 = vmatpush1.msra.mxu0 0.0
      %1274 = vmatprep.subr.mxu0 0.0
      %1275 = vmatpush1.msra.mxu0 0.0
      %1276 = vmatprep.subr.mxu0 0.0
      %1277 = vmatpush1.msra.mxu0 0.0
      %1278 = vmatprep.mubr.f32.mxu0 0.0
      %1279 = vmatmul.mubr.f32.gmra.mrb[0].mxu0 %v1213
      %v1280 = vpop.f32.mrb[0].mxu0
      %v1281 = vadd.f32 0.0, %v1280
      %v1282 = vpop.f32.mrb[0].mxu0
      %1283 = vdwg.mxu0
      %v1284 = vmul.f32 %v1199, %v1199
      %v1285 = vmul.f32 %v1204, %v1204
      %v1286 = vadd.f32 %v1284, %v1285
      %v1287 = vrot.slane %v1286, 4
      %v1288 = vadd.f32 %v1286, %v1287
      %v1289 = vrot.slane %v1288, 2
      %v1290 = vadd.f32 %v1288, %v1289
      %v1291 = vrot.slane %v1290, 1
      %v1292 = vadd.f32 %v1290, %v1291
      %1293 = vmatprep.subr.mxu0 0.0
      %1294 = vmatpush1.msra.mxu0 %v632
      %1295 = vmatprep.subr.mxu0 0.0
      %1296 = vmatpush1.msra.mxu0 %v633
      %1297 = vmatprep.subr.mxu0 0.0
      %1298 = vmatpush1.msra.mxu0 %v634
      %1299 = vmatprep.subr.mxu0 0.0
      %1300 = vmatpush1.msra.mxu0 %v635
      %1301 = vmatprep.subr.mxu0 0.0
      %1302 = vmatpush1.msra.mxu0 %v636
      %1303 = vmatprep.subr.mxu0 0.0
      %1304 = vmatpush1.msra.mxu0 %v637
      %1305 = vmatprep.subr.mxu0 0.0
      %1306 = vmatpush1.msra.mxu0 %v638
      %1307 = vmatprep.subr.mxu0 0.0
      %1308 = vmatpush1.msra.mxu0 %v639
      %1309 = vmatprep.subr.mxu0 0.0
      %1310 = vmatpush1.msra.mxu0 %v640
      %1311 = vmatprep.subr.mxu0 0.0
      %1312 = vmatpush1.msra.mxu0 %v641
      %1313 = vmatprep.subr.mxu0 0.0
      %1314 = vmatpush1.msra.mxu0 %v642
      %1315 = vmatprep.subr.mxu0 0.0
      %1316 = vmatpush1.msra.mxu0 %v643
      %1317 = vmatprep.subr.mxu0 0.0
      %1318 = vmatpush1.msra.mxu0 %v644
      %1319 = vmatprep.subr.mxu0 0.0
      %1320 = vmatpush1.msra.mxu0 %v645
      %1321 = vmatprep.subr.mxu0 0.0
      %1322 = vmatpush1.msra.mxu0 %v646
      %1323 = vmatprep.subr.mxu0 0.0
      %1324 = vmatpush1.msra.mxu0 %v647
      %1325 = vmatprep.subr.mxu0 0.0
      %1326 = vmatpush1.msra.mxu0 0.0
      %1327 = vmatprep.subr.mxu0 0.0
      %1328 = vmatpush1.msra.mxu0 0.0
      %1329 = vmatprep.subr.mxu0 0.0
      %1330 = vmatpush1.msra.mxu0 0.0
      %1331 = vmatprep.subr.mxu0 0.0
      %1332 = vmatpush1.msra.mxu0 0.0
      %1333 = vmatprep.subr.mxu0 0.0
      %1334 = vmatpush1.msra.mxu0 0.0
      %1335 = vmatprep.subr.mxu0 0.0
      %1336 = vmatpush1.msra.mxu0 0.0
      %1337 = vmatprep.subr.mxu0 0.0
      %1338 = vmatpush1.msra.mxu0 0.0
      %1339 = vmatprep.subr.mxu0 0.0
      %1340 = vmatpush1.msra.mxu0 0.0
      %1341 = vmatprep.subr.mxu0 0.0
      %1342 = vmatpush1.msra.mxu0 0.0
      %1343 = vmatprep.subr.mxu0 0.0
      %1344 = vmatpush1.msra.mxu0 0.0
      %1345 = vmatprep.subr.mxu0 0.0
      %1346 = vmatpush1.msra.mxu0 0.0
      %1347 = vmatprep.subr.mxu0 0.0
      %1348 = vmatpush1.msra.mxu0 0.0
      %1349 = vmatprep.subr.mxu0 0.0
      %1350 = vmatpush1.msra.mxu0 0.0
      %1351 = vmatprep.subr.mxu0 0.0
      %1352 = vmatpush1.msra.mxu0 0.0
      %1353 = vmatprep.subr.mxu0 0.0
      %1354 = vmatpush1.msra.mxu0 0.0
      %1355 = vmatprep.subr.mxu0 0.0
      %1356 = vmatpush1.msra.mxu0 0.0
      %1357 = vmatprep.mubr.f32.mxu0 0.0
      %1358 = vmatmul.mubr.f32.gmra.mrb[0].mxu0 %v1292
      %v1359 = vpop.f32.mrb[0].mxu0
      %v1360 = vadd.f32 0.0, %v1359
      %v1361 = vpop.f32.mrb[0].mxu0
      %1362 = vdwg.mxu0
      %v1363 = vmul.f32 %v1281, 0.00390625
      %v1364 = vmul.f32 %v1360, 0.00390625
      %v1365 = vmul.f32 %v1363, %v1363
      %v1366 = vsub.f32 %v1364, %v1365
      %v1367 = vadd.f32 %v1366, 1e-05
      %v1368 = vrsqrt.pop %v1367
      %v1369 = vld [vmem:[%s6] sm:$0x1]
      %v1370 = vmul.f32 %v1368, %v1369
      %v1371 = vld [vmem:[%s7] sm:$0x1]
      %v1372 = vmul.f32 %v1363, %v1370
      %v1373 = vsub.f32 %v1371, %v1372
      %v1374 = vlaneseq
      %v1375 = vshrl.u32 %v1374, 7
      %v1376 = vsub.s32 0, %v1375
      %v1377 = vrot.slane %v1370, %v1376
      %v1378 = vmul.f32 %v1199, %v1377
      %v1379 = vmul.f32 %v1204, %v1377
      %v1381 = vlaneseq
      %v1382 = vshrl.u32 %v1381, 7
      %v1383 = vsub.s32 0, %v1382
      %v1384 = vrot.slane %v1373, %v1383
      %v1386 = vadd.f32 %v1378, %v1384
      %v1387 = vadd.f32 %v1379, %v1384
      %v1388 = vmax.f32 %v1386, 0.0
      %v1389 = vmax.f32 %v1387, 0.0
      %1390 = vst [vmem:[#allocation2 + $0x1] sm:$0xff] %v1388
      %1391 = vst [vmem:[#allocation2 + $0x9] sm:$0xff] %v1389
      %v1392 = vld [vmem:[#allocation2] sm:$0xff]
      %v1393 = vld [vmem:[#allocation2 + $0x8] sm:$0xff]
      %v1394 = vld [vmem:[%s8] sm:$0xff]
      %v1395 = vld [vmem:[%s8 + $0x8] sm:$0xff]
      %v1396 = vld [vmem:[%s8 + $0x10] sm:$0xff]
      %v1397 = vld [vmem:[%s8 + $0x18] sm:$0xff]
      %v1398 = vld [vmem:[%s8 + $0x20] sm:$0xff]
      %v1399 = vld [vmem:[%s8 + $0x28] sm:$0xff]
      %v1400 = vld [vmem:[%s8 + $0x30] sm:$0xff]
      %v1401 = vld [vmem:[%s8 + $0x38] sm:$0xff]
      %v1402 = vld [vmem:[%s8 + $0x40] sm:$0xff]
      %v1403 = vld [vmem:[%s8 + $0x48] sm:$0xff]
      %v1404 = vld [vmem:[%s8 + $0x50] sm:$0xff]
      %v1405 = vld [vmem:[%s8 + $0x58] sm:$0xff]
      %v1406 = vld [vmem:[%s8 + $0x60] sm:$0xff]
      %v1407 = vld [vmem:[%s8 + $0x68] sm:$0xff]
      %v1408 = vld [vmem:[%s8 + $0x70] sm:$0xff]
      %v1409 = vld [vmem:[%s8 + $0x78] sm:$0xff]
      %v1410 = vld [vmem:[#allocation2 + $0x1] sm:$0xff]
      %v1411 = vld [vmem:[#allocation2 + $0x9] sm:$0xff]
      %s1412 = scalar_lea.vmem %s8, 128
      %v1413 = vld [vmem:[%s1412] sm:$0xff]
      %v1414 = vld [vmem:[%s1412 + $0x8] sm:$0xff]
      %v1415 = vld [vmem:[%s1412 + $0x10] sm:$0xff]
      %v1416 = vld [vmem:[%s1412 + $0x18] sm:$0xff]
      %v1417 = vld [vmem:[%s1412 + $0x20] sm:$0xff]
      %v1418 = vld [vmem:[%s1412 + $0x28] sm:$0xff]
      %v1419 = vld [vmem:[%s1412 + $0x30] sm:$0xff]
      %v1420 = vld [vmem:[%s1412 + $0x38] sm:$0xff]
      %v1421 = vld [vmem:[%s1412 + $0x40] sm:$0xff]
      %v1422 = vld [vmem:[%s1412 + $0x48] sm:$0xff]
      %v1423 = vld [vmem:[%s1412 + $0x50] sm:$0xff]
      %v1424 = vld [vmem:[%s1412 + $0x58] sm:$0xff]
      %v1425 = vld [vmem:[%s1412 + $0x60] sm:$0xff]
      %v1426 = vld [vmem:[%s1412 + $0x68] sm:$0xff]
      %v1427 = vld [vmem:[%s1412 + $0x70] sm:$0xff]
      %v1428 = vld [vmem:[%s1412 + $0x78] sm:$0xff]
      %1429 = vmatprep.subr.mxu0 0.0
      %1430 = vmatpush1.msra.mxu0 %v1413
      %1431 = vmatprep.subr.mxu0 0.0
      %1432 = vmatpush1.msra.mxu0 %v1414
      %1433 = vmatprep.subr.mxu0 0.0
      %1434 = vmatpush1.msra.mxu0 %v1415
      %1435 = vmatprep.subr.mxu0 0.0
      %1436 = vmatpush1.msra.mxu0 %v1416
      %1437 = vmatprep.subr.mxu0 0.0
      %1438 = vmatpush1.msra.mxu0 %v1417
      %1439 = vmatprep.subr.mxu0 0.0
      %1440 = vmatpush1.msra.mxu0 %v1418
      %1441 = vmatprep.subr.mxu0 0.0
      %1442 = vmatpush1.msra.mxu0 %v1419
      %1443 = vmatprep.subr.mxu0 0.0
      %1444 = vmatpush1.msra.mxu0 %v1420
      %1445 = vmatprep.subr.mxu0 0.0
      %1446 = vmatpush1.msra.mxu0 %v1421
      %1447 = vmatprep.subr.mxu0 0.0
      %1448 = vmatpush1.msra.mxu0 %v1422
      %1449 = vmatprep.subr.mxu0 0.0
      %1450 = vmatpush1.msra.mxu0 %v1423
      %1451 = vmatprep.subr.mxu0 0.0
      %1452 = vmatpush1.msra.mxu0 %v1424
      %1453 = vmatprep.subr.mxu0 0.0
      %1454 = vmatpush1.msra.mxu0 %v1425
      %1455 = vmatprep.subr.mxu0 0.0
      %1456 = vmatpush1.msra.mxu0 %v1426
      %1457 = vmatprep.subr.mxu0 0.0
      %1458 = vmatpush1.msra.mxu0 %v1427
      %1459 = vmatprep.subr.mxu0 0.0
      %1460 = vmatpush1.msra.mxu0 %v1428
      %1461 = vmatprep.subr.mxu0 0.0
      %1462 = vmatpush1.msra.mxu0 0.0
      %1463 = vmatprep.subr.mxu0 0.0
      %1464 = vmatpush1.msra.mxu0 0.0
      %1465 = vmatprep.subr.mxu0 0.0
      %1466 = vmatpush1.msra.mxu0 0.0
      %1467 = vmatprep.subr.mxu0 0.0
      %1468 = vmatpush1.msra.mxu0 0.0
      %1469 = vmatprep.subr.mxu0 0.0
      %1470 = vmatpush1.msra.mxu0 0.0
      %1471 = vmatprep.subr.mxu0 0.0
      %1472 = vmatpush1.msra.mxu0 0.0
      %1473 = vmatprep.subr.mxu0 0.0
      %1474 = vmatpush1.msra.mxu0 0.0
      %1475 = vmatprep.subr.mxu0 0.0
      %1476 = vmatpush1.msra.mxu0 0.0
      %1477 = vmatprep.subr.mxu0 0.0
      %1478 = vmatpush1.msra.mxu0 0.0
      %1479 = vmatprep.subr.mxu0 0.0
      %1480 = vmatpush1.msra.mxu0 0.0
      %1481 = vmatprep.subr.mxu0 0.0
      %1482 = vmatpush1.msra.mxu0 0.0
      %1483 = vmatprep.subr.mxu0 0.0
      %1484 = vmatpush1.msra.mxu0 0.0
      %1485 = vmatprep.subr.mxu0 0.0
      %1486 = vmatpush1.msra.mxu0 0.0
      %1487 = vmatprep.subr.mxu0 0.0
      %1488 = vmatpush1.msra.mxu0 0.0
      %1489 = vmatprep.subr.mxu0 0.0
      %1490 = vmatpush1.msra.mxu0 0.0
      %1491 = vmatprep.subr.mxu0 0.0
      %1492 = vmatpush1.msra.mxu0 0.0
      %1493 = vmatprep.mubr.f32.mxu0 0.0
      %1494 = vmatmul.mubr.f32.gmra.mrb[0].mxu0 %v1410
      %v1495 = vpop.f32.mrb[0].mxu0
      %v1496 = vadd.f32 0.0, %v1495
      %v1497 = vpop.f32.mrb[0].mxu0
      %1498 = vmatprep.mubr.f32.mxu0 0.0
      %1499 = vmatmul.mubr.f32.gmra.mrb[0].mxu0 %v1411
      %v1500 = vpop.f32.mrb[0].mxu0
      %v1501 = vadd.f32 0.0, %v1500
      %v1502 = vpop.f32.mrb[0].mxu0
      %1503 = vdwg.mxu0
      %1504 = vmatprep.subr.mxu0 0.0
      %1505 = vmatpush1.msra.mxu0 %v1394
      %1506 = vmatprep.subr.mxu0 0.0
      %1507 = vmatpush1.msra.mxu0 %v1395
      %1508 = vmatprep.subr.mxu0 0.0
      %1509 = vmatpush1.msra.mxu0 %v1396
      %1510 = vmatprep.subr.mxu0 0.0
      %1511 = vmatpush1.msra.mxu0 %v1397
      %1512 = vmatprep.subr.mxu0 0.0
      %1513 = vmatpush1.msra.mxu0 %v1398
      %1514 = vmatprep.subr.mxu0 0.0
      %1515 = vmatpush1.msra.mxu0 %v1399
      %1516 = vmatprep.subr.mxu0 0.0
      %1517 = vmatpush1.msra.mxu0 %v1400
      %1518 = vmatprep.subr.mxu0 0.0
      %1519 = vmatpush1.msra.mxu0 %v1401
      %1520 = vmatprep.subr.mxu0 0.0
      %1521 = vmatpush1.msra.mxu0 %v1402
      %1522 = vmatprep.subr.mxu0 0.0
      %1523 = vmatpush1.msra.mxu0 %v1403
      %1524 = vmatprep.subr.mxu0 0.0
      %1525 = vmatpush1.msra.mxu0 %v1404
      %1526 = vmatprep.subr.mxu0 0.0
      %1527 = vmatpush1.msra.mxu0 %v1405
      %1528 = vmatprep.subr.mxu0 0.0
      %1529 = vmatpush1.msra.mxu0 %v1406
      %1530 = vmatprep.subr.mxu0 0.0
      %1531 = vmatpush1.msra.mxu0 %v1407
      %1532 = vmatprep.subr.mxu0 0.0
      %1533 = vmatpush1.msra.mxu0 %v1408
      %1534 = vmatprep.subr.mxu0 0.0
      %1535 = vmatpush1.msra.mxu0 %v1409
      %1536 = vmatprep.subr.mxu0 0.0
      %1537 = vmatpush1.msra.mxu0 0.0
      %1538 = vmatprep.subr.mxu0 0.0
      %1539 = vmatpush1.msra.mxu0 0.0
      %1540 = vmatprep.subr.mxu0 0.0
      %1541 = vmatpush1.msra.mxu0 0.0
      %1542 = vmatprep.subr.mxu0 0.0
      %1543 = vmatpush1.msra.mxu0 0.0
      %1544 = vmatprep.subr.mxu0 0.0
      %1545 = vmatpush1.msra.mxu0 0.0
      %1546 = vmatprep.subr.mxu0 0.0
      %1547 = vmatpush1.msra.mxu0 0.0
      %1548 = vmatprep.subr.mxu0 0.0
      %1549 = vmatpush1.msra.mxu0 0.0
      %1550 = vmatprep.subr.mxu0 0.0
      %1551 = vmatpush1.msra.mxu0 0.0
      %1552 = vmatprep.subr.mxu0 0.0
      %1553 = vmatpush1.msra.mxu0 0.0
      %1554 = vmatprep.subr.mxu0 0.0
      %1555 = vmatpush1.msra.mxu0 0.0
      %1556 = vmatprep.subr.mxu0 0.0
      %1557 = vmatpush1.msra.mxu0 0.0
      %1558 = vmatprep.subr.mxu0 0.0
      %1559 = vmatpush1.msra.mxu0 0.0
      %1560 = vmatprep.subr.mxu0 0.0
      %1561 = vmatpush1.msra.mxu0 0.0
      %1562 = vmatprep.subr.mxu0 0.0
      %1563 = vmatpush1.msra.mxu0 0.0
      %1564 = vmatprep.subr.mxu0 0.0
      %1565 = vmatpush1.msra.mxu0 0.0
      %1566 = vmatprep.subr.mxu0 0.0
      %1567 = vmatpush1.msra.mxu0 0.0
      %1568 = vmatprep.mubr.f32.mxu0 0.0
      %1569 = vmatmul.mubr.f32.gmra.mrb[0].mxu0 %v1392
      %v1570 = vpop.f32.mrb[0].mxu0
      %v1571 = vadd.f32 %v1496, %v1570
      %v1572 = vpop.f32.mrb[0].mxu0
      %1573 = vmatprep.mubr.f32.mxu0 0.0
      %1574 = vmatmul.mubr.f32.gmra.mrb[0].mxu0 %v1393
      %v1575 = vpop.f32.mrb[0].mxu0
      %v1576 = vadd.f32 %v1501, %v1575
      %v1577 = vpop.f32.mrb[0].mxu0
      %1578 = vdwg.mxu0
      %v1579 = vld [vmem:[#allocation2 + $0x2] sm:$0xff]
      %v1580 = vld [vmem:[#allocation2 + $0xa] sm:$0xff]
      %s1581 = scalar_lea.vmem %s8, 256
      %v1582 = vld [vmem:[%s1581] sm:$0xff]
      %v1583 = vld [vmem:[%s1581 + $0x8] sm:$0xff]
      %v1584 = vld [vmem:[%s1581 + $0x10] sm:$0xff]
      %v1585 = vld [vmem:[%s1581 + $0x18] sm:$0xff]
      %v1586 = vld [vmem:[%s1581 + $0x20] sm:$0xff]
      %v1587 = vld [vmem:[%s1581 + $0x28] sm:$0xff]
      %v1588 = vld [vmem:[%s1581 + $0x30] sm:$0xff]
      %v1589 = vld [vmem:[%s1581 + $0x38] sm:$0xff]
      %v1590 = vld [vmem:[%s1581 + $0x40] sm:$0xff]
      %v1591 = vld [vmem:[%s1581 + $0x48] sm:$0xff]
      %v1592 = vld [vmem:[%s1581 + $0x50] sm:$0xff]
      %v1593 = vld [vmem:[%s1581 + $0x58] sm:$0xff]
      %v1594 = vld [vmem:[%s1581 + $0x60] sm:$0xff]
      %v1595 = vld [vmem:[%s1581 + $0x68] sm:$0xff]
      %v1596 = vld [vmem:[%s1581 + $0x70] sm:$0xff]
      %v1597 = vld [vmem:[%s1581 + $0x78] sm:$0xff]
      %1598 = vmatprep.subr.mxu0 0.0
      %1599 = vmatpush1.msra.mxu0 %v1582
      %1600 = vmatprep.subr.mxu0 0.0
      %1601 = vmatpush1.msra.mxu0 %v1583
      %1602 = vmatprep.subr.mxu0 0.0
      %1603 = vmatpush1.msra.mxu0 %v1584
      %1604 = vmatprep.subr.mxu0 0.0
      %1605 = vmatpush1.msra.mxu0 %v1585
      %1606 = vmatprep.subr.mxu0 0.0
      %1607 = vmatpush1.msra.mxu0 %v1586
      %1608 = vmatprep.subr.mxu0 0.0
      %1609 = vmatpush1.msra.mxu0 %v1587
      %1610 = vmatprep.subr.mxu0 0.0
      %1611 = vmatpush1.msra.mxu0 %v1588
      %1612 = vmatprep.subr.mxu0 0.0
      %1613 = vmatpush1.msra.mxu0 %v1589
      %1614 = vmatprep.subr.mxu0 0.0
      %1615 = vmatpush1.msra.mxu0 %v1590
      %1616 = vmatprep.subr.mxu0 0.0
      %1617 = vmatpush1.msra.mxu0 %v1591
      %1618 = vmatprep.subr.mxu0 0.0
      %1619 = vmatpush1.msra.mxu0 %v1592
      %1620 = vmatprep.subr.mxu0 0.0
      %1621 = vmatpush1.msra.mxu0 %v1593
      %1622 = vmatprep.subr.mxu0 0.0
      %1623 = vmatpush1.msra.mxu0 %v1594
      %1624 = vmatprep.subr.mxu0 0.0
      %1625 = vmatpush1.msra.mxu0 %v1595
      %1626 = vmatprep.subr.mxu0 0.0
      %1627 = vmatpush1.msra.mxu0 %v1596
      %1628 = vmatprep.subr.mxu0 0.0
      %1629 = vmatpush1.msra.mxu0 %v1597
      %1630 = vmatprep.subr.mxu0 0.0
      %1631 = vmatpush1.msra.mxu0 0.0
      %1632 = vmatprep.subr.mxu0 0.0
      %1633 = vmatpush1.msra.mxu0 0.0
      %1634 = vmatprep.subr.mxu0 0.0
      %1635 = vmatpush1.msra.mxu0 0.0
      %1636 = vmatprep.subr.mxu0 0.0
      %1637 = vmatpush1.msra.mxu0 0.0
      %1638 = vmatprep.subr.mxu0 0.0
      %1639 = vmatpush1.msra.mxu0 0.0
      %1640 = vmatprep.subr.mxu0 0.0
      %1641 = vmatpush1.msra.mxu0 0.0
      %1642 = vmatprep.subr.mxu0 0.0
      %1643 = vmatpush1.msra.mxu0 0.0
      %1644 = vmatprep.subr.mxu0 0.0
      %1645 = vmatpush1.msra.mxu0 0.0
      %1646 = vmatprep.subr.mxu0 0.0
      %1647 = vmatpush1.msra.mxu0 0.0
      %1648 = vmatprep.subr.mxu0 0.0
      %1649 = vmatpush1.msra.mxu0 0.0
      %1650 = vmatprep.subr.mxu0 0.0
      %1651 = vmatpush1.msra.mxu0 0.0
      %1652 = vmatprep.subr.mxu0 0.0
      %1653 = vmatpush1.msra.mxu0 0.0
      %1654 = vmatprep.subr.mxu0 0.0
      %1655 = vmatpush1.msra.mxu0 0.0
      %1656 = vmatprep.subr.mxu0 0.0
      %1657 = vmatpush1.msra.mxu0 0.0
      %1658 = vmatprep.subr.mxu0 0.0
      %1659 = vmatpush1.msra.mxu0 0.0
      %1660 = vmatprep.subr.mxu0 0.0
      %1661 = vmatpush1.msra.mxu0 0.0
      %1662 = vmatprep.mubr.f32.mxu0 0.0
      %1663 = vmatmul.mubr.f32.gmra.mrb[0].mxu0 %v1579
      %v1664 = vpop.f32.mrb[0].mxu0
      %v1665 = vadd.f32 0.0, %v1664
      %v1666 = vpop.f32.mrb[0].mxu0
      %1667 = vmatprep.mubr.f32.mxu0 0.0
      %1668 = vmatmul.mubr.f32.gmra.mrb[0].mxu0 %v1580
      %v1669 = vpop.f32.mrb[0].mxu0
      %v1670 = vadd.f32 0.0, %v1669
      %v1671 = vpop.f32.mrb[0].mxu0
      %1672 = vdwg.mxu0
      %v1673 = vadd.f32 %v1571, %v1665
      %v1674 = vadd.f32 %v1576, %v1670
      %v1675 = vadd.f32 %v1673, %v1674
      %v1676 = vrot.slane %v1675, 4
      %v1677 = vadd.f32 %v1675, %v1676
      %v1678 = vrot.slane %v1677, 2
      %v1679 = vadd.f32 %v1677, %v1678
      %v1680 = vrot.slane %v1679, 1
      %v1681 = vadd.f32 %v1679, %v1680
      %1682 = vmatprep.subr.mxu0 0.0
      %1683 = vmatpush1.msra.mxu0 %v632
      %1684 = vmatprep.subr.mxu0 0.0
      %1685 = vmatpush1.msra.mxu0 %v633
      %1686 = vmatprep.subr.mxu0 0.0
      %1687 = vmatpush1.msra.mxu0 %v634
      %1688 = vmatprep.subr.mxu0 0.0
      %1689 = vmatpush1.msra.mxu0 %v635
      %1690 = vmatprep.subr.mxu0 0.0
      %1691 = vmatpush1.msra.mxu0 %v636
      %1692 = vmatprep.subr.mxu0 0.0
      %1693 = vmatpush1.msra.mxu0 %v637
      %1694 = vmatprep.subr.mxu0 0.0
      %1695 = vmatpush1.msra.mxu0 %v638
      %1696 = vmatprep.subr.mxu0 0.0
      %1697 = vmatpush1.msra.mxu0 %v639
      %1698 = vmatprep.subr.mxu0 0.0
      %1699 = vmatpush1.msra.mxu0 %v640
      %1700 = vmatprep.subr.mxu0 0.0
      %1701 = vmatpush1.msra.mxu0 %v641
      %1702 = vmatprep.subr.mxu0 0.0
      %1703 = vmatpush1.msra.mxu0 %v642
      %1704 = vmatprep.subr.mxu0 0.0
      %1705 = vmatpush1.msra.mxu0 %v643
      %1706 = vmatprep.subr.mxu0 0.0
      %1707 = vmatpush1.msra.mxu0 %v644
      %1708 = vmatprep.subr.mxu0 0.0
      %1709 = vmatpush1.msra.mxu0 %v645
      %1710 = vmatprep.subr.mxu0 0.0
      %1711 = vmatpush1.msra.mxu0 %v646
      %1712 = vmatprep.subr.mxu0 0.0
      %1713 = vmatpush1.msra.mxu0 %v647
      %1714 = vmatprep.subr.mxu0 0.0
      %1715 = vmatpush1.msra.mxu0 0.0
      %1716 = vmatprep.subr.mxu0 0.0
      %1717 = vmatpush1.msra.mxu0 0.0
      %1718 = vmatprep.subr.mxu0 0.0
      %1719 = vmatpush1.msra.mxu0 0.0
      %1720 = vmatprep.subr.mxu0 0.0
      %1721 = vmatpush1.msra.mxu0 0.0
      %1722 = vmatprep.subr.mxu0 0.0
      %1723 = vmatpush1.msra.mxu0 0.0
      %1724 = vmatprep.subr.mxu0 0.0
      %1725 = vmatpush1.msra.mxu0 0.0
      %1726 = vmatprep.subr.mxu0 0.0
      %1727 = vmatpush1.msra.mxu0 0.0
      %1728 = vmatprep.subr.mxu0 0.0
      %1729 = vmatpush1.msra.mxu0 0.0
      %1730 = vmatprep.subr.mxu0 0.0
      %1731 = vmatpush1.msra.mxu0 0.0
      %1732 = vmatprep.subr.mxu0 0.0
      %1733 = vmatpush1.msra.mxu0 0.0
      %1734 = vmatprep.subr.mxu0 0.0
      %1735 = vmatpush1.msra.mxu0 0.0
      %1736 = vmatprep.subr.mxu0 0.0
      %1737 = vmatpush1.msra.mxu0 0.0
      %1738 = vmatprep.subr.mxu0 0.0
      %1739 = vmatpush1.msra.mxu0 0.0
      %1740 = vmatprep.subr.mxu0 0.0
      %1741 = vmatpush1.msra.mxu0 0.0
      %1742 = vmatprep.subr.mxu0 0.0
      %1743 = vmatpush1.msra.mxu0 0.0
      %1744 = vmatprep.subr.mxu0 0.0
      %1745 = vmatpush1.msra.mxu0 0.0
      %1746 = vmatprep.mubr.f32.mxu0 0.0
      %1747 = vmatmul.mubr.f32.gmra.mrb[0].mxu0 %v1681
      %v1748 = vpop.f32.mrb[0].mxu0
      %v1749 = vadd.f32 0.0, %v1748
      %v1750 = vpop.f32.mrb[0].mxu0
      %1751 = vdwg.mxu0
      %v1752 = vmul.f32 %v1673, %v1673
      %v1753 = vmul.f32 %v1674, %v1674
      %v1754 = vadd.f32 %v1752, %v1753
      %v1755 = vrot.slane %v1754, 4
      %v1756 = vadd.f32 %v1754, %v1755
      %v1757 = vrot.slane %v1756, 2
      %v1758 = vadd.f32 %v1756, %v1757
      %v1759 = vrot.slane %v1758, 1
      %v1760 = vadd.f32 %v1758, %v1759
      %1761 = vmatprep.subr.mxu0 0.0
      %1762 = vmatpush1.msra.mxu0 %v632
      %1763 = vmatprep.subr.mxu0 0.0
      %1764 = vmatpush1.msra.mxu0 %v633
      %1765 = vmatprep.subr.mxu0 0.0
      %1766 = vmatpush1.msra.mxu0 %v634
      %1767 = vmatprep.subr.mxu0 0.0
      %1768 = vmatpush1.msra.mxu0 %v635
      %1769 = vmatprep.subr.mxu0 0.0
      %1770 = vmatpush1.msra.mxu0 %v636
      %1771 = vmatprep.subr.mxu0 0.0
      %1772 = vmatpush1.msra.mxu0 %v637
      %1773 = vmatprep.subr.mxu0 0.0
      %1774 = vmatpush1.msra.mxu0 %v638
      %1775 = vmatprep.subr.mxu0 0.0
      %1776 = vmatpush1.msra.mxu0 %v639
      %1777 = vmatprep.subr.mxu0 0.0
      %1778 = vmatpush1.msra.mxu0 %v640
      %1779 = vmatprep.subr.mxu0 0.0
      %1780 = vmatpush1.msra.mxu0 %v641
      %1781 = vmatprep.subr.mxu0 0.0
      %1782 = vmatpush1.msra.mxu0 %v642
      %1783 = vmatprep.subr.mxu0 0.0
      %1784 = vmatpush1.msra.mxu0 %v643
      %1785 = vmatprep.subr.mxu0 0.0
      %1786 = vmatpush1.msra.mxu0 %v644
      %1787 = vmatprep.subr.mxu0 0.0
      %1788 = vmatpush1.msra.mxu0 %v645
      %1789 = vmatprep.subr.mxu0 0.0
      %1790 = vmatpush1.msra.mxu0 %v646
      %1791 = vmatprep.subr.mxu0 0.0
      %1792 = vmatpush1.msra.mxu0 %v647
      %1793 = vmatprep.subr.mxu0 0.0
      %1794 = vmatpush1.msra.mxu0 0.0
      %1795 = vmatprep.subr.mxu0 0.0
      %1796 = vmatpush1.msra.mxu0 0.0
      %1797 = vmatprep.subr.mxu0 0.0
      %1798 = vmatpush1.msra.mxu0 0.0
      %1799 = vmatprep.subr.mxu0 0.0
      %1800 = vmatpush1.msra.mxu0 0.0
      %1801 = vmatprep.subr.mxu0 0.0
      %1802 = vmatpush1.msra.mxu0 0.0
      %1803 = vmatprep.subr.mxu0 0.0
      %1804 = vmatpush1.msra.mxu0 0.0
      %1805 = vmatprep.subr.mxu0 0.0
      %1806 = vmatpush1.msra.mxu0 0.0
      %1807 = vmatprep.subr.mxu0 0.0
      %1808 = vmatpush1.msra.mxu0 0.0
      %1809 = vmatprep.subr.mxu0 0.0
      %1810 = vmatpush1.msra.mxu0 0.0
      %1811 = vmatprep.subr.mxu0 0.0
      %1812 = vmatpush1.msra.mxu0 0.0
      %1813 = vmatprep.subr.mxu0 0.0
      %1814 = vmatpush1.msra.mxu0 0.0
      %1815 = vmatprep.subr.mxu0 0.0
      %1816 = vmatpush1.msra.mxu0 0.0
      %1817 = vmatprep.subr.mxu0 0.0
      %1818 = vmatpush1.msra.mxu0 0.0
      %1819 = vmatprep.subr.mxu0 0.0
      %1820 = vmatpush1.msra.mxu0 0.0
      %1821 = vmatprep.subr.mxu0 0.0
      %1822 = vmatpush1.msra.mxu0 0.0
      %1823 = vmatprep.subr.mxu0 0.0
      %1824 = vmatpush1.msra.mxu0 0.0
      %1825 = vmatprep.mubr.f32.mxu0 0.0
      %1826 = vmatmul.mubr.f32.gmra.mrb[0].mxu0 %v1760
      %v1827 = vpop.f32.mrb[0].mxu0
      %v1828 = vadd.f32 0.0, %v1827
      %v1829 = vpop.f32.mrb[0].mxu0
      %1830 = vdwg.mxu0
      %v1831 = vmul.f32 %v1749, 0.00390625
      %v1832 = vmul.f32 %v1828, 0.00390625
      %v1833 = vmul.f32 %v1831, %v1831
      %v1834 = vsub.f32 %v1832, %v1833
      %v1835 = vadd.f32 %v1834, 1e-05
      %v1836 = vrsqrt.pop %v1835
      %v1837 = vld [vmem:[%s10] sm:$0x1]
      %v1838 = vmul.f32 %v1836, %v1837
      %v1839 = vld [vmem:[%s11] sm:$0x1]
      %v1840 = vmul.f32 %v1831, %v1838
      %v1841 = vsub.f32 %v1839, %v1840
      %v1842 = vlaneseq
      %v1843 = vshrl.u32 %v1842, 7
      %v1844 = vsub.s32 0, %v1843
      %v1845 = vrot.slane %v1838, %v1844
      %v1846 = vmul.f32 %v1673, %v1845
      %v1847 = vmul.f32 %v1674, %v1845
      %v1849 = vlaneseq
      %v1850 = vshrl.u32 %v1849, 7
      %v1851 = vsub.s32 0, %v1850
      %v1852 = vrot.slane %v1841, %v1851
      %v1854 = vadd.f32 %v1846, %v1852
      %v1855 = vadd.f32 %v1847, %v1852
      %v1856 = vld [vmem:[%s9] sm:$0xff]
      %v1857 = vld [vmem:[%s9 + $0x8] sm:$0xff]
      %v1858 = vld [vmem:[%s9 + $0x10] sm:$0xff]
      %v1859 = vld [vmem:[%s9 + $0x18] sm:$0xff]
      %v1860 = vld [vmem:[%s9 + $0x20] sm:$0xff]
      %v1861 = vld [vmem:[%s9 + $0x28] sm:$0xff]
      %v1862 = vld [vmem:[%s9 + $0x30] sm:$0xff]
      %v1863 = vld [vmem:[%s9 + $0x38] sm:$0xff]
      %v1864 = vld [vmem:[%s9 + $0x40] sm:$0xff]
      %v1865 = vld [vmem:[%s9 + $0x48] sm:$0xff]
      %v1866 = vld [vmem:[%s9 + $0x50] sm:$0xff]
      %v1867 = vld [vmem:[%s9 + $0x58] sm:$0xff]
      %v1868 = vld [vmem:[%s9 + $0x60] sm:$0xff]
      %v1869 = vld [vmem:[%s9 + $0x68] sm:$0xff]
      %v1870 = vld [vmem:[%s9 + $0x70] sm:$0xff]
      %v1871 = vld [vmem:[%s9 + $0x78] sm:$0xff]
      %1872 = vmatprep.subr.mxu0 0.0
      %1873 = vmatpush1.msra.mxu0 %v1856
      %1874 = vmatprep.subr.mxu0 0.0
      %1875 = vmatpush1.msra.mxu0 %v1857
      %1876 = vmatprep.subr.mxu0 0.0
      %1877 = vmatpush1.msra.mxu0 %v1858
      %1878 = vmatprep.subr.mxu0 0.0
      %1879 = vmatpush1.msra.mxu0 %v1859
      %1880 = vmatprep.subr.mxu0 0.0
      %1881 = vmatpush1.msra.mxu0 %v1860
      %1882 = vmatprep.subr.mxu0 0.0
      %1883 = vmatpush1.msra.mxu0 %v1861
      %1884 = vmatprep.subr.mxu0 0.0
      %1885 = vmatpush1.msra.mxu0 %v1862
      %1886 = vmatprep.subr.mxu0 0.0
      %1887 = vmatpush1.msra.mxu0 %v1863
      %1888 = vmatprep.subr.mxu0 0.0
      %1889 = vmatpush1.msra.mxu0 %v1864
      %1890 = vmatprep.subr.mxu0 0.0
      %1891 = vmatpush1.msra.mxu0 %v1865
      %1892 = vmatprep.subr.mxu0 0.0
      %1893 = vmatpush1.msra.mxu0 %v1866
      %1894 = vmatprep.subr.mxu0 0.0
      %1895 = vmatpush1.msra.mxu0 %v1867
      %1896 = vmatprep.subr.mxu0 0.0
      %1897 = vmatpush1.msra.mxu0 %v1868
      %1898 = vmatprep.subr.mxu0 0.0
      %1899 = vmatpush1.msra.mxu0 %v1869
      %1900 = vmatprep.subr.mxu0 0.0
      %1901 = vmatpush1.msra.mxu0 %v1870
      %1902 = vmatprep.subr.mxu0 0.0
      %1903 = vmatpush1.msra.mxu0 %v1871
      %1904 = vmatprep.subr.mxu0 0.0
      %1905 = vmatpush1.msra.mxu0 0.0
      %1906 = vmatprep.subr.mxu0 0.0
      %1907 = vmatpush1.msra.mxu0 0.0
      %1908 = vmatprep.subr.mxu0 0.0
      %1909 = vmatpush1.msra.mxu0 0.0
      %1910 = vmatprep.subr.mxu0 0.0
      %1911 = vmatpush1.msra.mxu0 0.0
      %1912 = vmatprep.subr.mxu0 0.0
      %1913 = vmatpush1.msra.mxu0 0.0
      %1914 = vmatprep.subr.mxu0 0.0
      %1915 = vmatpush1.msra.mxu0 0.0
      %1916 = vmatprep.subr.mxu0 0.0
      %1917 = vmatpush1.msra.mxu0 0.0
      %1918 = vmatprep.subr.mxu0 0.0
      %1919 = vmatpush1.msra.mxu0 0.0
      %1920 = vmatprep.subr.mxu0 0.0
      %1921 = vmatpush1.msra.mxu0 0.0
      %1922 = vmatprep.subr.mxu0 0.0
      %1923 = vmatpush1.msra.mxu0 0.0
      %1924 = vmatprep.subr.mxu0 0.0
      %1925 = vmatpush1.msra.mxu0 0.0
      %1926 = vmatprep.subr.mxu0 0.0
      %1927 = vmatpush1.msra.mxu0 0.0
      %1928 = vmatprep.subr.mxu0 0.0
      %1929 = vmatpush1.msra.mxu0 0.0
      %1930 = vmatprep.subr.mxu0 0.0
      %1931 = vmatpush1.msra.mxu0 0.0
      %1932 = vmatprep.subr.mxu0 0.0
      %1933 = vmatpush1.msra.mxu0 0.0
      %1934 = vmatprep.subr.mxu0 0.0
      %1935 = vmatpush1.msra.mxu0 0.0
      %1936 = vmatprep.mubr.f32.mxu0 0.0
      %1937 = vmatmul.mubr.f32.gmra.mrb[0].mxu0 %v1854
      %v1938 = vpop.f32.mrb[0].mxu0
      %v1939 = vadd.f32 0.0, %v1938
      %v1940 = vpop.f32.mrb[0].mxu0
      %1941 = vmatprep.mubr.f32.mxu0 0.0
      %1942 = vmatmul.mubr.f32.gmra.mrb[0].mxu0 %v1855
      %v1943 = vpop.f32.mrb[0].mxu0
      %v1944 = vadd.f32 0.0, %v1943
      %v1945 = vpop.f32.mrb[0].mxu0
      %1946 = vdwg.mxu0
      %v1947 = vadd.f32 %v1939, %v1944
      %v1948 = vrot.slane %v1947, 4
      %v1949 = vadd.f32 %v1947, %v1948
      %v1950 = vrot.slane %v1949, 2
      %v1951 = vadd.f32 %v1949, %v1950
      %v1952 = vrot.slane %v1951, 1
      %v1953 = vadd.f32 %v1951, %v1952
      %1954 = vmatprep.subr.mxu0 0.0
      %1955 = vmatpush1.msra.mxu0 %v632
      %1956 = vmatprep.subr.mxu0 0.0
      %1957 = vmatpush1.msra.mxu0 %v633
      %1958 = vmatprep.subr.mxu0 0.0
      %1959 = vmatpush1.msra.mxu0 %v634
      %1960 = vmatprep.subr.mxu0 0.0
      %1961 = vmatpush1.msra.mxu0 %v635
      %1962 = vmatprep.subr.mxu0 0.0
      %1963 = vmatpush1.msra.mxu0 %v636
      %1964 = vmatprep.subr.mxu0 0.0
      %1965 = vmatpush1.msra.mxu0 %v637
      %1966 = vmatprep.subr.mxu0 0.0
      %1967 = vmatpush1.msra.mxu0 %v638
      %1968 = vmatprep.subr.mxu0 0.0
      %1969 = vmatpush1.msra.mxu0 %v639
      %1970 = vmatprep.subr.mxu0 0.0
      %1971 = vmatpush1.msra.mxu0 %v640
      %1972 = vmatprep.subr.mxu0 0.0
      %1973 = vmatpush1.msra.mxu0 %v641
      %1974 = vmatprep.subr.mxu0 0.0
      %1975 = vmatpush1.msra.mxu0 %v642
      %1976 = vmatprep.subr.mxu0 0.0
      %1977 = vmatpush1.msra.mxu0 %v643
      %1978 = vmatprep.subr.mxu0 0.0
      %1979 = vmatpush1.msra.mxu0 %v644
      %1980 = vmatprep.subr.mxu0 0.0
      %1981 = vmatpush1.msra.mxu0 %v645
      %1982 = vmatprep.subr.mxu0 0.0
      %1983 = vmatpush1.msra.mxu0 %v646
      %1984 = vmatprep.subr.mxu0 0.0
      %1985 = vmatpush1.msra.mxu0 %v647
      %1986 = vmatprep.subr.mxu0 0.0
      %1987 = vmatpush1.msra.mxu0 0.0
      %1988 = vmatprep.subr.mxu0 0.0
      %1989 = vmatpush1.msra.mxu0 0.0
      %1990 = vmatprep.subr.mxu0 0.0
      %1991 = vmatpush1.msra.mxu0 0.0
      %1992 = vmatprep.subr.mxu0 0.0
      %1993 = vmatpush1.msra.mxu0 0.0
      %1994 = vmatprep.subr.mxu0 0.0
      %1995 = vmatpush1.msra.mxu0 0.0
      %1996 = vmatprep.subr.mxu0 0.0
      %1997 = vmatpush1.msra.mxu0 0.0
      %1998 = vmatprep.subr.mxu0 0.0
      %1999 = vmatpush1.msra.mxu0 0.0
      %2000 = vmatprep.subr.mxu0 0.0
      %2001 = vmatpush1.msra.mxu0 0.0
      %2002 = vmatprep.subr.mxu0 0.0
      %2003 = vmatpush1.msra.mxu0 0.0
      %2004 = vmatprep.subr.mxu0 0.0
      %2005 = vmatpush1.msra.mxu0 0.0
      %2006 = vmatprep.subr.mxu0 0.0
      %2007 = vmatpush1.msra.mxu0 0.0
      %2008 = vmatprep.subr.mxu0 0.0
      %2009 = vmatpush1.msra.mxu0 0.0
      %2010 = vmatprep.subr.mxu0 0.0
      %2011 = vmatpush1.msra.mxu0 0.0
      %2012 = vmatprep.subr.mxu0 0.0
      %2013 = vmatpush1.msra.mxu0 0.0
      %2014 = vmatprep.subr.mxu0 0.0
      %2015 = vmatpush1.msra.mxu0 0.0
      %2016 = vmatprep.subr.mxu0 0.0
      %2017 = vmatpush1.msra.mxu0 0.0
      %2018 = vmatprep.mubr.f32.mxu0 0.0
      %2019 = vmatmul.mubr.f32.gmra.mrb[0].mxu0 %v1953
      %v2020 = vpop.f32.mrb[0].mxu0
      %v2021 = vadd.f32 0.0, %v2020
      %v2022 = vpop.f32.mrb[0].mxu0
      %2023 = vdwg.mxu0
      %v2024 = vmul.f32 %v1939, %v1939
      %v2025 = vmul.f32 %v1944, %v1944
      %v2026 = vadd.f32 %v2024, %v2025
      %v2027 = vrot.slane %v2026, 4
      %v2028 = vadd.f32 %v2026, %v2027
      %v2029 = vrot.slane %v2028, 2
      %v2030 = vadd.f32 %v2028, %v2029
      %v2031 = vrot.slane %v2030, 1
      %v2032 = vadd.f32 %v2030, %v2031
      %2033 = vmatprep.subr.mxu0 0.0
      %2034 = vmatpush1.msra.mxu0 %v632
      %2035 = vmatprep.subr.mxu0 0.0
      %2036 = vmatpush1.msra.mxu0 %v633
      %2037 = vmatprep.subr.mxu0 0.0
      %2038 = vmatpush1.msra.mxu0 %v634
      %2039 = vmatprep.subr.mxu0 0.0
      %2040 = vmatpush1.msra.mxu0 %v635
      %2041 = vmatprep.subr.mxu0 0.0
      %2042 = vmatpush1.msra.mxu0 %v636
      %2043 = vmatprep.subr.mxu0 0.0
      %2044 = vmatpush1.msra.mxu0 %v637
      %2045 = vmatprep.subr.mxu0 0.0
      %2046 = vmatpush1.msra.mxu0 %v638
      %2047 = vmatprep.subr.mxu0 0.0
      %2048 = vmatpush1.msra.mxu0 %v639
      %2049 = vmatprep.subr.mxu0 0.0
      %2050 = vmatpush1.msra.mxu0 %v640
      %2051 = vmatprep.subr.mxu0 0.0
      %2052 = vmatpush1.msra.mxu0 %v641
      %2053 = vmatprep.subr.mxu0 0.0
      %2054 = vmatpush1.msra.mxu0 %v642
      %2055 = vmatprep.subr.mxu0 0.0
      %2056 = vmatpush1.msra.mxu0 %v643
      %2057 = vmatprep.subr.mxu0 0.0
      %2058 = vmatpush1.msra.mxu0 %v644
      %2059 = vmatprep.subr.mxu0 0.0
      %2060 = vmatpush1.msra.mxu0 %v645
      %2061 = vmatprep.subr.mxu0 0.0
      %2062 = vmatpush1.msra.mxu0 %v646
      %2063 = vmatprep.subr.mxu0 0.0
      %2064 = vmatpush1.msra.mxu0 %v647
      %2065 = vmatprep.subr.mxu0 0.0
      %2066 = vmatpush1.msra.mxu0 0.0
      %2067 = vmatprep.subr.mxu0 0.0
      %2068 = vmatpush1.msra.mxu0 0.0
      %2069 = vmatprep.subr.mxu0 0.0
      %2070 = vmatpush1.msra.mxu0 0.0
      %2071 = vmatprep.subr.mxu0 0.0
      %2072 = vmatpush1.msra.mxu0 0.0
      %2073 = vmatprep.subr.mxu0 0.0
      %2074 = vmatpush1.msra.mxu0 0.0
      %2075 = vmatprep.subr.mxu0 0.0
      %2076 = vmatpush1.msra.mxu0 0.0
      %2077 = vmatprep.subr.mxu0 0.0
      %2078 = vmatpush1.msra.mxu0 0.0
      %2079 = vmatprep.subr.mxu0 0.0
      %2080 = vmatpush1.msra.mxu0 0.0
      %2081 = vmatprep.subr.mxu0 0.0
      %2082 = vmatpush1.msra.mxu0 0.0
      %2083 = vmatprep.subr.mxu0 0.0
      %2084 = vmatpush1.msra.mxu0 0.0
      %2085 = vmatprep.subr.mxu0 0.0
      %2086 = vmatpush1.msra.mxu0 0.0
      %2087 = vmatprep.subr.mxu0 0.0
      %2088 = vmatpush1.msra.mxu0 0.0
      %2089 = vmatprep.subr.mxu0 0.0
      %2090 = vmatpush1.msra.mxu0 0.0
      %2091 = vmatprep.subr.mxu0 0.0
      %2092 = vmatpush1.msra.mxu0 0.0
      %2093 = vmatprep.subr.mxu0 0.0
      %2094 = vmatpush1.msra.mxu0 0.0
      %2095 = vmatprep.subr.mxu0 0.0
      %2096 = vmatpush1.msra.mxu0 0.0
      %2097 = vmatprep.mubr.f32.mxu0 0.0
      %2098 = vmatmul.mubr.f32.gmra.mrb[0].mxu0 %v2032
      %v2099 = vpop.f32.mrb[0].mxu0
      %v2100 = vadd.f32 0.0, %v2099
      %v2101 = vpop.f32.mrb[0].mxu0
      %2102 = vdwg.mxu0
      %v2103 = vmul.f32 %v2021, 0.00390625
      %v2104 = vmul.f32 %v2100, 0.00390625
      %v2105 = vmul.f32 %v2103, %v2103
      %v2106 = vsub.f32 %v2104, %v2105
      %v2107 = vadd.f32 %v2106, 1e-05
      %v2108 = vrsqrt.pop %v2107
      %v2109 = vld [vmem:[%s12] sm:$0x1]
      %v2110 = vmul.f32 %v2108, %v2109
      %v2111 = vld [vmem:[%s13] sm:$0x1]
      %v2112 = vmul.f32 %v2103, %v2110
      %v2113 = vsub.f32 %v2111, %v2112
      %v2114 = vlaneseq
      %v2115 = vshrl.u32 %v2114, 7
      %v2116 = vsub.s32 0, %v2115
      %v2117 = vrot.slane %v2110, %v2116
      %v2118 = vmul.f32 %v1939, %v2117
      %v2119 = vmul.f32 %v1944, %v2117
      %v2121 = vlaneseq
      %v2122 = vshrl.u32 %v2121, 7
      %v2123 = vsub.s32 0, %v2122
      %v2124 = vrot.slane %v2113, %v2123
      %v2126 = vadd.f32 %v2118, %v2124
      %v2127 = vadd.f32 %v2119, %v2124
      %v2128 = vmax.f32 %v2126, 0.0
      %v2129 = vmax.f32 %v2127, 0.0
      %2130 = vst [vmem:[#allocation2 + $0x1] sm:$0xff] %v2128
      %2131 = vst [vmem:[#allocation2 + $0x9] sm:$0xff] %v2129
      %v2132 = vld [vmem:[#allocation2] sm:$0xff]
      %v2133 = vld [vmem:[#allocation2 + $0x8] sm:$0xff]
      %v2134 = vld [vmem:[%s14] sm:$0xff]
      %v2135 = vld [vmem:[%s14 + $0x8] sm:$0xff]
      %v2136 = vld [vmem:[%s14 + $0x10] sm:$0xff]
      %v2137 = vld [vmem:[%s14 + $0x18] sm:$0xff]
      %v2138 = vld [vmem:[%s14 + $0x20] sm:$0xff]
      %v2139 = vld [vmem:[%s14 + $0x28] sm:$0xff]
      %v2140 = vld [vmem:[%s14 + $0x30] sm:$0xff]
      %v2141 = vld [vmem:[%s14 + $0x38] sm:$0xff]
      %v2142 = vld [vmem:[%s14 + $0x40] sm:$0xff]
      %v2143 = vld [vmem:[%s14 + $0x48] sm:$0xff]
      %v2144 = vld [vmem:[%s14 + $0x50] sm:$0xff]
      %v2145 = vld [vmem:[%s14 + $0x58] sm:$0xff]
      %v2146 = vld [vmem:[%s14 + $0x60] sm:$0xff]
      %v2147 = vld [vmem:[%s14 + $0x68] sm:$0xff]
      %v2148 = vld [vmem:[%s14 + $0x70] sm:$0xff]
      %v2149 = vld [vmem:[%s14 + $0x78] sm:$0xff]
      %v2150 = vld [vmem:[#allocation2 + $0x1] sm:$0xff]
      %v2151 = vld [vmem:[#allocation2 + $0x9] sm:$0xff]
      %s2152 = scalar_lea.vmem %s14, 128
      %v2153 = vld [vmem:[%s2152] sm:$0xff]
      %v2154 = vld [vmem:[%s2152 + $0x8] sm:$0xff]
      %v2155 = vld [vmem:[%s2152 + $0x10] sm:$0xff]
      %v2156 = vld [vmem:[%s2152 + $0x18] sm:$0xff]
      %v2157 = vld [vmem:[%s2152 + $0x20] sm:$0xff]
      %v2158 = vld [vmem:[%s2152 + $0x28] sm:$0xff]
      %v2159 = vld [vmem:[%s2152 + $0x30] sm:$0xff]
      %v2160 = vld [vmem:[%s2152 + $0x38] sm:$0xff]
      %v2161 = vld [vmem:[%s2152 + $0x40] sm:$0xff]
      %v2162 = vld [vmem:[%s2152 + $0x48] sm:$0xff]
      %v2163 = vld [vmem:[%s2152 + $0x50] sm:$0xff]
      %v2164 = vld [vmem:[%s2152 + $0x58] sm:$0xff]
      %v2165 = vld [vmem:[%s2152 + $0x60] sm:$0xff]
      %v2166 = vld [vmem:[%s2152 + $0x68] sm:$0xff]
      %v2167 = vld [vmem:[%s2152 + $0x70] sm:$0xff]
      %v2168 = vld [vmem:[%s2152 + $0x78] sm:$0xff]
      %2169 = vmatprep.subr.mxu0 0.0
      %2170 = vmatpush1.msra.mxu0 %v2153
      %2171 = vmatprep.subr.mxu0 0.0
      %2172 = vmatpush1.msra.mxu0 %v2154
      %2173 = vmatprep.subr.mxu0 0.0
      %2174 = vmatpush1.msra.mxu0 %v2155
      %2175 = vmatprep.subr.mxu0 0.0
      %2176 = vmatpush1.msra.mxu0 %v2156
      %2177 = vmatprep.subr.mxu0 0.0
      %2178 = vmatpush1.msra.mxu0 %v2157
      %2179 = vmatprep.subr.mxu0 0.0
      %2180 = vmatpush1.msra.mxu0 %v2158
      %2181 = vmatprep.subr.mxu0 0.0
      %2182 = vmatpush1.msra.mxu0 %v2159
      %2183 = vmatprep.subr.mxu0 0.0
      %2184 = vmatpush1.msra.mxu0 %v2160
      %2185 = vmatprep.subr.mxu0 0.0
      %2186 = vmatpush1.msra.mxu0 %v2161
      %2187 = vmatprep.subr.mxu0 0.0
      %2188 = vmatpush1.msra.mxu0 %v2162
      %2189 = vmatprep.subr.mxu0 0.0
      %2190 = vmatpush1.msra.mxu0 %v2163
      %2191 = vmatprep.subr.mxu0 0.0
      %2192 = vmatpush1.msra.mxu0 %v2164
      %2193 = vmatprep.subr.mxu0 0.0
      %2194 = vmatpush1.msra.mxu0 %v2165
      %2195 = vmatprep.subr.mxu0 0.0
      %2196 = vmatpush1.msra.mxu0 %v2166
      %2197 = vmatprep.subr.mxu0 0.0
      %2198 = vmatpush1.msra.mxu0 %v2167
      %2199 = vmatprep.subr.mxu0 0.0
      %2200 = vmatpush1.msra.mxu0 %v2168
      %2201 = vmatprep.subr.mxu0 0.0
      %2202 = vmatpush1.msra.mxu0 0.0
      %2203 = vmatprep.subr.mxu0 0.0
      %2204 = vmatpush1.msra.mxu0 0.0
      %2205 = vmatprep.subr.mxu0 0.0
      %2206 = vmatpush1.msra.mxu0 0.0
      %2207 = vmatprep.subr.mxu0 0.0
      %2208 = vmatpush1.msra.mxu0 0.0
      %2209 = vmatprep.subr.mxu0 0.0
      %2210 = vmatpush1.msra.mxu0 0.0
      %2211 = vmatprep.subr.mxu0 0.0
      %2212 = vmatpush1.msra.mxu0 0.0
      %2213 = vmatprep.subr.mxu0 0.0
      %2214 = vmatpush1.msra.mxu0 0.0
      %2215 = vmatprep.subr.mxu0 0.0
      %2216 = vmatpush1.msra.mxu0 0.0
      %2217 = vmatprep.subr.mxu0 0.0
      %2218 = vmatpush1.msra.mxu0 0.0
      %2219 = vmatprep.subr.mxu0 0.0
      %2220 = vmatpush1.msra.mxu0 0.0
      %2221 = vmatprep.subr.mxu0 0.0
      %2222 = vmatpush1.msra.mxu0 0.0
      %2223 = vmatprep.subr.mxu0 0.0
      %2224 = vmatpush1.msra.mxu0 0.0
      %2225 = vmatprep.subr.mxu0 0.0
      %2226 = vmatpush1.msra.mxu0 0.0
      %2227 = vmatprep.subr.mxu0 0.0
      %2228 = vmatpush1.msra.mxu0 0.0
      %2229 = vmatprep.subr.mxu0 0.0
      %2230 = vmatpush1.msra.mxu0 0.0
      %2231 = vmatprep.subr.mxu0 0.0
      %2232 = vmatpush1.msra.mxu0 0.0
      %2233 = vmatprep.mubr.f32.mxu0 0.0
      %2234 = vmatmul.mubr.f32.gmra.mrb[0].mxu0 %v2150
      %v2235 = vpop.f32.mrb[0].mxu0
      %v2236 = vadd.f32 0.0, %v2235
      %v2237 = vpop.f32.mrb[0].mxu0
      %2238 = vmatprep.mubr.f32.mxu0 0.0
      %2239 = vmatmul.mubr.f32.gmra.mrb[0].mxu0 %v2151
      %v2240 = vpop.f32.mrb[0].mxu0
      %v2241 = vadd.f32 0.0, %v2240
      %v2242 = vpop.f32.mrb[0].mxu0
      %2243 = vdwg.mxu0
      %2244 = vmatprep.subr.mxu0 0.0
      %2245 = vmatpush1.msra.mxu0 %v2134
      %2246 = vmatprep.subr.mxu0 0.0
      %2247 = vmatpush1.msra.mxu0 %v2135
      %2248 = vmatprep.subr.mxu0 0.0
      %2249 = vmatpush1.msra.mxu0 %v2136
      %2250 = vmatprep.subr.mxu0 0.0
      %2251 = vmatpush1.msra.mxu0 %v2137
      %2252 = vmatprep.subr.mxu0 0.0
      %2253 = vmatpush1.msra.mxu0 %v2138
      %2254 = vmatprep.subr.mxu0 0.0
      %2255 = vmatpush1.msra.mxu0 %v2139
      %2256 = vmatprep.subr.mxu0 0.0
      %2257 = vmatpush1.msra.mxu0 %v2140
      %2258 = vmatprep.subr.mxu0 0.0
      %2259 = vmatpush1.msra.mxu0 %v2141
      %2260 = vmatprep.subr.mxu0 0.0
      %2261 = vmatpush1.msra.mxu0 %v2142
      %2262 = vmatprep.subr.mxu0 0.0
      %2263 = vmatpush1.msra.mxu0 %v2143
      %2264 = vmatprep.subr.mxu0 0.0
      %2265 = vmatpush1.msra.mxu0 %v2144
      %2266 = vmatprep.subr.mxu0 0.0
      %2267 = vmatpush1.msra.mxu0 %v2145
      %2268 = vmatprep.subr.mxu0 0.0
      %2269 = vmatpush1.msra.mxu0 %v2146
      %2270 = vmatprep.subr.mxu0 0.0
      %2271 = vmatpush1.msra.mxu0 %v2147
      %2272 = vmatprep.subr.mxu0 0.0
      %2273 = vmatpush1.msra.mxu0 %v2148
      %2274 = vmatprep.subr.mxu0 0.0
      %2275 = vmatpush1.msra.mxu0 %v2149
      %2276 = vmatprep.subr.mxu0 0.0
      %2277 = vmatpush1.msra.mxu0 0.0
      %2278 = vmatprep.subr.mxu0 0.0
      %2279 = vmatpush1.msra.mxu0 0.0
      %2280 = vmatprep.subr.mxu0 0.0
      %2281 = vmatpush1.msra.mxu0 0.0
      %2282 = vmatprep.subr.mxu0 0.0
      %2283 = vmatpush1.msra.mxu0 0.0
      %2284 = vmatprep.subr.mxu0 0.0
      %2285 = vmatpush1.msra.mxu0 0.0
      %2286 = vmatprep.subr.mxu0 0.0
      %2287 = vmatpush1.msra.mxu0 0.0
      %2288 = vmatprep.subr.mxu0 0.0
      %2289 = vmatpush1.msra.mxu0 0.0
      %2290 = vmatprep.subr.mxu0 0.0
      %2291 = vmatpush1.msra.mxu0 0.0
      %2292 = vmatprep.subr.mxu0 0.0
      %2293 = vmatpush1.msra.mxu0 0.0
      %2294 = vmatprep.subr.mxu0 0.0
      %2295 = vmatpush1.msra.mxu0 0.0
      %2296 = vmatprep.subr.mxu0 0.0
      %2297 = vmatpush1.msra.mxu0 0.0
      %2298 = vmatprep.subr.mxu0 0.0
      %2299 = vmatpush1.msra.mxu0 0.0
      %2300 = vmatprep.subr.mxu0 0.0
      %2301 = vmatpush1.msra.mxu0 0.0
      %2302 = vmatprep.subr.mxu0 0.0
      %2303 = vmatpush1.msra.mxu0 0.0
      %2304 = vmatprep.subr.mxu0 0.0
      %2305 = vmatpush1.msra.mxu0 0.0
      %2306 = vmatprep.subr.mxu0 0.0
      %2307 = vmatpush1.msra.mxu0 0.0
      %2308 = vmatprep.mubr.f32.mxu0 0.0
      %2309 = vmatmul.mubr.f32.gmra.mrb[0].mxu0 %v2132
      %v2310 = vpop.f32.mrb[0].mxu0
      %v2311 = vadd.f32 %v2236, %v2310
      %v2312 = vpop.f32.mrb[0].mxu0
      %2313 = vmatprep.mubr.f32.mxu0 0.0
      %2314 = vmatmul.mubr.f32.gmra.mrb[0].mxu0 %v2133
      %v2315 = vpop.f32.mrb[0].mxu0
      %v2316 = vadd.f32 %v2241, %v2315
      %v2317 = vpop.f32.mrb[0].mxu0
      %2318 = vdwg.mxu0
      %v2319 = vld [vmem:[#allocation2 + $0x2] sm:$0xff]
      %v2320 = vld [vmem:[#allocation2 + $0xa] sm:$0xff]
      %s2321 = scalar_lea.vmem %s14, 256
      %v2322 = vld [vmem:[%s2321] sm:$0xff]
      %v2323 = vld [vmem:[%s2321 + $0x8] sm:$0xff]
      %v2324 = vld [vmem:[%s2321 + $0x10] sm:$0xff]
      %v2325 = vld [vmem:[%s2321 + $0x18] sm:$0xff]
      %v2326 = vld [vmem:[%s2321 + $0x20] sm:$0xff]
      %v2327 = vld [vmem:[%s2321 + $0x28] sm:$0xff]
      %v2328 = vld [vmem:[%s2321 + $0x30] sm:$0xff]
      %v2329 = vld [vmem:[%s2321 + $0x38] sm:$0xff]
      %v2330 = vld [vmem:[%s2321 + $0x40] sm:$0xff]
      %v2331 = vld [vmem:[%s2321 + $0x48] sm:$0xff]
      %v2332 = vld [vmem:[%s2321 + $0x50] sm:$0xff]
      %v2333 = vld [vmem:[%s2321 + $0x58] sm:$0xff]
      %v2334 = vld [vmem:[%s2321 + $0x60] sm:$0xff]
      %v2335 = vld [vmem:[%s2321 + $0x68] sm:$0xff]
      %v2336 = vld [vmem:[%s2321 + $0x70] sm:$0xff]
      %v2337 = vld [vmem:[%s2321 + $0x78] sm:$0xff]
      %2338 = vmatprep.subr.mxu0 0.0
      %2339 = vmatpush1.msra.mxu0 %v2322
      %2340 = vmatprep.subr.mxu0 0.0
      %2341 = vmatpush1.msra.mxu0 %v2323
      %2342 = vmatprep.subr.mxu0 0.0
      %2343 = vmatpush1.msra.mxu0 %v2324
      %2344 = vmatprep.subr.mxu0 0.0
      %2345 = vmatpush1.msra.mxu0 %v2325
      %2346 = vmatprep.subr.mxu0 0.0
      %2347 = vmatpush1.msra.mxu0 %v2326
      %2348 = vmatprep.subr.mxu0 0.0
      %2349 = vmatpush1.msra.mxu0 %v2327
      %2350 = vmatprep.subr.mxu0 0.0
      %2351 = vmatpush1.msra.mxu0 %v2328
      %2352 = vmatprep.subr.mxu0 0.0
      %2353 = vmatpush1.msra.mxu0 %v2329
      %2354 = vmatprep.subr.mxu0 0.0
      %2355 = vmatpush1.msra.mxu0 %v2330
      %2356 = vmatprep.subr.mxu0 0.0
      %2357 = vmatpush1.msra.mxu0 %v2331
      %2358 = vmatprep.subr.mxu0 0.0
      %2359 = vmatpush1.msra.mxu0 %v2332
      %2360 = vmatprep.subr.mxu0 0.0
      %2361 = vmatpush1.msra.mxu0 %v2333
      %2362 = vmatprep.subr.mxu0 0.0
      %2363 = vmatpush1.msra.mxu0 %v2334
      %2364 = vmatprep.subr.mxu0 0.0
      %2365 = vmatpush1.msra.mxu0 %v2335
      %2366 = vmatprep.subr.mxu0 0.0
      %2367 = vmatpush1.msra.mxu0 %v2336
      %2368 = vmatprep.subr.mxu0 0.0
      %2369 = vmatpush1.msra.mxu0 %v2337
      %2370 = vmatprep.subr.mxu0 0.0
      %2371 = vmatpush1.msra.mxu0 0.0
      %2372 = vmatprep.subr.mxu0 0.0
      %2373 = vmatpush1.msra.mxu0 0.0
      %2374 = vmatprep.subr.mxu0 0.0
      %2375 = vmatpush1.msra.mxu0 0.0
      %2376 = vmatprep.subr.mxu0 0.0
      %2377 = vmatpush1.msra.mxu0 0.0
      %2378 = vmatprep.subr.mxu0 0.0
      %2379 = vmatpush1.msra.mxu0 0.0
      %2380 = vmatprep.subr.mxu0 0.0
      %2381 = vmatpush1.msra.mxu0 0.0
      %2382 = vmatprep.subr.mxu0 0.0
      %2383 = vmatpush1.msra.mxu0 0.0
      %2384 = vmatprep.subr.mxu0 0.0
      %2385 = vmatpush1.msra.mxu0 0.0
      %2386 = vmatprep.subr.mxu0 0.0
      %2387 = vmatpush1.msra.mxu0 0.0
      %2388 = vmatprep.subr.mxu0 0.0
      %2389 = vmatpush1.msra.mxu0 0.0
      %2390 = vmatprep.subr.mxu0 0.0
      %2391 = vmatpush1.msra.mxu0 0.0
      %2392 = vmatprep.subr.mxu0 0.0
      %2393 = vmatpush1.msra.mxu0 0.0
      %2394 = vmatprep.subr.mxu0 0.0
      %2395 = vmatpush1.msra.mxu0 0.0
      %2396 = vmatprep.subr.mxu0 0.0
      %2397 = vmatpush1.msra.mxu0 0.0
      %2398 = vmatprep.subr.mxu0 0.0
      %2399 = vmatpush1.msra.mxu0 0.0
      %2400 = vmatprep.subr.mxu0 0.0
      %2401 = vmatpush1.msra.mxu0 0.0
      %2402 = vmatprep.mubr.f32.mxu0 0.0
      %2403 = vmatmul.mubr.f32.gmra.mrb[0].mxu0 %v2319
      %v2404 = vpop.f32.mrb[0].mxu0
      %v2405 = vadd.f32 0.0, %v2404
      %v2406 = vpop.f32.mrb[0].mxu0
      %2407 = vmatprep.mubr.f32.mxu0 0.0
      %2408 = vmatmul.mubr.f32.gmra.mrb[0].mxu0 %v2320
      %v2409 = vpop.f32.mrb[0].mxu0
      %v2410 = vadd.f32 0.0, %v2409
      %v2411 = vpop.f32.mrb[0].mxu0
      %2412 = vdwg.mxu0
      %v2413 = vadd.f32 %v2311, %v2405
      %v2414 = vadd.f32 %v2316, %v2410
      %v2415 = vadd.f32 %v2413, %v2414
      %v2416 = vrot.slane %v2415, 4
      %v2417 = vadd.f32 %v2415, %v2416
      %v2418 = vrot.slane %v2417, 2
      %v2419 = vadd.f32 %v2417, %v2418
      %v2420 = vrot.slane %v2419, 1
      %v2421 = vadd.f32 %v2419, %v2420
      %2422 = vmatprep.subr.mxu0 0.0
      %2423 = vmatpush1.msra.mxu0 %v632
      %2424 = vmatprep.subr.mxu0 0.0
      %2425 = vmatpush1.msra.mxu0 %v633
      %2426 = vmatprep.subr.mxu0 0.0
      %2427 = vmatpush1.msra.mxu0 %v634
      %2428 = vmatprep.subr.mxu0 0.0
      %2429 = vmatpush1.msra.mxu0 %v635
      %2430 = vmatprep.subr.mxu0 0.0
      %2431 = vmatpush1.msra.mxu0 %v636
      %2432 = vmatprep.subr.mxu0 0.0
      %2433 = vmatpush1.msra.mxu0 %v637
      %2434 = vmatprep.subr.mxu0 0.0
      %2435 = vmatpush1.msra.mxu0 %v638
      %2436 = vmatprep.subr.mxu0 0.0
      %2437 = vmatpush1.msra.mxu0 %v639
      %2438 = vmatprep.subr.mxu0 0.0
      %2439 = vmatpush1.msra.mxu0 %v640
      %2440 = vmatprep.subr.mxu0 0.0
      %2441 = vmatpush1.msra.mxu0 %v641
      %2442 = vmatprep.subr.mxu0 0.0
      %2443 = vmatpush1.msra.mxu0 %v642
      %2444 = vmatprep.subr.mxu0 0.0
      %2445 = vmatpush1.msra.mxu0 %v643
      %2446 = vmatprep.subr.mxu0 0.0
      %2447 = vmatpush1.msra.mxu0 %v644
      %2448 = vmatprep.subr.mxu0 0.0
      %2449 = vmatpush1.msra.mxu0 %v645
      %2450 = vmatprep.subr.mxu0 0.0
      %2451 = vmatpush1.msra.mxu0 %v646
      %2452 = vmatprep.subr.mxu0 0.0
      %2453 = vmatpush1.msra.mxu0 %v647
      %2454 = vmatprep.subr.mxu0 0.0
      %2455 = vmatpush1.msra.mxu0 0.0
      %2456 = vmatprep.subr.mxu0 0.0
      %2457 = vmatpush1.msra.mxu0 0.0
      %2458 = vmatprep.subr.mxu0 0.0
      %2459 = vmatpush1.msra.mxu0 0.0
      %2460 = vmatprep.subr.mxu0 0.0
      %2461 = vmatpush1.msra.mxu0 0.0
      %2462 = vmatprep.subr.mxu0 0.0
      %2463 = vmatpush1.msra.mxu0 0.0
      %2464 = vmatprep.subr.mxu0 0.0
      %2465 = vmatpush1.msra.mxu0 0.0
      %2466 = vmatprep.subr.mxu0 0.0
      %2467 = vmatpush1.msra.mxu0 0.0
      %2468 = vmatprep.subr.mxu0 0.0
      %2469 = vmatpush1.msra.mxu0 0.0
      %2470 = vmatprep.subr.mxu0 0.0
      %2471 = vmatpush1.msra.mxu0 0.0
      %2472 = vmatprep.subr.mxu0 0.0
      %2473 = vmatpush1.msra.mxu0 0.0
      %2474 = vmatprep.subr.mxu0 0.0
      %2475 = vmatpush1.msra.mxu0 0.0
      %2476 = vmatprep.subr.mxu0 0.0
      %2477 = vmatpush1.msra.mxu0 0.0
      %2478 = vmatprep.subr.mxu0 0.0
      %2479 = vmatpush1.msra.mxu0 0.0
      %2480 = vmatprep.subr.mxu0 0.0
      %2481 = vmatpush1.msra.mxu0 0.0
      %2482 = vmatprep.subr.mxu0 0.0
      %2483 = vmatpush1.msra.mxu0 0.0
      %2484 = vmatprep.subr.mxu0 0.0
      %2485 = vmatpush1.msra.mxu0 0.0
      %2486 = vmatprep.mubr.f32.mxu0 0.0
      %2487 = vmatmul.mubr.f32.gmra.mrb[0].mxu0 %v2421
      %v2488 = vpop.f32.mrb[0].mxu0
      %v2489 = vadd.f32 0.0, %v2488
      %v2490 = vpop.f32.mrb[0].mxu0
      %2491 = vdwg.mxu0
      %v2492 = vmul.f32 %v2413, %v2413
      %v2493 = vmul.f32 %v2414, %v2414
      %v2494 = vadd.f32 %v2492, %v2493
      %v2495 = vrot.slane %v2494, 4
      %v2496 = vadd.f32 %v2494, %v2495
      %v2497 = vrot.slane %v2496, 2
      %v2498 = vadd.f32 %v2496, %v2497
      %v2499 = vrot.slane %v2498, 1
      %v2500 = vadd.f32 %v2498, %v2499
      %2501 = vmatprep.subr.mxu0 0.0
      %2502 = vmatpush1.msra.mxu0 %v632
      %2503 = vmatprep.subr.mxu0 0.0
      %2504 = vmatpush1.msra.mxu0 %v633
      %2505 = vmatprep.subr.mxu0 0.0
      %2506 = vmatpush1.msra.mxu0 %v634
      %2507 = vmatprep.subr.mxu0 0.0
      %2508 = vmatpush1.msra.mxu0 %v635
      %2509 = vmatprep.subr.mxu0 0.0
      %2510 = vmatpush1.msra.mxu0 %v636
      %2511 = vmatprep.subr.mxu0 0.0
      %2512 = vmatpush1.msra.mxu0 %v637
      %2513 = vmatprep.subr.mxu0 0.0
      %2514 = vmatpush1.msra.mxu0 %v638
      %2515 = vmatprep.subr.mxu0 0.0
      %2516 = vmatpush1.msra.mxu0 %v639
      %2517 = vmatprep.subr.mxu0 0.0
      %2518 = vmatpush1.msra.mxu0 %v640
      %2519 = vmatprep.subr.mxu0 0.0
      %2520 = vmatpush1.msra.mxu0 %v641
      %2521 = vmatprep.subr.mxu0 0.0
      %2522 = vmatpush1.msra.mxu0 %v642
      %2523 = vmatprep.subr.mxu0 0.0
      %2524 = vmatpush1.msra.mxu0 %v643
      %2525 = vmatprep.subr.mxu0 0.0
      %2526 = vmatpush1.msra.mxu0 %v644
      %2527 = vmatprep.subr.mxu0 0.0
      %2528 = vmatpush1.msra.mxu0 %v645
      %2529 = vmatprep.subr.mxu0 0.0
      %2530 = vmatpush1.msra.mxu0 %v646
      %2531 = vmatprep.subr.mxu0 0.0
      %2532 = vmatpush1.msra.mxu0 %v647
      %2533 = vmatprep.subr.mxu0 0.0
      %2534 = vmatpush1.msra.mxu0 0.0
      %2535 = vmatprep.subr.mxu0 0.0
      %2536 = vmatpush1.msra.mxu0 0.0
      %2537 = vmatprep.subr.mxu0 0.0
      %2538 = vmatpush1.msra.mxu0 0.0
      %2539 = vmatprep.subr.mxu0 0.0
      %2540 = vmatpush1.msra.mxu0 0.0
      %2541 = vmatprep.subr.mxu0 0.0
      %2542 = vmatpush1.msra.mxu0 0.0
      %2543 = vmatprep.subr.mxu0 0.0
      %2544 = vmatpush1.msra.mxu0 0.0
      %2545 = vmatprep.subr.mxu0 0.0
      %2546 = vmatpush1.msra.mxu0 0.0
      %2547 = vmatprep.subr.mxu0 0.0
      %2548 = vmatpush1.msra.mxu0 0.0
      %2549 = vmatprep.subr.mxu0 0.0
      %2550 = vmatpush1.msra.mxu0 0.0
      %2551 = vmatprep.subr.mxu0 0.0
      %2552 = vmatpush1.msra.mxu0 0.0
      %2553 = vmatprep.subr.mxu0 0.0
      %2554 = vmatpush1.msra.mxu0 0.0
      %2555 = vmatprep.subr.mxu0 0.0
      %2556 = vmatpush1.msra.mxu0 0.0
      %2557 = vmatprep.subr.mxu0 0.0
      %2558 = vmatpush1.msra.mxu0 0.0
      %2559 = vmatprep.subr.mxu0 0.0
      %2560 = vmatpush1.msra.mxu0 0.0
      %2561 = vmatprep.subr.mxu0 0.0
      %2562 = vmatpush1.msra.mxu0 0.0
      %2563 = vmatprep.subr.mxu0 0.0
      %2564 = vmatpush1.msra.mxu0 0.0
      %2565 = vmatprep.mubr.f32.mxu0 0.0
      %2566 = vmatmul.mubr.f32.gmra.mrb[0].mxu0 %v2500
      %v2567 = vpop.f32.mrb[0].mxu0
      %v2568 = vadd.f32 0.0, %v2567
      %v2569 = vpop.f32.mrb[0].mxu0
      %2570 = vdwg.mxu0
      %v2571 = vmul.f32 %v2489, 0.00390625
      %v2572 = vmul.f32 %v2568, 0.00390625
      %v2573 = vmul.f32 %v2571, %v2571
      %v2574 = vsub.f32 %v2572, %v2573
      %v2575 = vadd.f32 %v2574, 1e-05
      %v2576 = vrsqrt.pop %v2575
      %v2577 = vld [vmem:[%s16] sm:$0x1]
      %v2578 = vmul.f32 %v2576, %v2577
      %v2579 = vld [vmem:[%s17] sm:$0x1]
      %v2580 = vmul.f32 %v2571, %v2578
      %v2581 = vsub.f32 %v2579, %v2580
      %v2582 = vlaneseq
      %v2583 = vshrl.u32 %v2582, 7
      %v2584 = vsub.s32 0, %v2583
      %v2585 = vrot.slane %v2578, %v2584
      %v2586 = vmul.f32 %v2413, %v2585
      %v2587 = vmul.f32 %v2414, %v2585
      %v2589 = vlaneseq
      %v2590 = vshrl.u32 %v2589, 7
      %v2591 = vsub.s32 0, %v2590
      %v2592 = vrot.slane %v2581, %v2591
      %v2594 = vadd.f32 %v2586, %v2592
      %v2595 = vadd.f32 %v2587, %v2592
      %v2596 = vld [vmem:[%s15] sm:$0xff]
      %v2597 = vld [vmem:[%s15 + $0x8] sm:$0xff]
      %v2598 = vld [vmem:[%s15 + $0x10] sm:$0xff]
      %v2599 = vld [vmem:[%s15 + $0x18] sm:$0xff]
      %v2600 = vld [vmem:[%s15 + $0x20] sm:$0xff]
      %v2601 = vld [vmem:[%s15 + $0x28] sm:$0xff]
      %v2602 = vld [vmem:[%s15 + $0x30] sm:$0xff]
      %v2603 = vld [vmem:[%s15 + $0x38] sm:$0xff]
      %v2604 = vld [vmem:[%s15 + $0x40] sm:$0xff]
      %v2605 = vld [vmem:[%s15 + $0x48] sm:$0xff]
      %v2606 = vld [vmem:[%s15 + $0x50] sm:$0xff]
      %v2607 = vld [vmem:[%s15 + $0x58] sm:$0xff]
      %v2608 = vld [vmem:[%s15 + $0x60] sm:$0xff]
      %v2609 = vld [vmem:[%s15 + $0x68] sm:$0xff]
      %v2610 = vld [vmem:[%s15 + $0x70] sm:$0xff]
      %v2611 = vld [vmem:[%s15 + $0x78] sm:$0xff]
      %2612 = vmatprep.subr.mxu0 0.0
      %2613 = vmatpush1.msra.mxu0 %v2596
      %2614 = vmatprep.subr.mxu0 0.0
      %2615 = vmatpush1.msra.mxu0 %v2597
      %2616 = vmatprep.subr.mxu0 0.0
      %2617 = vmatpush1.msra.mxu0 %v2598
      %2618 = vmatprep.subr.mxu0 0.0
      %2619 = vmatpush1.msra.mxu0 %v2599
      %2620 = vmatprep.subr.mxu0 0.0
      %2621 = vmatpush1.msra.mxu0 %v2600
      %2622 = vmatprep.subr.mxu0 0.0
      %2623 = vmatpush1.msra.mxu0 %v2601
      %2624 = vmatprep.subr.mxu0 0.0
      %2625 = vmatpush1.msra.mxu0 %v2602
      %2626 = vmatprep.subr.mxu0 0.0
      %2627 = vmatpush1.msra.mxu0 %v2603
      %2628 = vmatprep.subr.mxu0 0.0
      %2629 = vmatpush1.msra.mxu0 %v2604
      %2630 = vmatprep.subr.mxu0 0.0
      %2631 = vmatpush1.msra.mxu0 %v2605
      %2632 = vmatprep.subr.mxu0 0.0
      %2633 = vmatpush1.msra.mxu0 %v2606
      %2634 = vmatprep.subr.mxu0 0.0
      %2635 = vmatpush1.msra.mxu0 %v2607
      %2636 = vmatprep.subr.mxu0 0.0
      %2637 = vmatpush1.msra.mxu0 %v2608
      %2638 = vmatprep.subr.mxu0 0.0
      %2639 = vmatpush1.msra.mxu0 %v2609
      %2640 = vmatprep.subr.mxu0 0.0
      %2641 = vmatpush1.msra.mxu0 %v2610
      %2642 = vmatprep.subr.mxu0 0.0
      %2643 = vmatpush1.msra.mxu0 %v2611
      %2644 = vmatprep.subr.mxu0 0.0
      %2645 = vmatpush1.msra.mxu0 0.0
      %2646 = vmatprep.subr.mxu0 0.0
      %2647 = vmatpush1.msra.mxu0 0.0
      %2648 = vmatprep.subr.mxu0 0.0
      %2649 = vmatpush1.msra.mxu0 0.0
      %2650 = vmatprep.subr.mxu0 0.0
      %2651 = vmatpush1.msra.mxu0 0.0
      %2652 = vmatprep.subr.mxu0 0.0
      %2653 = vmatpush1.msra.mxu0 0.0
      %2654 = vmatprep.subr.mxu0 0.0
      %2655 = vmatpush1.msra.mxu0 0.0
      %2656 = vmatprep.subr.mxu0 0.0
      %2657 = vmatpush1.msra.mxu0 0.0
      %2658 = vmatprep.subr.mxu0 0.0
      %2659 = vmatpush1.msra.mxu0 0.0
      %2660 = vmatprep.subr.mxu0 0.0
      %2661 = vmatpush1.msra.mxu0 0.0
      %2662 = vmatprep.subr.mxu0 0.0
      %2663 = vmatpush1.msra.mxu0 0.0
      %2664 = vmatprep.subr.mxu0 0.0
      %2665 = vmatpush1.msra.mxu0 0.0
      %2666 = vmatprep.subr.mxu0 0.0
      %2667 = vmatpush1.msra.mxu0 0.0
      %2668 = vmatprep.subr.mxu0 0.0
      %2669 = vmatpush1.msra.mxu0 0.0
      %2670 = vmatprep.subr.mxu0 0.0
      %2671 = vmatpush1.msra.mxu0 0.0
      %2672 = vmatprep.subr.mxu0 0.0
      %2673 = vmatpush1.msra.mxu0 0.0
      %2674 = vmatprep.subr.mxu0 0.0
      %2675 = vmatpush1.msra.mxu0 0.0
      %2676 = vmatprep.mubr.f32.mxu0 0.0
      %2677 = vmatmul.mubr.f32.gmra.mrb[0].mxu0 %v2594
      %v2678 = vpop.f32.mrb[0].mxu0
      %v2679 = vadd.f32 0.0, %v2678
      %v2680 = vpop.f32.mrb[0].mxu0
      %2681 = vmatprep.mubr.f32.mxu0 0.0
      %2682 = vmatmul.mubr.f32.gmra.mrb[0].mxu0 %v2595
      %v2683 = vpop.f32.mrb[0].mxu0
      %v2684 = vadd.f32 0.0, %v2683
      %v2685 = vpop.f32.mrb[0].mxu0
      %2686 = vdwg.mxu0
      %v2687 = vadd.f32 %v2679, %v2684
      %v2688 = vrot.slane %v2687, 4
      %v2689 = vadd.f32 %v2687, %v2688
      %v2690 = vrot.slane %v2689, 2
      %v2691 = vadd.f32 %v2689, %v2690
      %v2692 = vrot.slane %v2691, 1
      %v2693 = vadd.f32 %v2691, %v2692
      %2694 = vmatprep.subr.mxu0 0.0
      %2695 = vmatpush1.msra.mxu0 %v632
      %2696 = vmatprep.subr.mxu0 0.0
      %2697 = vmatpush1.msra.mxu0 %v633
      %2698 = vmatprep.subr.mxu0 0.0
      %2699 = vmatpush1.msra.mxu0 %v634
      %2700 = vmatprep.subr.mxu0 0.0
      %2701 = vmatpush1.msra.mxu0 %v635
      %2702 = vmatprep.subr.mxu0 0.0
      %2703 = vmatpush1.msra.mxu0 %v636
      %2704 = vmatprep.subr.mxu0 0.0
      %2705 = vmatpush1.msra.mxu0 %v637
      %2706 = vmatprep.subr.mxu0 0.0
      %2707 = vmatpush1.msra.mxu0 %v638
      %2708 = vmatprep.subr.mxu0 0.0
      %2709 = vmatpush1.msra.mxu0 %v639
      %2710 = vmatprep.subr.mxu0 0.0
      %2711 = vmatpush1.msra.mxu0 %v640
      %2712 = vmatprep.subr.mxu0 0.0
      %2713 = vmatpush1.msra.mxu0 %v641
      %2714 = vmatprep.subr.mxu0 0.0
      %2715 = vmatpush1.msra.mxu0 %v642
      %2716 = vmatprep.subr.mxu0 0.0
      %2717 = vmatpush1.msra.mxu0 %v643
      %2718 = vmatprep.subr.mxu0 0.0
      %2719 = vmatpush1.msra.mxu0 %v644
      %2720 = vmatprep.subr.mxu0 0.0
      %2721 = vmatpush1.msra.mxu0 %v645
      %2722 = vmatprep.subr.mxu0 0.0
      %2723 = vmatpush1.msra.mxu0 %v646
      %2724 = vmatprep.subr.mxu0 0.0
      %2725 = vmatpush1.msra.mxu0 %v647
      %2726 = vmatprep.subr.mxu0 0.0
      %2727 = vmatpush1.msra.mxu0 0.0
      %2728 = vmatprep.subr.mxu0 0.0
      %2729 = vmatpush1.msra.mxu0 0.0
      %2730 = vmatprep.subr.mxu0 0.0
      %2731 = vmatpush1.msra.mxu0 0.0
      %2732 = vmatprep.subr.mxu0 0.0
      %2733 = vmatpush1.msra.mxu0 0.0
      %2734 = vmatprep.subr.mxu0 0.0
      %2735 = vmatpush1.msra.mxu0 0.0
      %2736 = vmatprep.subr.mxu0 0.0
      %2737 = vmatpush1.msra.mxu0 0.0
      %2738 = vmatprep.subr.mxu0 0.0
      %2739 = vmatpush1.msra.mxu0 0.0
      %2740 = vmatprep.subr.mxu0 0.0
      %2741 = vmatpush1.msra.mxu0 0.0
      %2742 = vmatprep.subr.mxu0 0.0
      %2743 = vmatpush1.msra.mxu0 0.0
      %2744 = vmatprep.subr.mxu0 0.0
      %2745 = vmatpush1.msra.mxu0 0.0
      %2746 = vmatprep.subr.mxu0 0.0
      %2747 = vmatpush1.msra.mxu0 0.0
      %2748 = vmatprep.subr.mxu0 0.0
      %2749 = vmatpush1.msra.mxu0 0.0
      %2750 = vmatprep.subr.mxu0 0.0
      %2751 = vmatpush1.msra.mxu0 0.0
      %2752 = vmatprep.subr.mxu0 0.0
      %2753 = vmatpush1.msra.mxu0 0.0
      %2754 = vmatprep.subr.mxu0 0.0
      %2755 = vmatpush1.msra.mxu0 0.0
      %2756 = vmatprep.subr.mxu0 0.0
      %2757 = vmatpush1.msra.mxu0 0.0
      %2758 = vmatprep.mubr.f32.mxu0 0.0
      %2759 = vmatmul.mubr.f32.gmra.mrb[0].mxu0 %v2693
      %v2760 = vpop.f32.mrb[0].mxu0
      %v2761 = vadd.f32 0.0, %v2760
      %v2762 = vpop.f32.mrb[0].mxu0
      %2763 = vdwg.mxu0
      %v2764 = vmul.f32 %v2679, %v2679
      %v2765 = vmul.f32 %v2684, %v2684
      %v2766 = vadd.f32 %v2764, %v2765
      %v2767 = vrot.slane %v2766, 4
      %v2768 = vadd.f32 %v2766, %v2767
      %v2769 = vrot.slane %v2768, 2
      %v2770 = vadd.f32 %v2768, %v2769
      %v2771 = vrot.slane %v2770, 1
      %v2772 = vadd.f32 %v2770, %v2771
      %2773 = vmatprep.subr.mxu0 0.0
      %2774 = vmatpush1.msra.mxu0 %v632
      %2775 = vmatprep.subr.mxu0 0.0
      %2776 = vmatpush1.msra.mxu0 %v633
      %2777 = vmatprep.subr.mxu0 0.0
      %2778 = vmatpush1.msra.mxu0 %v634
      %2779 = vmatprep.subr.mxu0 0.0
      %2780 = vmatpush1.msra.mxu0 %v635
      %2781 = vmatprep.subr.mxu0 0.0
      %2782 = vmatpush1.msra.mxu0 %v636
      %2783 = vmatprep.subr.mxu0 0.0
      %2784 = vmatpush1.msra.mxu0 %v637
      %2785 = vmatprep.subr.mxu0 0.0
      %2786 = vmatpush1.msra.mxu0 %v638
      %2787 = vmatprep.subr.mxu0 0.0
      %2788 = vmatpush1.msra.mxu0 %v639
      %2789 = vmatprep.subr.mxu0 0.0
      %2790 = vmatpush1.msra.mxu0 %v640
      %2791 = vmatprep.subr.mxu0 0.0
      %2792 = vmatpush1.msra.mxu0 %v641
      %2793 = vmatprep.subr.mxu0 0.0
      %2794 = vmatpush1.msra.mxu0 %v642
      %2795 = vmatprep.subr.mxu0 0.0
      %2796 = vmatpush1.msra.mxu0 %v643
      %2797 = vmatprep.subr.mxu0 0.0
      %2798 = vmatpush1.msra.mxu0 %v644
      %2799 = vmatprep.subr.mxu0 0.0
      %2800 = vmatpush1.msra.mxu0 %v645
      %2801 = vmatprep.subr.mxu0 0.0
      %2802 = vmatpush1.msra.mxu0 %v646
      %2803 = vmatprep.subr.mxu0 0.0
      %2804 = vmatpush1.msra.mxu0 %v647
      %2805 = vmatprep.subr.mxu0 0.0
      %2806 = vmatpush1.msra.mxu0 0.0
      %2807 = vmatprep.subr.mxu0 0.0
      %2808 = vmatpush1.msra.mxu0 0.0
      %2809 = vmatprep.subr.mxu0 0.0
      %2810 = vmatpush1.msra.mxu0 0.0
      %2811 = vmatprep.subr.mxu0 0.0
      %2812 = vmatpush1.msra.mxu0 0.0
      %2813 = vmatprep.subr.mxu0 0.0
      %2814 = vmatpush1.msra.mxu0 0.0
      %2815 = vmatprep.subr.mxu0 0.0
      %2816 = vmatpush1.msra.mxu0 0.0
      %2817 = vmatprep.subr.mxu0 0.0
      %2818 = vmatpush1.msra.mxu0 0.0
      %2819 = vmatprep.subr.mxu0 0.0
      %2820 = vmatpush1.msra.mxu0 0.0
      %2821 = vmatprep.subr.mxu0 0.0
      %2822 = vmatpush1.msra.mxu0 0.0
      %2823 = vmatprep.subr.mxu0 0.0
      %2824 = vmatpush1.msra.mxu0 0.0
      %2825 = vmatprep.subr.mxu0 0.0
      %2826 = vmatpush1.msra.mxu0 0.0
      %2827 = vmatprep.subr.mxu0 0.0
      %2828 = vmatpush1.msra.mxu0 0.0
      %2829 = vmatprep.subr.mxu0 0.0
      %2830 = vmatpush1.msra.mxu0 0.0
      %2831 = vmatprep.subr.mxu0 0.0
      %2832 = vmatpush1.msra.mxu0 0.0
      %2833 = vmatprep.subr.mxu0 0.0
      %2834 = vmatpush1.msra.mxu0 0.0
      %2835 = vmatprep.subr.mxu0 0.0
      %2836 = vmatpush1.msra.mxu0 0.0
      %2837 = vmatprep.mubr.f32.mxu0 0.0
      %2838 = vmatmul.mubr.f32.gmra.mrb[0].mxu0 %v2772
      %v2839 = vpop.f32.mrb[0].mxu0
      %v2840 = vadd.f32 0.0, %v2839
      %v2841 = vpop.f32.mrb[0].mxu0
      %2842 = vdwg.mxu0
      %v2843 = vmul.f32 %v2761, 0.00390625
      %v2844 = vmul.f32 %v2840, 0.00390625
      %v2845 = vmul.f32 %v2843, %v2843
      %v2846 = vsub.f32 %v2844, %v2845
      %v2847 = vadd.f32 %v2846, 1e-05
      %v2848 = vrsqrt.pop %v2847
      %v2849 = vld [vmem:[%s18] sm:$0x1]
      %v2850 = vmul.f32 %v2848, %v2849
      %v2851 = vld [vmem:[%s19] sm:$0x1]
      %v2852 = vmul.f32 %v2843, %v2850
      %v2853 = vsub.f32 %v2851, %v2852
      %v2854 = vlaneseq
      %v2855 = vshrl.u32 %v2854, 7
      %v2856 = vsub.s32 0, %v2855
      %v2857 = vrot.slane %v2850, %v2856
      %v2858 = vmul.f32 %v2679, %v2857
      %v2859 = vmul.f32 %v2684, %v2857
      %v2861 = vlaneseq
      %v2862 = vshrl.u32 %v2861, 7
      %v2863 = vsub.s32 0, %v2862
      %v2864 = vrot.slane %v2853, %v2863
      %v2866 = vadd.f32 %v2858, %v2864
      %v2867 = vadd.f32 %v2859, %v2864
      %v2868 = vmax.f32 %v2866, 0.0
      %v2869 = vmax.f32 %v2867, 0.0
      %2870 = vst [vmem:[%s629] sm:$0xff] %v2868
      %2871 = vst [vmem:[%s629 + $0x8] sm:$0xff] %v2869
      %p2872 = scmp.lt.s32.totalorder %s31, 1
      %s2873 = scalar_select %p2872, %s31, 1
      %s2874 = smul.addr %s2873, 2
      %s2875 = smul.addr %s2874, 8
      %s2876 = scalar_lea.vmem %s20, %s2875
      // Predicated region
      $region101: #{_lambda_.1} parent=99 // pred_check
        %p2877 = pneg %p474
      $region102: #{_lambda_.1} parent=99 // pred_check_branch
        %2879 = sbr.rel (%p2877) target = $region104
      $region103: #{_lambda_.1} parent=99 // pred_region
        _
      $region104: #{_lambda_.1} parent=99 // pred_fallthru
        _
    $region100: #{_lambda_.1} parent=5 // pred_fallthru
      _
    %p2880 = scmp.le.s32.totalorder 2, %s26
    // Predicated region
    $region105: #{_lambda_.1} parent=5 // pred_check
      %p2881 = pneg %p2880
    $region106: #{_lambda_.1} parent=5 // pred_check_branch
      %2883 = sbr.rel (%p2881) target = $region108
    $region107: #{_lambda_.1} parent=5 // pred_region
      %s2884 = ssub.s32 %s26, 2
      // Predicated region
      $region109: #{_lambda_.1} parent=107 // pred_check
        %p2885 = pneg %p480
      $region110: #{_lambda_.1} parent=107 // pred_check_branch
        %2887 = sbr.rel (%p2885) target = $region112
      $region111: #{_lambda_.1} parent=107 // pred_region
        %p2888 = scmp.lt.s32.totalorder %s32, 1
        %s2889 = scalar_select %p2888, %s32, 1
        %s2890 = smul.addr %s2889, 2
        %s2891 = smul.addr %s2890, 8
        %s2892 = scalar_lea.vmem %s20, %s2891
      $region112: #{_lambda_.1} parent=107 // pred_fallthru
        _
    $region108: #{_lambda_.1} parent=5 // pred_fallthru
      _
  $region6: #{_lambda_.1} parent=0 // loop_footer
    %s30 = sadd.s32 1, %s26
  $region7: #{_lambda_.1} parent=0 // loop_footer_branch
    %25 = sbr.rel target = $region3
  $region8: #{_lambda_.1} parent=0 // loop_exit
    _

</llo_original>
